<compile_context>
chip_gen: v7x
topology: tpu7x:2x2x1
jax: 0.10.0
libtpu: 0.0.40
codegen_flags: <defaults>
</compile_context>

<pallas_src>
import functools

import jax
import jax.numpy as jnp
from jax.experimental import pallas as pl
from jax.experimental.pallas import tpu as pltpu


def _round_up(x, m):
    return (x + m - 1) // m * m


# ---------------------------------------------------------------------------
# Kernel 1: encoder (im2col conv -> max over time) + GRU recurrence.
# Produces the time-major bf16 hidden slab h_all (Ty*Bp, Hp).
# ---------------------------------------------------------------------------
def encoder_gru_kernel(xcol_ref, yflat_ref, convw_ref, convb_ref,
                       wih_ref, gib_ref, whh_ref, bhn_ref,
                       hall_ref, *, Bp, T_out, Ty, Hp):
    f32 = jnp.float32
    bf16 = jnp.bfloat16

    # encoder: im2col conv == ONE MXU matmul (K lane-padded in the wrapper),
    # then a VPU running max over time.  Conv bias folded in AFTER the max so
    # the broadcast add runs once on (Bp, Hp) instead of T_out times.
    conv = jnp.dot(xcol_ref[...], convw_ref[...], preferred_element_type=f32)
    h = conv[0:Bp, :]
    for t in range(1, T_out):                               # static unroll
        h = jnp.maximum(h, conv[t * Bp:(t + 1) * Bp, :])
    h = h + convb_ref[...]                                  # h == h0 (doc_embed)

    # decoder: input-to-hidden gates for ALL timesteps in one batched matmul
    # (r/z biases already folded with hidden biases, n keeps b_in only).
    gi_all = jnp.dot(yflat_ref[...], wih_ref[...], preferred_element_type=f32)
    gi_all = gi_all + gib_ref[...]                          # (Ty*Bp, 3*Hp)

    whh = whh_ref[...]                                      # (Hp, 3*Hp) bf16
    b_hn = bhn_ref[...]                                     # (1, Hp)

    # GRU recurrence: fully unrolled (Ty is tiny); h carried in f32 registers,
    # the bf16 cast is computed once per step and reused for both the next
    # step's W_hh matmul and the h_all store (bf16 scratch -> half the traffic).
    # TODO(synk): switch to lax.fori_loop(..., unroll=True) with (h, h_bf) as
    # carry if Ty grows beyond a handful of steps (bounds vreg live ranges).
    h_bf = h.astype(bf16)
    for t in range(Ty):
        gi = gi_all[t * Bp:(t + 1) * Bp, :]                 # static slice
        gh = jnp.dot(h_bf, whh, preferred_element_type=f32)
        r = jax.nn.sigmoid(gi[:, 0:Hp] + gh[:, 0:Hp])
        z = jax.nn.sigmoid(gi[:, Hp:2 * Hp] + gh[:, Hp:2 * Hp])
        n = jnp.tanh(gi[:, 2 * Hp:3 * Hp] + r * (gh[:, 2 * Hp:3 * Hp] + b_hn))
        h = (1.0 - z) * n + z * h
        h_bf = h.astype(bf16)
        hall_ref[t * Bp:(t + 1) * Bp, :] = h_bf             # store only, no reload


# ---------------------------------------------------------------------------
# Kernel 2: V-tiled output projection.  lin_w is streamed tile-by-tile over the
# vocabulary axis (BlockSpec double-buffered pipeline); h_all stays resident.
# The grid axis is "parallel" so megacore chips split the vocabulary tiles.
# ---------------------------------------------------------------------------
def projection_kernel(hall_ref, linw_ref, linb_ref, out_ref):
    logits = jnp.dot(hall_ref[...], linw_ref[...],
                     preferred_element_type=jnp.float32) + linb_ref[...]
    out_ref[...] = logits.astype(out_ref.dtype)


def init_params(key, vocab_size, word_dim, window_size, rnn_dim):
    ks = jax.random.split(key, 9)
    p = {}
    p['emb'] = jax.random.normal(ks[0], (vocab_size, word_dim), jnp.float32)
    # PyTorch Conv2d weight (C, 1, window, D) stored here as (window, D, C).
    p['conv_w'] = 0.1 * jax.random.normal(ks[1], (window_size, word_dim, rnn_dim), jnp.float32)
    p['conv_b'] = 0.1 * jax.random.normal(ks[2], (1, rnn_dim), jnp.float32)
    # PyTorch GRU weight_ih_l0 is (3H, D), gate order [r; z; n]; stored transposed.
    p['w_ih'] = 0.1 * jax.random.normal(ks[3], (word_dim, 3 * rnn_dim), jnp.float32)
    p['w_hh'] = 0.1 * jax.random.normal(ks[4], (rnn_dim, 3 * rnn_dim), jnp.float32)
    p['b_ih'] = 0.1 * jax.random.normal(ks[5], (1, 3 * rnn_dim), jnp.float32)
    p['b_hh'] = 0.1 * jax.random.normal(ks[6], (1, 3 * rnn_dim), jnp.float32)
    # PyTorch Linear weight (V, H) stored transposed as (H, V).
    p['lin_w'] = 0.1 * jax.random.normal(ks[7], (rnn_dim, vocab_size), jnp.float32)
    p['lin_b'] = 0.1 * jax.random.normal(ks[8], (1, vocab_size), jnp.float32)
    return p


def nlg_forward(params, x_id, y_id, *, tile_v=2048):
    f32, bf16 = jnp.float32, jnp.bfloat16
    emb = params['emb']
    x = emb[x_id]                              # (B, Tx, D)  embedding gather (glue)
    y = emb[y_id]                              # (B, Ty, D)
    B, Tx, D = x.shape
    Ty = y.shape[1]
    window, _, H = params['conv_w'].shape
    V = params['lin_w'].shape[1]
    assert Tx >= window, "need Tx >= window_size (otherwise conv output is empty)"
    T_out = Tx - window + 1

    # Alignment padding: batch rows to a 16-row (bf16 sublane) multiple; all
    # contraction / lane dims to 128 so slices stay sublane/lane aligned.
    Bp = _round_up(B, 16)
    Hp = _round_up(H, 128)
    Dp = _round_up(D, 128)
    Kp = _round_up(window * D, 128)
    # Projection vocab tile: sized for v7x's 64 MiB VMEM (~4 MiB bf16 weights
    # per tile at Hp=1024, double-buffered).  v5e/v6e (128 MiB) can afford
    # wider tiles (4096-8192) and/or pipeline_mode=pl.Buffered(3) on linw.
    TILE_V = min(max(128, (tile_v // 128) * 128), _round_up(V, 128))
    Vp = _round_up(V, TILE_V)

    # pad batch with zero rows (sliced off at the end)
    if Bp != B:
        x = jnp.concatenate([x, jnp.zeros((Bp - B, Tx, D), x.dtype)], axis=0)
        y = jnp.concatenate([y, jnp.zeros((Bp - B, Ty, D), y.dtype)], axis=0)

    # im2col of x, time-major rows: row (t, b) = concat_w x[b, t+w, :].
    # Contraction dim window*D zero-padded to Kp so the MXU K is lane-aligned.
    # TODO(synk): at realistic Tx/D (esp. v5e) skip the wrapper im2col
    # duplication and accumulate `window` shifted-slice matmuls in-kernel.
    xcol = jnp.concatenate([x[:, w:w + T_out, :] for w in range(window)], axis=-1)
    xcol = jnp.transpose(xcol, (1, 0, 2)).reshape(T_out * Bp, window * D)
    xcol = jnp.zeros((T_out * Bp, Kp), f32).at[:, :window * D].set(xcol)

    # decoder embeddings, time-major flat rows (t, b), K padded to Dp
    yflat = jnp.transpose(y, (1, 0, 2)).reshape(Ty * Bp, D)
    yflat = jnp.zeros((Ty * Bp, Dp), f32).at[:, :D].set(yflat)

    # conv weight (window, D, H) -> (Kp, Hp), zero-padded
    convw = params['conv_w'].reshape(window * D, H)
    convw = jnp.zeros((Kp, Hp), f32).at[:window * D, :H].set(convw)
    convb = jnp.zeros((1, Hp), f32).at[:, :H].set(params['conv_b'])

    # GRU weights, gate order [r|z|n]; each gate padded to its own 128-lane
    # block so in-kernel gate slices are lane-aligned.  Padding is zero, so the
    # padded hidden columns stay exactly zero through the recurrence.
    wih, whh = params['w_ih'], params['w_hh']
    bih, bhh = params['b_ih'], params['b_hh']
    wih_p = jnp.zeros((Dp, 3 * Hp), f32)
    whh_p = jnp.zeros((Hp, 3 * Hp), f32)
    for g in range(3):
        wih_p = wih_p.at[:D, g * Hp:g * Hp + H].set(wih[:, g * H:(g + 1) * H])
        whh_p = whh_p.at[:H, g * Hp:g * Hp + H].set(whh[:, g * H:(g + 1) * H])
    gib_p = jnp.zeros((1, 3 * Hp), f32)
    gib_p = gib_p.at[:, 0:H].set(bih[:, 0:H] + bhh[:, 0:H])
    gib_p = gib_p.at[:, Hp:Hp + H].set(bih[:, H:2 * H] + bhh[:, H:2 * H])
    gib_p = gib_p.at[:, 2 * Hp:2 * Hp + H].set(bih[:, 2 * H:3 * H])
    bhn_p = jnp.zeros((1, Hp), f32).at[:, :H].set(bhh[:, 2 * H:3 * H])

    # TODO(synk): int8 weight-only quant of lin_w halves streamed bytes on
    # v5e/v6e at realistic V; needs an fp8 re-derivation on v7x (no int MXU).
    linw_p = jnp.zeros((Hp, Vp), f32).at[:H, :V].set(params['lin_w'])
    linb_p = jnp.zeros((1, Vp), f32).at[:, :V].set(params['lin_b'])

    vmem = pl.BlockSpec(memory_space=pltpu.MemorySpace.VMEM)

    # --- call 1: encoder + GRU recurrence -> bf16 hidden slab (Ty*Bp, Hp)
    gru = pl.pallas_call(
        functools.partial(encoder_gru_kernel, Bp=Bp, T_out=T_out, Ty=Ty, Hp=Hp),
        out_shape=jax.ShapeDtypeStruct((Ty * Bp, Hp), bf16),
        in_specs=[vmem] * 8,
        out_specs=vmem,
    )
    h_all = gru(xcol.astype(bf16), yflat.astype(bf16),
                convw.astype(bf16), convb,
                wih_p.astype(bf16), gib_p, whh_p.astype(bf16), bhn_p)

    # --- call 2: projection streamed over V tiles (weight-streaming roofline).
    # Each grid step is independent -> "parallel" lets both v7x TensorCores
    # split the vocabulary tiles without redundant recurrence work.
    n_tiles = Vp // TILE_V
    needed = 2 * (Ty * Bp * Hp * 2 + Hp * TILE_V * 2 + TILE_V * 4
                  + Ty * Bp * TILE_V * 4)          # double-buffered blocks
    vmem_limit = max(32 * 1024 * 1024, 2 * needed)
    proj = pl.pallas_call(
        projection_kernel,
        out_shape=jax.ShapeDtypeStruct((Ty * Bp, Vp), f32),
        grid=(n_tiles,),
        in_specs=[pl.BlockSpec((Ty * Bp, Hp), lambda j: (0, 0)),     # resident
                  pl.BlockSpec((Hp, TILE_V), lambda j: (0, j)),      # streamed
                  pl.BlockSpec((1, TILE_V), lambda j: (0, j))],
        out_specs=pl.BlockSpec((Ty * Bp, TILE_V), lambda j: (0, j)),  # lane-dense
        compiler_params=pltpu.CompilerParams(
            dimension_semantics=("parallel",),
            vmem_limit_bytes=vmem_limit),
    )
    out = proj(h_all, linw_p.astype(bf16), linb_p)

    # (Ty*Bp, Vp) time-major -> (B, Ty, V)
    # TODO(synk): at realistic V, emit bf16 logits and keep time-major
    # (Ty, B, Vp) if the consumer allows it (halves writeback, drops this pass).
    return out.reshape(Ty, Bp, Vp).transpose(1, 0, 2)[:B, :, :V]


def nlg_reference(params, x_id, y_id):
    """Pure-JAX f32 reference mirroring the PyTorch forward semantics."""
    emb = params['emb']
    x = emb[x_id]
    y = emb[y_id]
    B, Tx, D = x.shape
    window, _, C = params['conv_w'].shape
    H = C
    T_out = Tx - window + 1
    acc = jnp.zeros((B, T_out, C), jnp.float32)
    for w in range(window):
        acc = acc + jnp.einsum('btd,dc->btc', x[:, w:w + T_out, :], params['conv_w'][w])
    acc = acc + params['conv_b']
    h = jnp.max(acc, axis=1)                      # doc_embed == h0
    wih, whh = params['w_ih'], params['w_hh']
    bih, bhh = params['b_ih'], params['b_hh']
    outs = []
    for t in range(y.shape[1]):
        yt = y[:, t, :]
        gi = yt @ wih + bih
        gh = h @ whh + bhh
        r = jax.nn.sigmoid(gi[:, :H] + gh[:, :H])
        z = jax.nn.sigmoid(gi[:, H:2 * H] + gh[:, H:2 * H])
        n = jnp.tanh(gi[:, 2 * H:] + r * gh[:, 2 * H:])
        h = (1.0 - z) * n + z * h
        outs.append(h @ params['lin_w'] + params['lin_b'])
    return jnp.stack(outs, axis=1)


if __name__ == "__main__":
    vocab_size, word_dim, window_size, rnn_dim = 100, 10, 3, 15
    B, Tx, Ty = 30, 10, 8          # matches the PyTorch spec shapes

    key = jax.random.PRNGKey(0)
    kp, kx, ky = jax.random.split(key, 3)
    params = init_params(kp, vocab_size, word_dim, window_size, rnn_dim)
    x_id = jax.random.randint(kx, (B, Tx), 0, vocab_size, dtype=jnp.int32)
    y_id = jax.random.randint(ky, (B, Ty), 0, vocab_size, dtype=jnp.int32)

    word_scores = jax.jit(nlg_forward)(params, x_id, y_id)
    word_scores = jax.block_until_ready(word_scores)

    ref = nlg_reference(params, x_id, y_id)
    assert word_scores.shape == (B, Ty, vocab_size), word_scores.shape
    max_err = float(jnp.max(jnp.abs(word_scores - ref)))
    # bf16 MXU operands with f32 accumulation -> relaxed tolerance vs f32 ref.
    assert max_err < 5e-2, max_err

    print("KERNEL_OK")
</pallas_src>

<mosaic_0001>
module attributes {stable_mosaic.version = 11 : i64} {
  func.func @encoder_gru_kernel(%arg0: memref<256x128xbf16, #tpu.memory_space<vmem>>, %arg1: memref<256x128xbf16, #tpu.memory_space<vmem>>, %arg2: memref<128x128xbf16, #tpu.memory_space<vmem>>, %arg3: memref<1x128xf32, #tpu.memory_space<vmem>>, %arg4: memref<128x384xbf16, #tpu.memory_space<vmem>>, %arg5: memref<1x384xf32, #tpu.memory_space<vmem>>, %arg6: memref<128x384xbf16, #tpu.memory_space<vmem>>, %arg7: memref<1x128xf32, #tpu.memory_space<vmem>>, %arg8: memref<256x128xbf16, #tpu.memory_space<vmem>>) attributes {dimension_semantics = [], scalar_prefetch = 0 : i64, scratch_operands = 0 : i64, tpu.core_type = #tpu.core_type<tc>} {
    %c0 = arith.constant 0 : index
    %c0_0 = arith.constant 0 : index
    %0 = vector.load %arg0[%c0, %c0_0] : memref<256x128xbf16, #tpu.memory_space<vmem>>, vector<256x128xbf16>
    %c0_1 = arith.constant 0 : index
    %c0_2 = arith.constant 0 : index
    %1 = vector.load %arg2[%c0_1, %c0_2] : memref<128x128xbf16, #tpu.memory_space<vmem>>, vector<128x128xbf16>
    %cst = arith.constant dense<0.000000e+00> : vector<256x128xf32>
    %2 = tpu.matmul %0, %1, %cst {dimension_numbers = #tpu.dot_dimension_numbers<[1], [0], [0], [1], [0, 0, 1, 1], [], []>} : vector<256x128xbf16>, vector<128x128xbf16>, vector<256x128xf32> -> vector<256x128xf32>
    %3 = vector.extract_strided_slice %2 {offsets = [0, 0], sizes = [32, 128], strides = [1, 1]} : vector<256x128xf32> to vector<32x128xf32>
    %4 = vector.extract_strided_slice %2 {offsets = [32, 0], sizes = [32, 128], strides = [1, 1]} : vector<256x128xf32> to vector<32x128xf32>
    %5 = arith.maximumf %3, %4 : vector<32x128xf32>
    %6 = vector.extract_strided_slice %2 {offsets = [64, 0], sizes = [32, 128], strides = [1, 1]} : vector<256x128xf32> to vector<32x128xf32>
    %7 = arith.maximumf %5, %6 : vector<32x128xf32>
    %8 = vector.extract_strided_slice %2 {offsets = [96, 0], sizes = [32, 128], strides = [1, 1]} : vector<256x128xf32> to vector<32x128xf32>
    %9 = arith.maximumf %7, %8 : vector<32x128xf32>
    %10 = vector.extract_strided_slice %2 {offsets = [128, 0], sizes = [32, 128], strides = [1, 1]} : vector<256x128xf32> to vector<32x128xf32>
    %11 = arith.maximumf %9, %10 : vector<32x128xf32>
    %12 = vector.extract_strided_slice %2 {offsets = [160, 0], sizes = [32, 128], strides = [1, 1]} : vector<256x128xf32> to vector<32x128xf32>
    %13 = arith.maximumf %11, %12 : vector<32x128xf32>
    %14 = vector.extract_strided_slice %2 {offsets = [192, 0], sizes = [32, 128], strides = [1, 1]} : vector<256x128xf32> to vector<32x128xf32>
    %15 = arith.maximumf %13, %14 : vector<32x128xf32>
    %16 = vector.extract_strided_slice %2 {offsets = [224, 0], sizes = [32, 128], strides = [1, 1]} : vector<256x128xf32> to vector<32x128xf32>
    %17 = arith.maximumf %15, %16 : vector<32x128xf32>
    %c0_3 = arith.constant 0 : index
    %c0_4 = arith.constant 0 : index
    %18 = vector.load %arg3[%c0_3, %c0_4] : memref<1x128xf32, #tpu.memory_space<vmem>>, vector<1x128xf32>
    %19 = vector.broadcast %18 : vector<1x128xf32> to vector<32x128xf32>
    %20 = arith.addf %17, %19 : vector<32x128xf32>
    %c0_5 = arith.constant 0 : index
    %c0_6 = arith.constant 0 : index
    %21 = vector.load %arg1[%c0_5, %c0_6] : memref<256x128xbf16, #tpu.memory_space<vmem>>, vector<256x128xbf16>
    %c0_7 = arith.constant 0 : index
    %c0_8 = arith.constant 0 : index
    %22 = vector.load %arg4[%c0_7, %c0_8] : memref<128x384xbf16, #tpu.memory_space<vmem>>, vector<128x384xbf16>
    %cst_9 = arith.constant dense<0.000000e+00> : vector<256x384xf32>
    %23 = tpu.matmul %21, %22, %cst_9 {dimension_numbers = #tpu.dot_dimension_numbers<[1], [0], [0], [1], [0, 0, 1, 1], [], []>} : vector<256x128xbf16>, vector<128x384xbf16>, vector<256x384xf32> -> vector<256x384xf32>
    %c0_10 = arith.constant 0 : index
    %c0_11 = arith.constant 0 : index
    %24 = vector.load %arg5[%c0_10, %c0_11] : memref<1x384xf32, #tpu.memory_space<vmem>>, vector<1x384xf32>
    %25 = vector.broadcast %24 : vector<1x384xf32> to vector<256x384xf32>
    %26 = arith.addf %23, %25 : vector<256x384xf32>
    %c0_12 = arith.constant 0 : index
    %c0_13 = arith.constant 0 : index
    %27 = vector.load %arg6[%c0_12, %c0_13] : memref<128x384xbf16, #tpu.memory_space<vmem>>, vector<128x384xbf16>
    %c0_14 = arith.constant 0 : index
    %c0_15 = arith.constant 0 : index
    %28 = vector.load %arg7[%c0_14, %c0_15] : memref<1x128xf32, #tpu.memory_space<vmem>>, vector<1x128xf32>
    %29 = arith.truncf %20 : vector<32x128xf32> to vector<32x128xbf16>
    %30 = vector.extract_strided_slice %26 {offsets = [0, 0], sizes = [32, 384], strides = [1, 1]} : vector<256x384xf32> to vector<32x384xf32>
    %cst_16 = arith.constant dense<0.000000e+00> : vector<32x384xf32>
    %31 = tpu.matmul %29, %27, %cst_16 {dimension_numbers = #tpu.dot_dimension_numbers<[1], [0], [0], [1], [0, 0, 1, 1], [], []>} : vector<32x128xbf16>, vector<128x384xbf16>, vector<32x384xf32> -> vector<32x384xf32>
    %32 = vector.extract_strided_slice %30 {offsets = [0, 0], sizes = [32, 128], strides = [1, 1]} : vector<32x384xf32> to vector<32x128xf32>
    %33 = vector.extract_strided_slice %31 {offsets = [0, 0], sizes = [32, 128], strides = [1, 1]} : vector<32x384xf32> to vector<32x128xf32>
    %34 = arith.addf %32, %33 : vector<32x128xf32>
    %35 = arith.negf %34 : vector<32x128xf32>
    %36 = math.exp %35 : vector<32x128xf32>
    %cst_17 = arith.constant 1.000000e+00 : f32
    %37 = vector.broadcast %cst_17 : f32 to vector<32x128xf32>
    %38 = arith.addf %37, %36 : vector<32x128xf32>
    %39 = arith.divf %37, %38 : vector<32x128xf32>
    %40 = vector.extract_strided_slice %30 {offsets = [0, 128], sizes = [32, 128], strides = [1, 1]} : vector<32x384xf32> to vector<32x128xf32>
    %41 = vector.extract_strided_slice %31 {offsets = [0, 128], sizes = [32, 128], strides = [1, 1]} : vector<32x384xf32> to vector<32x128xf32>
    %42 = arith.addf %40, %41 : vector<32x128xf32>
    %43 = arith.negf %42 : vector<32x128xf32>
    %44 = math.exp %43 : vector<32x128xf32>
    %cst_18 = arith.constant 1.000000e+00 : f32
    %45 = vector.broadcast %cst_18 : f32 to vector<32x128xf32>
    %46 = arith.addf %45, %44 : vector<32x128xf32>
    %47 = arith.divf %45, %46 : vector<32x128xf32>
    %48 = vector.extract_strided_slice %30 {offsets = [0, 256], sizes = [32, 128], strides = [1, 1]} : vector<32x384xf32> to vector<32x128xf32>
    %49 = vector.extract_strided_slice %31 {offsets = [0, 256], sizes = [32, 128], strides = [1, 1]} : vector<32x384xf32> to vector<32x128xf32>
    %50 = vector.broadcast %28 : vector<1x128xf32> to vector<32x128xf32>
    %51 = arith.addf %49, %50 : vector<32x128xf32>
    %52 = arith.mulf %39, %51 : vector<32x128xf32>
    %53 = arith.addf %48, %52 : vector<32x128xf32>
    %54 = math.tanh %53 : vector<32x128xf32>
    %cst_19 = arith.constant 1.000000e+00 : f32
    %55 = vector.broadcast %cst_19 : f32 to vector<32x128xf32>
    %56 = arith.subf %55, %47 : vector<32x128xf32>
    %57 = arith.mulf %56, %54 : vector<32x128xf32>
    %58 = arith.mulf %47, %20 : vector<32x128xf32>
    %59 = arith.addf %57, %58 : vector<32x128xf32>
    %60 = arith.truncf %59 : vector<32x128xf32> to vector<32x128xbf16>
    %c0_20 = arith.constant 0 : index
    %c0_21 = arith.constant 0 : index
    %61 = vector.load %arg8[%c0_20, %c0_21] : memref<256x128xbf16, #tpu.memory_space<vmem>>, vector<32x128xbf16>
    tpu.vector_store %arg8[%c0_20, %c0_21], %60 {strides = array<i32>} : memref<256x128xbf16, #tpu.memory_space<vmem>>, vector<32x128xbf16>,
    %62 = vector.extract_strided_slice %26 {offsets = [32, 0], sizes = [32, 384], strides = [1, 1]} : vector<256x384xf32> to vector<32x384xf32>
    %cst_22 = arith.constant dense<0.000000e+00> : vector<32x384xf32>
    %63 = tpu.matmul %60, %27, %cst_22 {dimension_numbers = #tpu.dot_dimension_numbers<[1], [0], [0], [1], [0, 0, 1, 1], [], []>} : vector<32x128xbf16>, vector<128x384xbf16>, vector<32x384xf32> -> vector<32x384xf32>
    %64 = vector.extract_strided_slice %62 {offsets = [0, 0], sizes = [32, 128], strides = [1, 1]} : vector<32x384xf32> to vector<32x128xf32>
    %65 = vector.extract_strided_slice %63 {offsets = [0, 0], sizes = [32, 128], strides = [1, 1]} : vector<32x384xf32> to vector<32x128xf32>
    %66 = arith.addf %64, %65 : vector<32x128xf32>
    %67 = arith.negf %66 : vector<32x128xf32>
    %68 = math.exp %67 : vector<32x128xf32>
    %cst_23 = arith.constant 1.000000e+00 : f32
    %69 = vector.broadcast %cst_23 : f32 to vector<32x128xf32>
    %70 = arith.addf %69, %68 : vector<32x128xf32>
    %71 = arith.divf %69, %70 : vector<32x128xf32>
    %72 = vector.extract_strided_slice %62 {offsets = [0, 128], sizes = [32, 128], strides = [1, 1]} : vector<32x384xf32> to vector<32x128xf32>
    %73 = vector.extract_strided_slice %63 {offsets = [0, 128], sizes = [32, 128], strides = [1, 1]} : vector<32x384xf32> to vector<32x128xf32>
    %74 = arith.addf %72, %73 : vector<32x128xf32>
    %75 = arith.negf %74 : vector<32x128xf32>
    %76 = math.exp %75 : vector<32x128xf32>
    %cst_24 = arith.constant 1.000000e+00 : f32
    %77 = vector.broadcast %cst_24 : f32 to vector<32x128xf32>
    %78 = arith.addf %77, %76 : vector<32x128xf32>
    %79 = arith.divf %77, %78 : vector<32x128xf32>
    %80 = vector.extract_strided_slice %62 {offsets = [0, 256], sizes = [32, 128], strides = [1, 1]} : vector<32x384xf32> to vector<32x128xf32>
    %81 = vector.extract_strided_slice %63 {offsets = [0, 256], sizes = [32, 128], strides = [1, 1]} : vector<32x384xf32> to vector<32x128xf32>
    %82 = vector.broadcast %28 : vector<1x128xf32> to vector<32x128xf32>
    %83 = arith.addf %81, %82 : vector<32x128xf32>
    %84 = arith.mulf %71, %83 : vector<32x128xf32>
    %85 = arith.addf %80, %84 : vector<32x128xf32>
    %86 = math.tanh %85 : vector<32x128xf32>
    %cst_25 = arith.constant 1.000000e+00 : f32
    %87 = vector.broadcast %cst_25 : f32 to vector<32x128xf32>
    %88 = arith.subf %87, %79 : vector<32x128xf32>
    %89 = arith.mulf %88, %86 : vector<32x128xf32>
    %90 = arith.mulf %79, %59 : vector<32x128xf32>
    %91 = arith.addf %89, %90 : vector<32x128xf32>
    %92 = arith.truncf %91 : vector<32x128xf32> to vector<32x128xbf16>
    %c32 = arith.constant 32 : index
    %c0_26 = arith.constant 0 : index
    %93 = vector.load %arg8[%c32, %c0_26] : memref<256x128xbf16, #tpu.memory_space<vmem>>, vector<32x128xbf16>
    tpu.vector_store %arg8[%c32, %c0_26], %92 {strides = array<i32>} : memref<256x128xbf16, #tpu.memory_space<vmem>>, vector<32x128xbf16>,
    %94 = vector.extract_strided_slice %26 {offsets = [64, 0], sizes = [32, 384], strides = [1, 1]} : vector<256x384xf32> to vector<32x384xf32>
    %cst_27 = arith.constant dense<0.000000e+00> : vector<32x384xf32>
    %95 = tpu.matmul %92, %27, %cst_27 {dimension_numbers = #tpu.dot_dimension_numbers<[1], [0], [0], [1], [0, 0, 1, 1], [], []>} : vector<32x128xbf16>, vector<128x384xbf16>, vector<32x384xf32> -> vector<32x384xf32>
    %96 = vector.extract_strided_slice %94 {offsets = [0, 0], sizes = [32, 128], strides = [1, 1]} : vector<32x384xf32> to vector<32x128xf32>
    %97 = vector.extract_strided_slice %95 {offsets = [0, 0], sizes = [32, 128], strides = [1, 1]} : vector<32x384xf32> to vector<32x128xf32>
    %98 = arith.addf %96, %97 : vector<32x128xf32>
    %99 = arith.negf %98 : vector<32x128xf32>
    %100 = math.exp %99 : vector<32x128xf32>
    %cst_28 = arith.constant 1.000000e+00 : f32
    %101 = vector.broadcast %cst_28 : f32 to vector<32x128xf32>
    %102 = arith.addf %101, %100 : vector<32x128xf32>
    %103 = arith.divf %101, %102 : vector<32x128xf32>
    %104 = vector.extract_strided_slice %94 {offsets = [0, 128], sizes = [32, 128], strides = [1, 1]} : vector<32x384xf32> to vector<32x128xf32>
    %105 = vector.extract_strided_slice %95 {offsets = [0, 128], sizes = [32, 128], strides = [1, 1]} : vector<32x384xf32> to vector<32x128xf32>
    %106 = arith.addf %104, %105 : vector<32x128xf32>
    %107 = arith.negf %106 : vector<32x128xf32>
    %108 = math.exp %107 : vector<32x128xf32>
    %cst_29 = arith.constant 1.000000e+00 : f32
    %109 = vector.broadcast %cst_29 : f32 to vector<32x128xf32>
    %110 = arith.addf %109, %108 : vector<32x128xf32>
    %111 = arith.divf %109, %110 : vector<32x128xf32>
    %112 = vector.extract_strided_slice %94 {offsets = [0, 256], sizes = [32, 128], strides = [1, 1]} : vector<32x384xf32> to vector<32x128xf32>
    %113 = vector.extract_strided_slice %95 {offsets = [0, 256], sizes = [32, 128], strides = [1, 1]} : vector<32x384xf32> to vector<32x128xf32>
    %114 = vector.broadcast %28 : vector<1x128xf32> to vector<32x128xf32>
    %115 = arith.addf %113, %114 : vector<32x128xf32>
    %116 = arith.mulf %103, %115 : vector<32x128xf32>
    %117 = arith.addf %112, %116 : vector<32x128xf32>
    %118 = math.tanh %117 : vector<32x128xf32>
    %cst_30 = arith.constant 1.000000e+00 : f32
    %119 = vector.broadcast %cst_30 : f32 to vector<32x128xf32>
    %120 = arith.subf %119, %111 : vector<32x128xf32>
    %121 = arith.mulf %120, %118 : vector<32x128xf32>
    %122 = arith.mulf %111, %91 : vector<32x128xf32>
    %123 = arith.addf %121, %122 : vector<32x128xf32>
    %124 = arith.truncf %123 : vector<32x128xf32> to vector<32x128xbf16>
    %c64 = arith.constant 64 : index
    %c0_31 = arith.constant 0 : index
    %125 = vector.load %arg8[%c64, %c0_31] : memref<256x128xbf16, #tpu.memory_space<vmem>>, vector<32x128xbf16>
    tpu.vector_store %arg8[%c64, %c0_31], %124 {strides = array<i32>} : memref<256x128xbf16, #tpu.memory_space<vmem>>, vector<32x128xbf16>,
    %126 = vector.extract_strided_slice %26 {offsets = [96, 0], sizes = [32, 384], strides = [1, 1]} : vector<256x384xf32> to vector<32x384xf32>
    %cst_32 = arith.constant dense<0.000000e+00> : vector<32x384xf32>
    %127 = tpu.matmul %124, %27, %cst_32 {dimension_numbers = #tpu.dot_dimension_numbers<[1], [0], [0], [1], [0, 0, 1, 1], [], []>} : vector<32x128xbf16>, vector<128x384xbf16>, vector<32x384xf32> -> vector<32x384xf32>
    %128 = vector.extract_strided_slice %126 {offsets = [0, 0], sizes = [32, 128], strides = [1, 1]} : vector<32x384xf32> to vector<32x128xf32>
    %129 = vector.extract_strided_slice %127 {offsets = [0, 0], sizes = [32, 128], strides = [1, 1]} : vector<32x384xf32> to vector<32x128xf32>
    %130 = arith.addf %128, %129 : vector<32x128xf32>
    %131 = arith.negf %130 : vector<32x128xf32>
    %132 = math.exp %131 : vector<32x128xf32>
    %cst_33 = arith.constant 1.000000e+00 : f32
    %133 = vector.broadcast %cst_33 : f32 to vector<32x128xf32>
    %134 = arith.addf %133, %132 : vector<32x128xf32>
    %135 = arith.divf %133, %134 : vector<32x128xf32>
    %136 = vector.extract_strided_slice %126 {offsets = [0, 128], sizes = [32, 128], strides = [1, 1]} : vector<32x384xf32> to vector<32x128xf32>
    %137 = vector.extract_strided_slice %127 {offsets = [0, 128], sizes = [32, 128], strides = [1, 1]} : vector<32x384xf32> to vector<32x128xf32>
    %138 = arith.addf %136, %137 : vector<32x128xf32>
    %139 = arith.negf %138 : vector<32x128xf32>
    %140 = math.exp %139 : vector<32x128xf32>
    %cst_34 = arith.constant 1.000000e+00 : f32
    %141 = vector.broadcast %cst_34 : f32 to vector<32x128xf32>
    %142 = arith.addf %141, %140 : vector<32x128xf32>
    %143 = arith.divf %141, %142 : vector<32x128xf32>
    %144 = vector.extract_strided_slice %126 {offsets = [0, 256], sizes = [32, 128], strides = [1, 1]} : vector<32x384xf32> to vector<32x128xf32>
    %145 = vector.extract_strided_slice %127 {offsets = [0, 256], sizes = [32, 128], strides = [1, 1]} : vector<32x384xf32> to vector<32x128xf32>
    %146 = vector.broadcast %28 : vector<1x128xf32> to vector<32x128xf32>
    %147 = arith.addf %145, %146 : vector<32x128xf32>
    %148 = arith.mulf %135, %147 : vector<32x128xf32>
    %149 = arith.addf %144, %148 : vector<32x128xf32>
    %150 = math.tanh %149 : vector<32x128xf32>
    %cst_35 = arith.constant 1.000000e+00 : f32
    %151 = vector.broadcast %cst_35 : f32 to vector<32x128xf32>
    %152 = arith.subf %151, %143 : vector<32x128xf32>
    %153 = arith.mulf %152, %150 : vector<32x128xf32>
    %154 = arith.mulf %143, %123 : vector<32x128xf32>
    %155 = arith.addf %153, %154 : vector<32x128xf32>
    %156 = arith.truncf %155 : vector<32x128xf32> to vector<32x128xbf16>
    %c96 = arith.constant 96 : index
    %c0_36 = arith.constant 0 : index
    %157 = vector.load %arg8[%c96, %c0_36] : memref<256x128xbf16, #tpu.memory_space<vmem>>, vector<32x128xbf16>
    tpu.vector_store %arg8[%c96, %c0_36], %156 {strides = array<i32>} : memref<256x128xbf16, #tpu.memory_space<vmem>>, vector<32x128xbf16>,
    %158 = vector.extract_strided_slice %26 {offsets = [128, 0], sizes = [32, 384], strides = [1, 1]} : vector<256x384xf32> to vector<32x384xf32>
    %cst_37 = arith.constant dense<0.000000e+00> : vector<32x384xf32>
    %159 = tpu.matmul %156, %27, %cst_37 {dimension_numbers = #tpu.dot_dimension_numbers<[1], [0], [0], [1], [0, 0, 1, 1], [], []>} : vector<32x128xbf16>, vector<128x384xbf16>, vector<32x384xf32> -> vector<32x384xf32>
    %160 = vector.extract_strided_slice %158 {offsets = [0, 0], sizes = [32, 128], strides = [1, 1]} : vector<32x384xf32> to vector<32x128xf32>
    %161 = vector.extract_strided_slice %159 {offsets = [0, 0], sizes = [32, 128], strides = [1, 1]} : vector<32x384xf32> to vector<32x128xf32>
    %162 = arith.addf %160, %161 : vector<32x128xf32>
    %163 = arith.negf %162 : vector<32x128xf32>
    %164 = math.exp %163 : vector<32x128xf32>
    %cst_38 = arith.constant 1.000000e+00 : f32
    %165 = vector.broadcast %cst_38 : f32 to vector<32x128xf32>
    %166 = arith.addf %165, %164 : vector<32x128xf32>
    %167 = arith.divf %165, %166 : vector<32x128xf32>
    %168 = vector.extract_strided_slice %158 {offsets = [0, 128], sizes = [32, 128], strides = [1, 1]} : vector<32x384xf32> to vector<32x128xf32>
    %169 = vector.extract_strided_slice %159 {offsets = [0, 128], sizes = [32, 128], strides = [1, 1]} : vector<32x384xf32> to vector<32x128xf32>
    %170 = arith.addf %168, %169 : vector<32x128xf32>
    %171 = arith.negf %170 : vector<32x128xf32>
    %172 = math.exp %171 : vector<32x128xf32>
    %cst_39 = arith.constant 1.000000e+00 : f32
    %173 = vector.broadcast %cst_39 : f32 to vector<32x128xf32>
    %174 = arith.addf %173, %172 : vector<32x128xf32>
    %175 = arith.divf %173, %174 : vector<32x128xf32>
    %176 = vector.extract_strided_slice %158 {offsets = [0, 256], sizes = [32, 128], strides = [1, 1]} : vector<32x384xf32> to vector<32x128xf32>
    %177 = vector.extract_strided_slice %159 {offsets = [0, 256], sizes = [32, 128], strides = [1, 1]} : vector<32x384xf32> to vector<32x128xf32>
    %178 = vector.broadcast %28 : vector<1x128xf32> to vector<32x128xf32>
    %179 = arith.addf %177, %178 : vector<32x128xf32>
    %180 = arith.mulf %167, %179 : vector<32x128xf32>
    %181 = arith.addf %176, %180 : vector<32x128xf32>
    %182 = math.tanh %181 : vector<32x128xf32>
    %cst_40 = arith.constant 1.000000e+00 : f32
    %183 = vector.broadcast %cst_40 : f32 to vector<32x128xf32>
    %184 = arith.subf %183, %175 : vector<32x128xf32>
    %185 = arith.mulf %184, %182 : vector<32x128xf32>
    %186 = arith.mulf %175, %155 : vector<32x128xf32>
    %187 = arith.addf %185, %186 : vector<32x128xf32>
    %188 = arith.truncf %187 : vector<32x128xf32> to vector<32x128xbf16>
    %c128 = arith.constant 128 : index
    %c0_41 = arith.constant 0 : index
    %189 = vector.load %arg8[%c128, %c0_41] : memref<256x128xbf16, #tpu.memory_space<vmem>>, vector<32x128xbf16>
    tpu.vector_store %arg8[%c128, %c0_41], %188 {strides = array<i32>} : memref<256x128xbf16, #tpu.memory_space<vmem>>, vector<32x128xbf16>,
    %190 = vector.extract_strided_slice %26 {offsets = [160, 0], sizes = [32, 384], strides = [1, 1]} : vector<256x384xf32> to vector<32x384xf32>
    %cst_42 = arith.constant dense<0.000000e+00> : vector<32x384xf32>
    %191 = tpu.matmul %188, %27, %cst_42 {dimension_numbers = #tpu.dot_dimension_numbers<[1], [0], [0], [1], [0, 0, 1, 1], [], []>} : vector<32x128xbf16>, vector<128x384xbf16>, vector<32x384xf32> -> vector<32x384xf32>
    %192 = vector.extract_strided_slice %190 {offsets = [0, 0], sizes = [32, 128], strides = [1, 1]} : vector<32x384xf32> to vector<32x128xf32>
    %193 = vector.extract_strided_slice %191 {offsets = [0, 0], sizes = [32, 128], strides = [1, 1]} : vector<32x384xf32> to vector<32x128xf32>
    %194 = arith.addf %192, %193 : vector<32x128xf32>
    %195 = arith.negf %194 : vector<32x128xf32>
    %196 = math.exp %195 : vector<32x128xf32>
    %cst_43 = arith.constant 1.000000e+00 : f32
    %197 = vector.broadcast %cst_43 : f32 to vector<32x128xf32>
    %198 = arith.addf %197, %196 : vector<32x128xf32>
    %199 = arith.divf %197, %198 : vector<32x128xf32>
    %200 = vector.extract_strided_slice %190 {offsets = [0, 128], sizes = [32, 128], strides = [1, 1]} : vector<32x384xf32> to vector<32x128xf32>
    %201 = vector.extract_strided_slice %191 {offsets = [0, 128], sizes = [32, 128], strides = [1, 1]} : vector<32x384xf32> to vector<32x128xf32>
    %202 = arith.addf %200, %201 : vector<32x128xf32>
    %203 = arith.negf %202 : vector<32x128xf32>
    %204 = math.exp %203 : vector<32x128xf32>
    %cst_44 = arith.constant 1.000000e+00 : f32
    %205 = vector.broadcast %cst_44 : f32 to vector<32x128xf32>
    %206 = arith.addf %205, %204 : vector<32x128xf32>
    %207 = arith.divf %205, %206 : vector<32x128xf32>
    %208 = vector.extract_strided_slice %190 {offsets = [0, 256], sizes = [32, 128], strides = [1, 1]} : vector<32x384xf32> to vector<32x128xf32>
    %209 = vector.extract_strided_slice %191 {offsets = [0, 256], sizes = [32, 128], strides = [1, 1]} : vector<32x384xf32> to vector<32x128xf32>
    %210 = vector.broadcast %28 : vector<1x128xf32> to vector<32x128xf32>
    %211 = arith.addf %209, %210 : vector<32x128xf32>
    %212 = arith.mulf %199, %211 : vector<32x128xf32>
    %213 = arith.addf %208, %212 : vector<32x128xf32>
    %214 = math.tanh %213 : vector<32x128xf32>
    %cst_45 = arith.constant 1.000000e+00 : f32
    %215 = vector.broadcast %cst_45 : f32 to vector<32x128xf32>
    %216 = arith.subf %215, %207 : vector<32x128xf32>
    %217 = arith.mulf %216, %214 : vector<32x128xf32>
    %218 = arith.mulf %207, %187 : vector<32x128xf32>
    %219 = arith.addf %217, %218 : vector<32x128xf32>
    %220 = arith.truncf %219 : vector<32x128xf32> to vector<32x128xbf16>
    %c160 = arith.constant 160 : index
    %c0_46 = arith.constant 0 : index
    %221 = vector.load %arg8[%c160, %c0_46] : memref<256x128xbf16, #tpu.memory_space<vmem>>, vector<32x128xbf16>
    tpu.vector_store %arg8[%c160, %c0_46], %220 {strides = array<i32>} : memref<256x128xbf16, #tpu.memory_space<vmem>>, vector<32x128xbf16>,
    %222 = vector.extract_strided_slice %26 {offsets = [192, 0], sizes = [32, 384], strides = [1, 1]} : vector<256x384xf32> to vector<32x384xf32>
    %cst_47 = arith.constant dense<0.000000e+00> : vector<32x384xf32>
    %223 = tpu.matmul %220, %27, %cst_47 {dimension_numbers = #tpu.dot_dimension_numbers<[1], [0], [0], [1], [0, 0, 1, 1], [], []>} : vector<32x128xbf16>, vector<128x384xbf16>, vector<32x384xf32> -> vector<32x384xf32>
    %224 = vector.extract_strided_slice %222 {offsets = [0, 0], sizes = [32, 128], strides = [1, 1]} : vector<32x384xf32> to vector<32x128xf32>
    %225 = vector.extract_strided_slice %223 {offsets = [0, 0], sizes = [32, 128], strides = [1, 1]} : vector<32x384xf32> to vector<32x128xf32>
    %226 = arith.addf %224, %225 : vector<32x128xf32>
    %227 = arith.negf %226 : vector<32x128xf32>
    %228 = math.exp %227 : vector<32x128xf32>
    %cst_48 = arith.constant 1.000000e+00 : f32
    %229 = vector.broadcast %cst_48 : f32 to vector<32x128xf32>
    %230 = arith.addf %229, %228 : vector<32x128xf32>
    %231 = arith.divf %229, %230 : vector<32x128xf32>
    %232 = vector.extract_strided_slice %222 {offsets = [0, 128], sizes = [32, 128], strides = [1, 1]} : vector<32x384xf32> to vector<32x128xf32>
    %233 = vector.extract_strided_slice %223 {offsets = [0, 128], sizes = [32, 128], strides = [1, 1]} : vector<32x384xf32> to vector<32x128xf32>
    %234 = arith.addf %232, %233 : vector<32x128xf32>
    %235 = arith.negf %234 : vector<32x128xf32>
    %236 = math.exp %235 : vector<32x128xf32>
    %cst_49 = arith.constant 1.000000e+00 : f32
    %237 = vector.broadcast %cst_49 : f32 to vector<32x128xf32>
    %238 = arith.addf %237, %236 : vector<32x128xf32>
    %239 = arith.divf %237, %238 : vector<32x128xf32>
    %240 = vector.extract_strided_slice %222 {offsets = [0, 256], sizes = [32, 128], strides = [1, 1]} : vector<32x384xf32> to vector<32x128xf32>
    %241 = vector.extract_strided_slice %223 {offsets = [0, 256], sizes = [32, 128], strides = [1, 1]} : vector<32x384xf32> to vector<32x128xf32>
    %242 = vector.broadcast %28 : vector<1x128xf32> to vector<32x128xf32>
    %243 = arith.addf %241, %242 : vector<32x128xf32>
    %244 = arith.mulf %231, %243 : vector<32x128xf32>
    %245 = arith.addf %240, %244 : vector<32x128xf32>
    %246 = math.tanh %245 : vector<32x128xf32>
    %cst_50 = arith.constant 1.000000e+00 : f32
    %247 = vector.broadcast %cst_50 : f32 to vector<32x128xf32>
    %248 = arith.subf %247, %239 : vector<32x128xf32>
    %249 = arith.mulf %248, %246 : vector<32x128xf32>
    %250 = arith.mulf %239, %219 : vector<32x128xf32>
    %251 = arith.addf %249, %250 : vector<32x128xf32>
    %252 = arith.truncf %251 : vector<32x128xf32> to vector<32x128xbf16>
    %c192 = arith.constant 192 : index
    %c0_51 = arith.constant 0 : index
    %253 = vector.load %arg8[%c192, %c0_51] : memref<256x128xbf16, #tpu.memory_space<vmem>>, vector<32x128xbf16>
    tpu.vector_store %arg8[%c192, %c0_51], %252 {strides = array<i32>} : memref<256x128xbf16, #tpu.memory_space<vmem>>, vector<32x128xbf16>,
    %254 = vector.extract_strided_slice %26 {offsets = [224, 0], sizes = [32, 384], strides = [1, 1]} : vector<256x384xf32> to vector<32x384xf32>
    %cst_52 = arith.constant dense<0.000000e+00> : vector<32x384xf32>
    %255 = tpu.matmul %252, %27, %cst_52 {dimension_numbers = #tpu.dot_dimension_numbers<[1], [0], [0], [1], [0, 0, 1, 1], [], []>} : vector<32x128xbf16>, vector<128x384xbf16>, vector<32x384xf32> -> vector<32x384xf32>
    %256 = vector.extract_strided_slice %254 {offsets = [0, 0], sizes = [32, 128], strides = [1, 1]} : vector<32x384xf32> to vector<32x128xf32>
    %257 = vector.extract_strided_slice %255 {offsets = [0, 0], sizes = [32, 128], strides = [1, 1]} : vector<32x384xf32> to vector<32x128xf32>
    %258 = arith.addf %256, %257 : vector<32x128xf32>
    %259 = arith.negf %258 : vector<32x128xf32>
    %260 = math.exp %259 : vector<32x128xf32>
    %cst_53 = arith.constant 1.000000e+00 : f32
    %261 = vector.broadcast %cst_53 : f32 to vector<32x128xf32>
    %262 = arith.addf %261, %260 : vector<32x128xf32>
    %263 = arith.divf %261, %262 : vector<32x128xf32>
    %264 = vector.extract_strided_slice %254 {offsets = [0, 128], sizes = [32, 128], strides = [1, 1]} : vector<32x384xf32> to vector<32x128xf32>
    %265 = vector.extract_strided_slice %255 {offsets = [0, 128], sizes = [32, 128], strides = [1, 1]} : vector<32x384xf32> to vector<32x128xf32>
    %266 = arith.addf %264, %265 : vector<32x128xf32>
    %267 = arith.negf %266 : vector<32x128xf32>
    %268 = math.exp %267 : vector<32x128xf32>
    %cst_54 = arith.constant 1.000000e+00 : f32
    %269 = vector.broadcast %cst_54 : f32 to vector<32x128xf32>
    %270 = arith.addf %269, %268 : vector<32x128xf32>
    %271 = arith.divf %269, %270 : vector<32x128xf32>
    %272 = vector.extract_strided_slice %254 {offsets = [0, 256], sizes = [32, 128], strides = [1, 1]} : vector<32x384xf32> to vector<32x128xf32>
    %273 = vector.extract_strided_slice %255 {offsets = [0, 256], sizes = [32, 128], strides = [1, 1]} : vector<32x384xf32> to vector<32x128xf32>
    %274 = vector.broadcast %28 : vector<1x128xf32> to vector<32x128xf32>
    %275 = arith.addf %273, %274 : vector<32x128xf32>
    %276 = arith.mulf %263, %275 : vector<32x128xf32>
    %277 = arith.addf %272, %276 : vector<32x128xf32>
    %278 = math.tanh %277 : vector<32x128xf32>
    %cst_55 = arith.constant 1.000000e+00 : f32
    %279 = vector.broadcast %cst_55 : f32 to vector<32x128xf32>
    %280 = arith.subf %279, %271 : vector<32x128xf32>
    %281 = arith.mulf %280, %278 : vector<32x128xf32>
    %282 = arith.mulf %271, %251 : vector<32x128xf32>
    %283 = arith.addf %281, %282 : vector<32x128xf32>
    %284 = arith.truncf %283 : vector<32x128xf32> to vector<32x128xbf16>
    %c224 = arith.constant 224 : index
    %c0_56 = arith.constant 0 : index
    %285 = vector.load %arg8[%c224, %c0_56] : memref<256x128xbf16, #tpu.memory_space<vmem>>, vector<32x128xbf16>
    tpu.vector_store %arg8[%c224, %c0_56], %284 {strides = array<i32>} : memref<256x128xbf16, #tpu.memory_space<vmem>>, vector<32x128xbf16>,
    return
  }
}

module attributes {stable_mosaic.version = 11 : i64} {
  func.func @projection_kernel(%arg0: i32, %arg1: memref<256x128xbf16, #tpu.memory_space<vmem>>, %arg2: memref<128x128xbf16, #tpu.memory_space<vmem>>, %arg3: memref<1x128xf32, #tpu.memory_space<vmem>>, %arg4: memref<256x128xf32, #tpu.memory_space<vmem>>) attributes {dimension_semantics = [#tpu.dimension_semantics<parallel>], iteration_bounds = array<i64: 1>, scalar_prefetch = 0 : i64, scratch_operands = 0 : i64, tpu.core_type = #tpu.core_type<tc>, window_params = [{pipeline_mode = #tpu.pipeline_mode<synchronous>, transform_indices = @transform_0, window_bounds = array<i64: 256, 128>}, {transform_indices = @transform_1, window_bounds = array<i64: 128, 128>}, {transform_indices = @transform_2, window_bounds = array<i64: 1, 128>}, {transform_indices = @transform_3, window_bounds = array<i64: 256, 128>}]} {
    %c0 = arith.constant 0 : index
    %c0_0 = arith.constant 0 : index
    %0 = vector.load %arg1[%c0, %c0_0] : memref<256x128xbf16, #tpu.memory_space<vmem>>, vector<256x128xbf16>
    %c0_1 = arith.constant 0 : index
    %c0_2 = arith.constant 0 : index
    %1 = vector.load %arg2[%c0_1, %c0_2] : memref<128x128xbf16, #tpu.memory_space<vmem>>, vector<128x128xbf16>
    %cst = arith.constant dense<0.000000e+00> : vector<256x128xf32>
    %2 = tpu.matmul %0, %1, %cst {dimension_numbers = #tpu.dot_dimension_numbers<[1], [0], [0], [1], [0, 0, 1, 1], [], []>} : vector<256x128xbf16>, vector<128x128xbf16>, vector<256x128xf32> -> vector<256x128xf32>
    %c0_3 = arith.constant 0 : index
    %c0_4 = arith.constant 0 : index
    %3 = vector.load %arg3[%c0_3, %c0_4] : memref<1x128xf32, #tpu.memory_space<vmem>>, vector<1x128xf32>
    %4 = vector.broadcast %3 : vector<1x128xf32> to vector<256x128xf32>
    %5 = arith.addf %2, %4 : vector<256x128xf32>
    %c0_5 = arith.constant 0 : index
    %c0_6 = arith.constant 0 : index
    %6 = vector.load %arg4[%c0_5, %c0_6] : memref<256x128xf32, #tpu.memory_space<vmem>>, vector<256x128xf32>
    tpu.vector_store %arg4[%c0_5, %c0_6], %5 {strides = array<i32>} : memref<256x128xf32, #tpu.memory_space<vmem>>, vector<256x128xf32>,
    return
  }
  func.func @transform_0(%arg0: i32) -> (i32, i32) {
    %c0_i32 = arith.constant 0 : i32
    %c0_i32_0 = arith.constant 0 : i32
    %c0_i32_1 = arith.constant 0 : i32
    return %c0_i32, %c0_i32_0 : i32, i32
  }
  func.func @transform_1(%arg0: i32) -> (i32, i32) {
    %c0_i32 = arith.constant 0 : i32
    %c0_i32_0 = arith.constant 0 : i32
    return %c0_i32, %arg0 : i32, i32
  }
  func.func @transform_2(%arg0: i32) -> (i32, i32) {
    %c0_i32 = arith.constant 0 : i32
    %c0_i32_0 = arith.constant 0 : i32
    return %c0_i32, %arg0 : i32, i32
  }
  func.func @transform_3(%arg0: i32) -> (i32, i32) {
    %c0_i32 = arith.constant 0 : i32
    %c0_i32_0 = arith.constant 0 : i32
    return %c0_i32, %arg0 : i32, i32
  }
}

</mosaic_0001>

<llo_original>
// kernel: nlg_forward.3
$region0: #{nlg_forward.3}
  #allocation0 [shape = 'u32[]', space=smem, size = 0x4, offset = 0x4, fixed_abs, tag = 'smem constant byte address 0x4 - core index']
  #allocation1 [shape = 'u32[144,128]{1,0:T(1,128)}', space=vmem, size = 0x12000, scoped, tag = 'internal scratch']
  %s0 = inlined_call_operand.vmem [shape: bf16[256,128], index: 0, kind: input, shape index: {}]
  %s1 = inlined_call_operand.vmem [shape: bf16[128,128], index: 1, kind: input, shape index: {}]
  %s2 = inlined_call_operand.vmem [shape: f32[1,128], index: 2, kind: input, shape index: {}]
  %s3 = inlined_call_operand.vmem [shape: f32[256,128], index: 3, kind: output, shape index: {}]
  %s4 = sld [smem:[#allocation0]]
  $region22: #{nlg_forward.3} parent=0
    _
  %s6 = ssub.s32 1, %s4
  %s7 = scalar_select 0, %s6, %s4
  // Predicated region
  $region2: #{nlg_forward.3} parent=0 // pred_check
    _
  $region3: #{nlg_forward.3} parent=0 // pred_check_branch
    %9 = sbr.rel (0) target = $region5
  $region4: #{nlg_forward.3} parent=0 // pred_region
    _
  $region5: #{nlg_forward.3} parent=0 // pred_fallthru
    _
  // Predicated region
  $region6: #{nlg_forward.3} parent=0 // pred_check
    _
  $region7: #{nlg_forward.3} parent=0 // pred_check_branch
    %11 = sbr.rel (0) target = $region9
  $region8: #{nlg_forward.3} parent=0 // pred_region
    _
  $region9: #{nlg_forward.3} parent=0 // pred_fallthru
    _
  // Predicated region
  $region10: #{nlg_forward.3} parent=0 // pred_check
    _
  $region11: #{nlg_forward.3} parent=0 // pred_check_branch
    %13 = sbr.rel (0) target = $region13
  $region12: #{nlg_forward.3} parent=0 // pred_region
    _
  $region13: #{nlg_forward.3} parent=0 // pred_fallthru
    _
  %v15 = vld [vmem:[%s0] sm:$0xf]
  %v16 = vld [vmem:[%s0 + $0x4] sm:$0xf]
  %v17 = vld [vmem:[%s0 + $0x8] sm:$0xf]
  %v18 = vld [vmem:[%s0 + $0xc] sm:$0xf]
  %v19 = vld [vmem:[%s0 + $0x10] sm:$0xf]
  %v20 = vld [vmem:[%s0 + $0x14] sm:$0xf]
  %v21 = vld [vmem:[%s0 + $0x18] sm:$0xf]
  %v22 = vld [vmem:[%s0 + $0x1c] sm:$0xf]
  %v23 = vld [vmem:[%s0 + $0x20] sm:$0xf]
  %v24 = vld [vmem:[%s0 + $0x24] sm:$0xf]
  %v25 = vld [vmem:[%s0 + $0x28] sm:$0xf]
  %v26 = vld [vmem:[%s0 + $0x2c] sm:$0xf]
  %v27 = vld [vmem:[%s0 + $0x30] sm:$0xf]
  %v28 = vld [vmem:[%s0 + $0x34] sm:$0xf]
  %v29 = vld [vmem:[%s0 + $0x38] sm:$0xf]
  %v30 = vld [vmem:[%s0 + $0x3c] sm:$0xf]
  %v31 = vld [vmem:[%s0 + $0x40] sm:$0xf]
  %v32 = vld [vmem:[%s0 + $0x44] sm:$0xf]
  %v33 = vld [vmem:[%s0 + $0x48] sm:$0xf]
  %v34 = vld [vmem:[%s0 + $0x4c] sm:$0xf]
  %v35 = vld [vmem:[%s0 + $0x50] sm:$0xf]
  %v36 = vld [vmem:[%s0 + $0x54] sm:$0xf]
  %v37 = vld [vmem:[%s0 + $0x58] sm:$0xf]
  %v38 = vld [vmem:[%s0 + $0x5c] sm:$0xf]
  %v39 = vld [vmem:[%s0 + $0x60] sm:$0xf]
  %v40 = vld [vmem:[%s0 + $0x64] sm:$0xf]
  %v41 = vld [vmem:[%s0 + $0x68] sm:$0xf]
  %v42 = vld [vmem:[%s0 + $0x6c] sm:$0xf]
  %v43 = vld [vmem:[%s0 + $0x70] sm:$0xf]
  %v44 = vld [vmem:[%s0 + $0x74] sm:$0xf]
  %v45 = vld [vmem:[%s0 + $0x78] sm:$0xf]
  %v46 = vld [vmem:[%s0 + $0x7c] sm:$0xf]
  %v47 = vld [vmem:[%s1] sm:$0xf]
  %v48 = vld [vmem:[%s1 + $0x4] sm:$0xf]
  %v49 = vld [vmem:[%s1 + $0x8] sm:$0xf]
  %v50 = vld [vmem:[%s1 + $0xc] sm:$0xf]
  %v51 = vld [vmem:[%s1 + $0x10] sm:$0xf]
  %v52 = vld [vmem:[%s1 + $0x14] sm:$0xf]
  %v53 = vld [vmem:[%s1 + $0x18] sm:$0xf]
  %v54 = vld [vmem:[%s1 + $0x1c] sm:$0xf]
  %v55 = vld [vmem:[%s1 + $0x20] sm:$0xf]
  %v56 = vld [vmem:[%s1 + $0x24] sm:$0xf]
  %v57 = vld [vmem:[%s1 + $0x28] sm:$0xf]
  %v58 = vld [vmem:[%s1 + $0x2c] sm:$0xf]
  %v59 = vld [vmem:[%s1 + $0x30] sm:$0xf]
  %v60 = vld [vmem:[%s1 + $0x34] sm:$0xf]
  %v61 = vld [vmem:[%s1 + $0x38] sm:$0xf]
  %v62 = vld [vmem:[%s1 + $0x3c] sm:$0xf]
  %v63 = vld [vmem:[%s2] sm:$0x1]
  %v65 = vlaneseq
  %v66 = vshrl.u32 %v65, 7
  %v67 = vsub.s32 0, %v66
  %v68 = vrot.slane %v63, %v67
  %v102 = vunpack.c.l.b16 %v15
  %v103 = vunpack.c.l.b16 %v16
  %v104 = vunpack.c.l.b16 %v17
  %v105 = vunpack.c.l.b16 %v18
  %v106 = vunpack.c.l.b16 %v19
  %v107 = vunpack.c.l.b16 %v20
  %v108 = vunpack.c.l.b16 %v21
  %v109 = vunpack.c.l.b16 %v22
  %v110 = vunpack.c.l.b16 %v23
  %v111 = vunpack.c.l.b16 %v24
  %v112 = vunpack.c.l.b16 %v25
  %v113 = vunpack.c.l.b16 %v26
  %v114 = vunpack.c.l.b16 %v27
  %v115 = vunpack.c.l.b16 %v28
  %v116 = vunpack.c.l.b16 %v29
  %v117 = vunpack.c.l.b16 %v30
  %v118 = vunpack.c.l.b16 %v31
  %v119 = vunpack.c.l.b16 %v32
  %v120 = vunpack.c.l.b16 %v33
  %v121 = vunpack.c.l.b16 %v34
  %v122 = vunpack.c.l.b16 %v35
  %v123 = vunpack.c.l.b16 %v36
  %v124 = vunpack.c.l.b16 %v37
  %v125 = vunpack.c.l.b16 %v38
  %v126 = vunpack.c.l.b16 %v39
  %v127 = vunpack.c.l.b16 %v40
  %v128 = vunpack.c.l.b16 %v41
  %v129 = vunpack.c.l.b16 %v42
  %v130 = vunpack.c.l.b16 %v43
  %v131 = vunpack.c.l.b16 %v44
  %v132 = vunpack.c.l.b16 %v45
  %v133 = vunpack.c.l.b16 %v46
  %v134 = vpack.c.b16 %v103, %v102
  %v135 = vpack.c.b16 %v105, %v104
  %v136 = vpack.c.b16 %v107, %v106
  %v137 = vpack.c.b16 %v109, %v108
  %v138 = vpack.c.b16 %v111, %v110
  %v139 = vpack.c.b16 %v113, %v112
  %v140 = vpack.c.b16 %v115, %v114
  %v141 = vpack.c.b16 %v117, %v116
  %v142 = vpack.c.b16 %v119, %v118
  %v143 = vpack.c.b16 %v121, %v120
  %v144 = vpack.c.b16 %v123, %v122
  %v145 = vpack.c.b16 %v125, %v124
  %v146 = vpack.c.b16 %v127, %v126
  %v147 = vpack.c.b16 %v129, %v128
  %v148 = vpack.c.b16 %v131, %v130
  %v149 = vpack.c.b16 %v133, %v132
  %v182 = vunpack.c.l.b16 %v47
  %v183 = vunpack.c.l.b16 %v48
  %v184 = vunpack.c.l.b16 %v49
  %v185 = vunpack.c.l.b16 %v50
  %v186 = vunpack.c.l.b16 %v51
  %v187 = vunpack.c.l.b16 %v52
  %v188 = vunpack.c.l.b16 %v53
  %v189 = vunpack.c.l.b16 %v54
  %v190 = vunpack.c.l.b16 %v55
  %v191 = vunpack.c.l.b16 %v56
  %v192 = vunpack.c.l.b16 %v57
  %v193 = vunpack.c.l.b16 %v58
  %v194 = vunpack.c.l.b16 %v59
  %v195 = vunpack.c.l.b16 %v60
  %v196 = vunpack.c.l.b16 %v61
  %v197 = vunpack.c.l.b16 %v62
  %v198 = vpack.c.b16 %v183, %v182
  %v199 = vpack.c.b16 %v185, %v184
  %v200 = vpack.c.b16 %v187, %v186
  %v201 = vpack.c.b16 %v189, %v188
  %v202 = vpack.c.b16 %v191, %v190
  %v203 = vpack.c.b16 %v193, %v192
  %v204 = vpack.c.b16 %v195, %v194
  %v205 = vpack.c.b16 %v197, %v196
  %214 = vmatprep.subr.bf16.mxu0 0
  %215 = vmatpush1.bf16.msra.mxu0 %v198
  %216 = vmatprep.subr.bf16.mxu0 0
  %217 = vmatpush1.bf16.msra.mxu0 %v199
  %218 = vmatprep.subr.bf16.mxu0 0
  %219 = vmatpush1.bf16.msra.mxu0 %v200
  %220 = vmatprep.subr.bf16.mxu0 0
  %221 = vmatpush1.bf16.msra.mxu0 %v201
  %222 = vmatprep.subr.bf16.mxu0 0
  %223 = vmatpush1.bf16.msra.mxu0 %v202
  %224 = vmatprep.subr.bf16.mxu0 0
  %225 = vmatpush1.bf16.msra.mxu0 %v203
  %226 = vmatprep.subr.bf16.mxu0 0
  %227 = vmatpush1.bf16.msra.mxu0 %v204
  %228 = vmatprep.subr.bf16.mxu0 0
  %229 = vmatpush1.bf16.msra.mxu0 %v205
  %230 = vmatprep.subr.bf16.mxu0 0
  %231 = vmatpush1.bf16.msra.mxu0 0
  %232 = vmatprep.subr.bf16.mxu0 0
  %233 = vmatpush1.bf16.msra.mxu0 0
  %234 = vmatprep.subr.bf16.mxu0 0
  %235 = vmatpush1.bf16.msra.mxu0 0
  %236 = vmatprep.subr.bf16.mxu0 0
  %237 = vmatpush1.bf16.msra.mxu0 0
  %238 = vmatprep.subr.bf16.mxu0 0
  %239 = vmatpush1.bf16.msra.mxu0 0
  %240 = vmatprep.subr.bf16.mxu0 0
  %241 = vmatpush1.bf16.msra.mxu0 0
  %242 = vmatprep.subr.bf16.mxu0 0
  %243 = vmatpush1.bf16.msra.mxu0 0
  %244 = vmatprep.subr.bf16.mxu0 0
  %245 = vmatpush1.bf16.msra.mxu0 0
  %246 = vmatprep.mubr.bf16.mxu0 0
  %247 = vmatmul.mubr.bf16.gmra.mrb[0].mxu0 %v134
  %v248 = vpop.f32.mrb[0].mxu0
  %v249 = vadd.f32 %v68, %v248
  %v250 = vpop.f32.mrb[0].mxu0
  %v251 = vpop.f32.mrb[0].mxu0
  %v252 = vadd.f32 %v68, %v251
  %v253 = vpop.f32.mrb[0].mxu0
  %254 = vmatprep.mubr.bf16.mxu0 0
  %255 = vmatmul.mubr.bf16.gmra.mrb[0].mxu0 %v135
  %v256 = vpop.f32.mrb[0].mxu0
  %v257 = vadd.f32 %v68, %v256
  %v258 = vpop.f32.mrb[0].mxu0
  %v259 = vpop.f32.mrb[0].mxu0
  %v260 = vadd.f32 %v68, %v259
  %v261 = vpop.f32.mrb[0].mxu0
  %262 = vmatprep.mubr.bf16.mxu0 0
  %263 = vmatmul.mubr.bf16.gmra.mrb[0].mxu0 %v136
  %v264 = vpop.f32.mrb[0].mxu0
  %v265 = vadd.f32 %v68, %v264
  %v266 = vpop.f32.mrb[0].mxu0
  %v267 = vpop.f32.mrb[0].mxu0
  %v268 = vadd.f32 %v68, %v267
  %v269 = vpop.f32.mrb[0].mxu0
  %270 = vmatprep.mubr.bf16.mxu0 0
  %271 = vmatmul.mubr.bf16.gmra.mrb[0].mxu0 %v137
  %v272 = vpop.f32.mrb[0].mxu0
  %v273 = vadd.f32 %v68, %v272
  %v274 = vpop.f32.mrb[0].mxu0
  %v275 = vpop.f32.mrb[0].mxu0
  %v276 = vadd.f32 %v68, %v275
  %v277 = vpop.f32.mrb[0].mxu0
  %278 = vmatprep.mubr.bf16.mxu0 0
  %279 = vmatmul.mubr.bf16.gmra.mrb[0].mxu0 %v138
  %v280 = vpop.f32.mrb[0].mxu0
  %v281 = vadd.f32 %v68, %v280
  %v282 = vpop.f32.mrb[0].mxu0
  %v283 = vpop.f32.mrb[0].mxu0
  %v284 = vadd.f32 %v68, %v283
  %v285 = vpop.f32.mrb[0].mxu0
  %286 = vmatprep.mubr.bf16.mxu0 0
  %287 = vmatmul.mubr.bf16.gmra.mrb[0].mxu0 %v139
  %v288 = vpop.f32.mrb[0].mxu0
  %v289 = vadd.f32 %v68, %v288
  %v290 = vpop.f32.mrb[0].mxu0
  %v291 = vpop.f32.mrb[0].mxu0
  %v292 = vadd.f32 %v68, %v291
  %v293 = vpop.f32.mrb[0].mxu0
  %294 = vmatprep.mubr.bf16.mxu0 0
  %295 = vmatmul.mubr.bf16.gmra.mrb[0].mxu0 %v140
  %v296 = vpop.f32.mrb[0].mxu0
  %v297 = vadd.f32 %v68, %v296
  %v298 = vpop.f32.mrb[0].mxu0
  %v299 = vpop.f32.mrb[0].mxu0
  %v300 = vadd.f32 %v68, %v299
  %v301 = vpop.f32.mrb[0].mxu0
  %302 = vmatprep.mubr.bf16.mxu0 0
  %303 = vmatmul.mubr.bf16.gmra.mrb[0].mxu0 %v141
  %v304 = vpop.f32.mrb[0].mxu0
  %v305 = vadd.f32 %v68, %v304
  %v306 = vpop.f32.mrb[0].mxu0
  %v307 = vpop.f32.mrb[0].mxu0
  %v308 = vadd.f32 %v68, %v307
  %v309 = vpop.f32.mrb[0].mxu0
  %310 = vmatprep.mubr.bf16.mxu0 0
  %311 = vmatmul.mubr.bf16.gmra.mrb[0].mxu0 %v142
  %v312 = vpop.f32.mrb[0].mxu0
  %v313 = vadd.f32 %v68, %v312
  %v314 = vpop.f32.mrb[0].mxu0
  %v315 = vpop.f32.mrb[0].mxu0
  %v316 = vadd.f32 %v68, %v315
  %v317 = vpop.f32.mrb[0].mxu0
  %318 = vmatprep.mubr.bf16.mxu0 0
  %319 = vmatmul.mubr.bf16.gmra.mrb[0].mxu0 %v143
  %v320 = vpop.f32.mrb[0].mxu0
  %v321 = vadd.f32 %v68, %v320
  %v322 = vpop.f32.mrb[0].mxu0
  %v323 = vpop.f32.mrb[0].mxu0
  %v324 = vadd.f32 %v68, %v323
  %v325 = vpop.f32.mrb[0].mxu0
  %326 = vmatprep.mubr.bf16.mxu0 0
  %327 = vmatmul.mubr.bf16.gmra.mrb[0].mxu0 %v144
  %v328 = vpop.f32.mrb[0].mxu0
  %v329 = vadd.f32 %v68, %v328
  %v330 = vpop.f32.mrb[0].mxu0
  %v331 = vpop.f32.mrb[0].mxu0
  %v332 = vadd.f32 %v68, %v331
  %v333 = vpop.f32.mrb[0].mxu0
  %334 = vmatprep.mubr.bf16.mxu0 0
  %335 = vmatmul.mubr.bf16.gmra.mrb[0].mxu0 %v145
  %v336 = vpop.f32.mrb[0].mxu0
  %v337 = vadd.f32 %v68, %v336
  %v338 = vpop.f32.mrb[0].mxu0
  %v339 = vpop.f32.mrb[0].mxu0
  %v340 = vadd.f32 %v68, %v339
  %v341 = vpop.f32.mrb[0].mxu0
  %342 = vmatprep.mubr.bf16.mxu0 0
  %343 = vmatmul.mubr.bf16.gmra.mrb[0].mxu0 %v146
  %v344 = vpop.f32.mrb[0].mxu0
  %v345 = vadd.f32 %v68, %v344
  %v346 = vpop.f32.mrb[0].mxu0
  %v347 = vpop.f32.mrb[0].mxu0
  %v348 = vadd.f32 %v68, %v347
  %v349 = vpop.f32.mrb[0].mxu0
  %350 = vmatprep.mubr.bf16.mxu0 0
  %351 = vmatmul.mubr.bf16.gmra.mrb[0].mxu0 %v147
  %v352 = vpop.f32.mrb[0].mxu0
  %v353 = vadd.f32 %v68, %v352
  %v354 = vpop.f32.mrb[0].mxu0
  %v355 = vpop.f32.mrb[0].mxu0
  %v356 = vadd.f32 %v68, %v355
  %v357 = vpop.f32.mrb[0].mxu0
  %358 = vmatprep.mubr.bf16.mxu0 0
  %359 = vmatmul.mubr.bf16.gmra.mrb[0].mxu0 %v148
  %v360 = vpop.f32.mrb[0].mxu0
  %v361 = vadd.f32 %v68, %v360
  %v362 = vpop.f32.mrb[0].mxu0
  %v363 = vpop.f32.mrb[0].mxu0
  %v364 = vadd.f32 %v68, %v363
  %v365 = vpop.f32.mrb[0].mxu0
  %366 = vmatprep.mubr.bf16.mxu0 0
  %367 = vmatmul.mubr.bf16.gmra.mrb[0].mxu0 %v149
  %v368 = vpop.f32.mrb[0].mxu0
  %v369 = vadd.f32 %v68, %v368
  %v370 = vpop.f32.mrb[0].mxu0
  %v371 = vpop.f32.mrb[0].mxu0
  %v372 = vadd.f32 %v68, %v371
  %v373 = vpop.f32.mrb[0].mxu0
  %374 = vdwg.mxu0
  %375 = vst [vmem:[%s3] sm:$0xff] %v249
  %376 = vst [vmem:[%s3 + $0x8] sm:$0xff] %v252
  %377 = vst [vmem:[%s3 + $0x10] sm:$0xff] %v257
  %378 = vst [vmem:[%s3 + $0x18] sm:$0xff] %v260
  %379 = vst [vmem:[%s3 + $0x20] sm:$0xff] %v265
  %380 = vst [vmem:[%s3 + $0x28] sm:$0xff] %v268
  %381 = vst [vmem:[%s3 + $0x30] sm:$0xff] %v273
  %382 = vst [vmem:[%s3 + $0x38] sm:$0xff] %v276
  %383 = vst [vmem:[%s3 + $0x40] sm:$0xff] %v281
  %384 = vst [vmem:[%s3 + $0x48] sm:$0xff] %v284
  %385 = vst [vmem:[%s3 + $0x50] sm:$0xff] %v289
  %386 = vst [vmem:[%s3 + $0x58] sm:$0xff] %v292
  %387 = vst [vmem:[%s3 + $0x60] sm:$0xff] %v297
  %388 = vst [vmem:[%s3 + $0x68] sm:$0xff] %v300
  %389 = vst [vmem:[%s3 + $0x70] sm:$0xff] %v305
  %390 = vst [vmem:[%s3 + $0x78] sm:$0xff] %v308
  %391 = vst [vmem:[%s3 + $0x80] sm:$0xff] %v313
  %392 = vst [vmem:[%s3 + $0x88] sm:$0xff] %v316
  %393 = vst [vmem:[%s3 + $0x90] sm:$0xff] %v321
  %394 = vst [vmem:[%s3 + $0x98] sm:$0xff] %v324
  %395 = vst [vmem:[%s3 + $0xa0] sm:$0xff] %v329
  %396 = vst [vmem:[%s3 + $0xa8] sm:$0xff] %v332
  %397 = vst [vmem:[%s3 + $0xb0] sm:$0xff] %v337
  %398 = vst [vmem:[%s3 + $0xb8] sm:$0xff] %v340
  %399 = vst [vmem:[%s3 + $0xc0] sm:$0xff] %v345
  %400 = vst [vmem:[%s3 + $0xc8] sm:$0xff] %v348
  %401 = vst [vmem:[%s3 + $0xd0] sm:$0xff] %v353
  %402 = vst [vmem:[%s3 + $0xd8] sm:$0xff] %v356
  %403 = vst [vmem:[%s3 + $0xe0] sm:$0xff] %v361
  %404 = vst [vmem:[%s3 + $0xe8] sm:$0xff] %v364
  %405 = vst [vmem:[%s3 + $0xf0] sm:$0xff] %v369
  %406 = vst [vmem:[%s3 + $0xf8] sm:$0xff] %v372
  // Predicated region
  $region14: #{nlg_forward.3} parent=0 // pred_check
    _
  $region15: #{nlg_forward.3} parent=0 // pred_check_branch
    %408 = sbr.rel (0) target = $region17
  $region16: #{nlg_forward.3} parent=0 // pred_region
    _
  $region17: #{nlg_forward.3} parent=0 // pred_fallthru
    _
  // Predicated region
  $region18: #{nlg_forward.3} parent=0 // pred_check
    _
  $region19: #{nlg_forward.3} parent=0 // pred_check_branch
    %410 = sbr.rel (0) target = $region21
  $region20: #{nlg_forward.3} parent=0 // pred_region
    _
  $region21: #{nlg_forward.3} parent=0 // pred_fallthru
    _

// kernel: nlg_forward.2
$region0: #{nlg_forward.2}
  #allocation0 [shape = 'u32[]', space=smem, size = 0x4, offset = 0x4, fixed_abs, tag = 'smem constant byte address 0x4 - core index']
  #allocation1 [shape = 'u32[144,128]{1,0:T(1,128)}', space=vmem, size = 0x12000, scoped, tag = 'internal scratch']
  %s0 = inlined_call_operand.vmem [shape: bf16[256,128], index: 0, kind: input, shape index: {}]
  %s1 = inlined_call_operand.vmem [shape: bf16[256,128], index: 1, kind: input, shape index: {}]
  %s2 = inlined_call_operand.vmem [shape: bf16[128,128], index: 2, kind: input, shape index: {}]
  %s3 = inlined_call_operand.vmem [shape: f32[1,128], index: 3, kind: input, shape index: {}]
  %s4 = inlined_call_operand.vmem [shape: bf16[128,384], index: 4, kind: input, shape index: {}]
  %s5 = inlined_call_operand.vmem [shape: f32[1,384], index: 5, kind: input, shape index: {}]
  %s6 = inlined_call_operand.vmem [shape: bf16[128,384], index: 6, kind: input, shape index: {}]
  %s7 = inlined_call_operand.vmem [shape: f32[1,128], index: 7, kind: input, shape index: {}]
  %s8 = inlined_call_operand.vmem [shape: bf16[256,128], index: 8, kind: output, shape index: {}]
  %s9 = sld [smem:[#allocation0]]
  $region42: #{nlg_forward.2} parent=0
    _
  %s11 = ssub.s32 1, %s9
  %s12 = scalar_select 0, %s11, %s9
  // Predicated region
  $region2: #{nlg_forward.2} parent=0 // pred_check
    _
  $region3: #{nlg_forward.2} parent=0 // pred_check_branch
    %14 = sbr.rel (0) target = $region5
  $region4: #{nlg_forward.2} parent=0 // pred_region
    _
  $region5: #{nlg_forward.2} parent=0 // pred_fallthru
    _
  // Predicated region
  $region6: #{nlg_forward.2} parent=0 // pred_check
    _
  $region7: #{nlg_forward.2} parent=0 // pred_check_branch
    %16 = sbr.rel (0) target = $region9
  $region8: #{nlg_forward.2} parent=0 // pred_region
    _
  $region9: #{nlg_forward.2} parent=0 // pred_fallthru
    _
  // Predicated region
  $region10: #{nlg_forward.2} parent=0 // pred_check
    _
  $region11: #{nlg_forward.2} parent=0 // pred_check_branch
    %18 = sbr.rel (0) target = $region13
  $region12: #{nlg_forward.2} parent=0 // pred_region
    _
  $region13: #{nlg_forward.2} parent=0 // pred_fallthru
    _
  // Predicated region
  $region14: #{nlg_forward.2} parent=0 // pred_check
    _
  $region15: #{nlg_forward.2} parent=0 // pred_check_branch
    %20 = sbr.rel (0) target = $region17
  $region16: #{nlg_forward.2} parent=0 // pred_region
    _
  $region17: #{nlg_forward.2} parent=0 // pred_fallthru
    _
  // Predicated region
  $region18: #{nlg_forward.2} parent=0 // pred_check
    _
  $region19: #{nlg_forward.2} parent=0 // pred_check_branch
    %22 = sbr.rel (0) target = $region21
  $region20: #{nlg_forward.2} parent=0 // pred_region
    _
  $region21: #{nlg_forward.2} parent=0 // pred_fallthru
    _
  // Predicated region
  $region22: #{nlg_forward.2} parent=0 // pred_check
    _
  $region23: #{nlg_forward.2} parent=0 // pred_check_branch
    %24 = sbr.rel (0) target = $region25
  $region24: #{nlg_forward.2} parent=0 // pred_region
    _
  $region25: #{nlg_forward.2} parent=0 // pred_fallthru
    _
  // Predicated region
  $region26: #{nlg_forward.2} parent=0 // pred_check
    _
  $region27: #{nlg_forward.2} parent=0 // pred_check_branch
    %26 = sbr.rel (0) target = $region29
  $region28: #{nlg_forward.2} parent=0 // pred_region
    _
  $region29: #{nlg_forward.2} parent=0 // pred_fallthru
    _
  // Predicated region
  $region30: #{nlg_forward.2} parent=0 // pred_check
    _
  $region31: #{nlg_forward.2} parent=0 // pred_check_branch
    %28 = sbr.rel (0) target = $region33
  $region32: #{nlg_forward.2} parent=0 // pred_region
    _
  $region33: #{nlg_forward.2} parent=0 // pred_fallthru
    _
  %v30 = vld [vmem:[%s0] sm:$0xf]
  %v31 = vld [vmem:[%s0 + $0x4] sm:$0xf]
  %v32 = vld [vmem:[%s0 + $0x8] sm:$0xf]
  %v33 = vld [vmem:[%s0 + $0xc] sm:$0xf]
  %v34 = vld [vmem:[%s0 + $0x10] sm:$0xf]
  %v35 = vld [vmem:[%s0 + $0x14] sm:$0xf]
  %v36 = vld [vmem:[%s0 + $0x18] sm:$0xf]
  %v37 = vld [vmem:[%s0 + $0x1c] sm:$0xf]
  %v38 = vld [vmem:[%s0 + $0x20] sm:$0xf]
  %v39 = vld [vmem:[%s0 + $0x24] sm:$0xf]
  %v40 = vld [vmem:[%s0 + $0x28] sm:$0xf]
  %v41 = vld [vmem:[%s0 + $0x2c] sm:$0xf]
  %v42 = vld [vmem:[%s0 + $0x30] sm:$0xf]
  %v43 = vld [vmem:[%s0 + $0x34] sm:$0xf]
  %v44 = vld [vmem:[%s0 + $0x38] sm:$0xf]
  %v45 = vld [vmem:[%s0 + $0x3c] sm:$0xf]
  %v46 = vld [vmem:[%s0 + $0x40] sm:$0xf]
  %v47 = vld [vmem:[%s0 + $0x44] sm:$0xf]
  %v48 = vld [vmem:[%s0 + $0x48] sm:$0xf]
  %v49 = vld [vmem:[%s0 + $0x4c] sm:$0xf]
  %v50 = vld [vmem:[%s0 + $0x50] sm:$0xf]
  %v51 = vld [vmem:[%s0 + $0x54] sm:$0xf]
  %v52 = vld [vmem:[%s0 + $0x58] sm:$0xf]
  %v53 = vld [vmem:[%s0 + $0x5c] sm:$0xf]
  %v54 = vld [vmem:[%s0 + $0x60] sm:$0xf]
  %v55 = vld [vmem:[%s0 + $0x64] sm:$0xf]
  %v56 = vld [vmem:[%s0 + $0x68] sm:$0xf]
  %v57 = vld [vmem:[%s0 + $0x6c] sm:$0xf]
  %v58 = vld [vmem:[%s0 + $0x70] sm:$0xf]
  %v59 = vld [vmem:[%s0 + $0x74] sm:$0xf]
  %v60 = vld [vmem:[%s0 + $0x78] sm:$0xf]
  %v61 = vld [vmem:[%s0 + $0x7c] sm:$0xf]
  %v62 = vld [vmem:[%s2] sm:$0xf]
  %v63 = vld [vmem:[%s2 + $0x4] sm:$0xf]
  %v64 = vld [vmem:[%s2 + $0x8] sm:$0xf]
  %v65 = vld [vmem:[%s2 + $0xc] sm:$0xf]
  %v66 = vld [vmem:[%s2 + $0x10] sm:$0xf]
  %v67 = vld [vmem:[%s2 + $0x14] sm:$0xf]
  %v68 = vld [vmem:[%s2 + $0x18] sm:$0xf]
  %v69 = vld [vmem:[%s2 + $0x1c] sm:$0xf]
  %v70 = vld [vmem:[%s2 + $0x20] sm:$0xf]
  %v71 = vld [vmem:[%s2 + $0x24] sm:$0xf]
  %v72 = vld [vmem:[%s2 + $0x28] sm:$0xf]
  %v73 = vld [vmem:[%s2 + $0x2c] sm:$0xf]
  %v74 = vld [vmem:[%s2 + $0x30] sm:$0xf]
  %v75 = vld [vmem:[%s2 + $0x34] sm:$0xf]
  %v76 = vld [vmem:[%s2 + $0x38] sm:$0xf]
  %v77 = vld [vmem:[%s2 + $0x3c] sm:$0xf]
  %v110 = vunpack.c.l.b16 %v30
  %v111 = vunpack.c.l.b16 %v31
  %v112 = vunpack.c.l.b16 %v32
  %v113 = vunpack.c.l.b16 %v33
  %v114 = vunpack.c.l.b16 %v34
  %v115 = vunpack.c.l.b16 %v35
  %v116 = vunpack.c.l.b16 %v36
  %v117 = vunpack.c.l.b16 %v37
  %v118 = vunpack.c.l.b16 %v38
  %v119 = vunpack.c.l.b16 %v39
  %v120 = vunpack.c.l.b16 %v40
  %v121 = vunpack.c.l.b16 %v41
  %v122 = vunpack.c.l.b16 %v42
  %v123 = vunpack.c.l.b16 %v43
  %v124 = vunpack.c.l.b16 %v44
  %v125 = vunpack.c.l.b16 %v45
  %v126 = vunpack.c.l.b16 %v46
  %v127 = vunpack.c.l.b16 %v47
  %v128 = vunpack.c.l.b16 %v48
  %v129 = vunpack.c.l.b16 %v49
  %v130 = vunpack.c.l.b16 %v50
  %v131 = vunpack.c.l.b16 %v51
  %v132 = vunpack.c.l.b16 %v52
  %v133 = vunpack.c.l.b16 %v53
  %v134 = vunpack.c.l.b16 %v54
  %v135 = vunpack.c.l.b16 %v55
  %v136 = vunpack.c.l.b16 %v56
  %v137 = vunpack.c.l.b16 %v57
  %v138 = vunpack.c.l.b16 %v58
  %v139 = vunpack.c.l.b16 %v59
  %v140 = vunpack.c.l.b16 %v60
  %v141 = vunpack.c.l.b16 %v61
  %v142 = vpack.c.b16 %v111, %v110
  %v143 = vpack.c.b16 %v113, %v112
  %v144 = vpack.c.b16 %v115, %v114
  %v145 = vpack.c.b16 %v117, %v116
  %v146 = vpack.c.b16 %v119, %v118
  %v147 = vpack.c.b16 %v121, %v120
  %v148 = vpack.c.b16 %v123, %v122
  %v149 = vpack.c.b16 %v125, %v124
  %v150 = vpack.c.b16 %v127, %v126
  %v151 = vpack.c.b16 %v129, %v128
  %v152 = vpack.c.b16 %v131, %v130
  %v153 = vpack.c.b16 %v133, %v132
  %v154 = vpack.c.b16 %v135, %v134
  %v155 = vpack.c.b16 %v137, %v136
  %v156 = vpack.c.b16 %v139, %v138
  %v157 = vpack.c.b16 %v141, %v140
  %v190 = vunpack.c.l.b16 %v62
  %v191 = vunpack.c.l.b16 %v63
  %v192 = vunpack.c.l.b16 %v64
  %v193 = vunpack.c.l.b16 %v65
  %v194 = vunpack.c.l.b16 %v66
  %v195 = vunpack.c.l.b16 %v67
  %v196 = vunpack.c.l.b16 %v68
  %v197 = vunpack.c.l.b16 %v69
  %v198 = vunpack.c.l.b16 %v70
  %v199 = vunpack.c.l.b16 %v71
  %v200 = vunpack.c.l.b16 %v72
  %v201 = vunpack.c.l.b16 %v73
  %v202 = vunpack.c.l.b16 %v74
  %v203 = vunpack.c.l.b16 %v75
  %v204 = vunpack.c.l.b16 %v76
  %v205 = vunpack.c.l.b16 %v77
  %v206 = vpack.c.b16 %v191, %v190
  %v207 = vpack.c.b16 %v193, %v192
  %v208 = vpack.c.b16 %v195, %v194
  %v209 = vpack.c.b16 %v197, %v196
  %v210 = vpack.c.b16 %v199, %v198
  %v211 = vpack.c.b16 %v201, %v200
  %v212 = vpack.c.b16 %v203, %v202
  %v213 = vpack.c.b16 %v205, %v204
  %222 = vmatprep.subr.bf16.mxu0 0
  %223 = vmatpush1.bf16.msra.mxu0 %v206
  %224 = vmatprep.subr.bf16.mxu0 0
  %225 = vmatpush1.bf16.msra.mxu0 %v207
  %226 = vmatprep.subr.bf16.mxu0 0
  %227 = vmatpush1.bf16.msra.mxu0 %v208
  %228 = vmatprep.subr.bf16.mxu0 0
  %229 = vmatpush1.bf16.msra.mxu0 %v209
  %230 = vmatprep.subr.bf16.mxu0 0
  %231 = vmatpush1.bf16.msra.mxu0 %v210
  %232 = vmatprep.subr.bf16.mxu0 0
  %233 = vmatpush1.bf16.msra.mxu0 %v211
  %234 = vmatprep.subr.bf16.mxu0 0
  %235 = vmatpush1.bf16.msra.mxu0 %v212
  %236 = vmatprep.subr.bf16.mxu0 0
  %237 = vmatpush1.bf16.msra.mxu0 %v213
  %238 = vmatprep.subr.bf16.mxu0 0
  %239 = vmatpush1.bf16.msra.mxu0 0
  %240 = vmatprep.subr.bf16.mxu0 0
  %241 = vmatpush1.bf16.msra.mxu0 0
  %242 = vmatprep.subr.bf16.mxu0 0
  %243 = vmatpush1.bf16.msra.mxu0 0
  %244 = vmatprep.subr.bf16.mxu0 0
  %245 = vmatpush1.bf16.msra.mxu0 0
  %246 = vmatprep.subr.bf16.mxu0 0
  %247 = vmatpush1.bf16.msra.mxu0 0
  %248 = vmatprep.subr.bf16.mxu0 0
  %249 = vmatpush1.bf16.msra.mxu0 0
  %250 = vmatprep.subr.bf16.mxu0 0
  %251 = vmatpush1.bf16.msra.mxu0 0
  %252 = vmatprep.subr.bf16.mxu0 0
  %253 = vmatpush1.bf16.msra.mxu0 0
  %254 = vmatprep.mubr.bf16.mxu0 0
  %255 = vmatmul.mubr.bf16.gmra.mrb[0].mxu0 %v142
  %v256 = vpop.f32.mrb[0].mxu0
  %v257 = vadd.f32 0.0, %v256
  %v258 = vpop.f32.mrb[0].mxu0
  %v259 = vpop.f32.mrb[0].mxu0
  %v260 = vadd.f32 0.0, %v259
  %v261 = vpop.f32.mrb[0].mxu0
  %262 = vmatprep.mubr.bf16.mxu0 0
  %263 = vmatmul.mubr.bf16.gmra.mrb[0].mxu0 %v143
  %v264 = vpop.f32.mrb[0].mxu0
  %v265 = vadd.f32 0.0, %v264
  %v266 = vpop.f32.mrb[0].mxu0
  %v267 = vpop.f32.mrb[0].mxu0
  %v268 = vadd.f32 0.0, %v267
  %v269 = vpop.f32.mrb[0].mxu0
  %270 = vmatprep.mubr.bf16.mxu0 0
  %271 = vmatmul.mubr.bf16.gmra.mrb[0].mxu0 %v144
  %v272 = vpop.f32.mrb[0].mxu0
  %v273 = vadd.f32 0.0, %v272
  %v274 = vpop.f32.mrb[0].mxu0
  %v275 = vpop.f32.mrb[0].mxu0
  %v276 = vadd.f32 0.0, %v275
  %v277 = vpop.f32.mrb[0].mxu0
  %278 = vmatprep.mubr.bf16.mxu0 0
  %279 = vmatmul.mubr.bf16.gmra.mrb[0].mxu0 %v145
  %v280 = vpop.f32.mrb[0].mxu0
  %v281 = vadd.f32 0.0, %v280
  %v282 = vpop.f32.mrb[0].mxu0
  %v283 = vpop.f32.mrb[0].mxu0
  %v284 = vadd.f32 0.0, %v283
  %v285 = vpop.f32.mrb[0].mxu0
  %286 = vmatprep.mubr.bf16.mxu0 0
  %287 = vmatmul.mubr.bf16.gmra.mrb[0].mxu0 %v146
  %v288 = vpop.f32.mrb[0].mxu0
  %v289 = vadd.f32 0.0, %v288
  %v290 = vpop.f32.mrb[0].mxu0
  %v291 = vpop.f32.mrb[0].mxu0
  %v292 = vadd.f32 0.0, %v291
  %v293 = vpop.f32.mrb[0].mxu0
  %294 = vmatprep.mubr.bf16.mxu0 0
  %295 = vmatmul.mubr.bf16.gmra.mrb[0].mxu0 %v147
  %v296 = vpop.f32.mrb[0].mxu0
  %v297 = vadd.f32 0.0, %v296
  %v298 = vpop.f32.mrb[0].mxu0
  %v299 = vpop.f32.mrb[0].mxu0
  %v300 = vadd.f32 0.0, %v299
  %v301 = vpop.f32.mrb[0].mxu0
  %302 = vmatprep.mubr.bf16.mxu0 0
  %303 = vmatmul.mubr.bf16.gmra.mrb[0].mxu0 %v148
  %v304 = vpop.f32.mrb[0].mxu0
  %v305 = vadd.f32 0.0, %v304
  %v306 = vpop.f32.mrb[0].mxu0
  %v307 = vpop.f32.mrb[0].mxu0
  %v308 = vadd.f32 0.0, %v307
  %v309 = vpop.f32.mrb[0].mxu0
  %310 = vmatprep.mubr.bf16.mxu0 0
  %311 = vmatmul.mubr.bf16.gmra.mrb[0].mxu0 %v149
  %v312 = vpop.f32.mrb[0].mxu0
  %v313 = vadd.f32 0.0, %v312
  %v314 = vpop.f32.mrb[0].mxu0
  %v315 = vpop.f32.mrb[0].mxu0
  %v316 = vadd.f32 0.0, %v315
  %v317 = vpop.f32.mrb[0].mxu0
  %318 = vmatprep.mubr.bf16.mxu0 0
  %319 = vmatmul.mubr.bf16.gmra.mrb[0].mxu0 %v150
  %v320 = vpop.f32.mrb[0].mxu0
  %v321 = vadd.f32 0.0, %v320
  %v322 = vpop.f32.mrb[0].mxu0
  %v323 = vpop.f32.mrb[0].mxu0
  %v324 = vadd.f32 0.0, %v323
  %v325 = vpop.f32.mrb[0].mxu0
  %326 = vmatprep.mubr.bf16.mxu0 0
  %327 = vmatmul.mubr.bf16.gmra.mrb[0].mxu0 %v151
  %v328 = vpop.f32.mrb[0].mxu0
  %v329 = vadd.f32 0.0, %v328
  %v330 = vpop.f32.mrb[0].mxu0
  %v331 = vpop.f32.mrb[0].mxu0
  %v332 = vadd.f32 0.0, %v331
  %v333 = vpop.f32.mrb[0].mxu0
  %334 = vmatprep.mubr.bf16.mxu0 0
  %335 = vmatmul.mubr.bf16.gmra.mrb[0].mxu0 %v152
  %v336 = vpop.f32.mrb[0].mxu0
  %v337 = vadd.f32 0.0, %v336
  %v338 = vpop.f32.mrb[0].mxu0
  %v339 = vpop.f32.mrb[0].mxu0
  %v340 = vadd.f32 0.0, %v339
  %v341 = vpop.f32.mrb[0].mxu0
  %342 = vmatprep.mubr.bf16.mxu0 0
  %343 = vmatmul.mubr.bf16.gmra.mrb[0].mxu0 %v153
  %v344 = vpop.f32.mrb[0].mxu0
  %v345 = vadd.f32 0.0, %v344
  %v346 = vpop.f32.mrb[0].mxu0
  %v347 = vpop.f32.mrb[0].mxu0
  %v348 = vadd.f32 0.0, %v347
  %v349 = vpop.f32.mrb[0].mxu0
  %350 = vmatprep.mubr.bf16.mxu0 0
  %351 = vmatmul.mubr.bf16.gmra.mrb[0].mxu0 %v154
  %v352 = vpop.f32.mrb[0].mxu0
  %v353 = vadd.f32 0.0, %v352
  %v354 = vpop.f32.mrb[0].mxu0
  %v355 = vpop.f32.mrb[0].mxu0
  %v356 = vadd.f32 0.0, %v355
  %v357 = vpop.f32.mrb[0].mxu0
  %358 = vmatprep.mubr.bf16.mxu0 0
  %359 = vmatmul.mubr.bf16.gmra.mrb[0].mxu0 %v155
  %v360 = vpop.f32.mrb[0].mxu0
  %v361 = vadd.f32 0.0, %v360
  %v362 = vpop.f32.mrb[0].mxu0
  %v363 = vpop.f32.mrb[0].mxu0
  %v364 = vadd.f32 0.0, %v363
  %v365 = vpop.f32.mrb[0].mxu0
  %366 = vmatprep.mubr.bf16.mxu0 0
  %367 = vmatmul.mubr.bf16.gmra.mrb[0].mxu0 %v156
  %v368 = vpop.f32.mrb[0].mxu0
  %v369 = vadd.f32 0.0, %v368
  %v370 = vpop.f32.mrb[0].mxu0
  %v371 = vpop.f32.mrb[0].mxu0
  %v372 = vadd.f32 0.0, %v371
  %v373 = vpop.f32.mrb[0].mxu0
  %374 = vmatprep.mubr.bf16.mxu0 0
  %375 = vmatmul.mubr.bf16.gmra.mrb[0].mxu0 %v157
  %v376 = vpop.f32.mrb[0].mxu0
  %v377 = vadd.f32 0.0, %v376
  %v378 = vpop.f32.mrb[0].mxu0
  %v379 = vpop.f32.mrb[0].mxu0
  %v380 = vadd.f32 0.0, %v379
  %v381 = vpop.f32.mrb[0].mxu0
  %382 = vdwg.mxu0
  %v383 = vmax.f32 %v257, %v273
  %v384 = vmax.f32 %v260, %v276
  %v385 = vmax.f32 %v265, %v281
  %v386 = vmax.f32 %v268, %v284
  %v387 = vmax.f32 %v383, %v289
  %v388 = vmax.f32 %v384, %v292
  %v389 = vmax.f32 %v385, %v297
  %v390 = vmax.f32 %v386, %v300
  %v391 = vmax.f32 %v387, %v305
  %v392 = vmax.f32 %v388, %v308
  %v393 = vmax.f32 %v389, %v313
  %v394 = vmax.f32 %v390, %v316
  %v395 = vmax.f32 %v391, %v321
  %v396 = vmax.f32 %v392, %v324
  %v397 = vmax.f32 %v393, %v329
  %v398 = vmax.f32 %v394, %v332
  %v399 = vmax.f32 %v395, %v337
  %v400 = vmax.f32 %v396, %v340
  %v401 = vmax.f32 %v397, %v345
  %v402 = vmax.f32 %v398, %v348
  %v403 = vmax.f32 %v399, %v353
  %v404 = vmax.f32 %v400, %v356
  %v405 = vmax.f32 %v401, %v361
  %v406 = vmax.f32 %v402, %v364
  %v407 = vmax.f32 %v403, %v369
  %v408 = vmax.f32 %v404, %v372
  %v409 = vmax.f32 %v405, %v377
  %v410 = vmax.f32 %v406, %v380
  %v411 = vld [vmem:[%s3] sm:$0x1]
  %v413 = vlaneseq
  %v414 = vshrl.u32 %v413, 7
  %v415 = vsub.s32 0, %v414
  %v416 = vrot.slane %v411, %v415
  %v418 = vadd.f32 %v407, %v416
  %v419 = vadd.f32 %v408, %v416
  %v420 = vadd.f32 %v409, %v416
  %v421 = vadd.f32 %v410, %v416
  %v422 = vld [vmem:[%s1] sm:$0xf]
  %v423 = vld [vmem:[%s1 + $0x4] sm:$0xf]
  %v424 = vld [vmem:[%s1 + $0x8] sm:$0xf]
  %v425 = vld [vmem:[%s1 + $0xc] sm:$0xf]
  %v426 = vld [vmem:[%s1 + $0x10] sm:$0xf]
  %v427 = vld [vmem:[%s1 + $0x14] sm:$0xf]
  %v428 = vld [vmem:[%s1 + $0x18] sm:$0xf]
  %v429 = vld [vmem:[%s1 + $0x1c] sm:$0xf]
  %v430 = vld [vmem:[%s1 + $0x20] sm:$0xf]
  %v431 = vld [vmem:[%s1 + $0x24] sm:$0xf]
  %v432 = vld [vmem:[%s1 + $0x28] sm:$0xf]
  %v433 = vld [vmem:[%s1 + $0x2c] sm:$0xf]
  %v434 = vld [vmem:[%s1 + $0x30] sm:$0xf]
  %v435 = vld [vmem:[%s1 + $0x34] sm:$0xf]
  %v436 = vld [vmem:[%s1 + $0x38] sm:$0xf]
  %v437 = vld [vmem:[%s1 + $0x3c] sm:$0xf]
  %v438 = vld [vmem:[%s1 + $0x40] sm:$0xf]
  %v439 = vld [vmem:[%s1 + $0x44] sm:$0xf]
  %v440 = vld [vmem:[%s1 + $0x48] sm:$0xf]
  %v441 = vld [vmem:[%s1 + $0x4c] sm:$0xf]
  %v442 = vld [vmem:[%s1 + $0x50] sm:$0xf]
  %v443 = vld [vmem:[%s1 + $0x54] sm:$0xf]
  %v444 = vld [vmem:[%s1 + $0x58] sm:$0xf]
  %v445 = vld [vmem:[%s1 + $0x5c] sm:$0xf]
  %v446 = vld [vmem:[%s1 + $0x60] sm:$0xf]
  %v447 = vld [vmem:[%s1 + $0x64] sm:$0xf]
  %v448 = vld [vmem:[%s1 + $0x68] sm:$0xf]
  %v449 = vld [vmem:[%s1 + $0x6c] sm:$0xf]
  %v450 = vld [vmem:[%s1 + $0x70] sm:$0xf]
  %v451 = vld [vmem:[%s1 + $0x74] sm:$0xf]
  %v452 = vld [vmem:[%s1 + $0x78] sm:$0xf]
  %v453 = vld [vmem:[%s1 + $0x7c] sm:$0xf]
  %v454 = vld [vmem:[%s4] sm:$0xff]
  %v455 = vld [vmem:[%s4 + $0x8] sm:$0xf]
  %v456 = vld [vmem:[%s4 + $0xc] sm:$0xff]
  %v457 = vld [vmem:[%s4 + $0x14] sm:$0xf]
  %v458 = vld [vmem:[%s4 + $0x18] sm:$0xff]
  %v459 = vld [vmem:[%s4 + $0x20] sm:$0xf]
  %v460 = vld [vmem:[%s4 + $0x24] sm:$0xff]
  %v461 = vld [vmem:[%s4 + $0x2c] sm:$0xf]
  %v462 = vld [vmem:[%s4 + $0x30] sm:$0xff]
  %v463 = vld [vmem:[%s4 + $0x38] sm:$0xf]
  %v464 = vld [vmem:[%s4 + $0x3c] sm:$0xff]
  %v465 = vld [vmem:[%s4 + $0x44] sm:$0xf]
  %v466 = vld [vmem:[%s4 + $0x48] sm:$0xff]
  %v467 = vld [vmem:[%s4 + $0x50] sm:$0xf]
  %v468 = vld [vmem:[%s4 + $0x54] sm:$0xff]
  %v469 = vld [vmem:[%s4 + $0x5c] sm:$0xf]
  %v470 = vld [vmem:[%s4 + $0x60] sm:$0xff]
  %v471 = vld [vmem:[%s4 + $0x68] sm:$0xf]
  %v472 = vld [vmem:[%s4 + $0x6c] sm:$0xff]
  %v473 = vld [vmem:[%s4 + $0x74] sm:$0xf]
  %v474 = vld [vmem:[%s4 + $0x78] sm:$0xff]
  %v475 = vld [vmem:[%s4 + $0x80] sm:$0xf]
  %v476 = vld [vmem:[%s4 + $0x84] sm:$0xff]
  %v477 = vld [vmem:[%s4 + $0x8c] sm:$0xf]
  %v478 = vld [vmem:[%s4 + $0x90] sm:$0xff]
  %v479 = vld [vmem:[%s4 + $0x98] sm:$0xf]
  %v480 = vld [vmem:[%s4 + $0x9c] sm:$0xff]
  %v481 = vld [vmem:[%s4 + $0xa4] sm:$0xf]
  %v482 = vld [vmem:[%s4 + $0xa8] sm:$0xff]
  %v483 = vld [vmem:[%s4 + $0xb0] sm:$0xf]
  %v484 = vld [vmem:[%s4 + $0xb4] sm:$0xff]
  %v485 = vld [vmem:[%s4 + $0xbc] sm:$0xf]
  %v486 = vld [vmem:[%s5] sm:$0x7]
  %v488 = vlaneseq
  %v489 = vshrl.u32 %v488, 7
  %v490 = vsub.s32 0, %v489
  %v491 = vrot.slane %v486, %v490
  %v492 = vlaneseq
  %v493 = vshrl.u32 %v492, 7
  %v494 = vsub.s32 1, %v493
  %v495 = vrot.slane %v486, %v494
  %v496 = vlaneseq
  %v497 = vshrl.u32 %v496, 7
  %v498 = vsub.s32 2, %v497
  %v499 = vrot.slane %v486, %v498
  %v535 = vunpack.c.l.b16 %v422
  %v536 = vunpack.c.l.b16 %v423
  %v537 = vunpack.c.l.b16 %v424
  %v538 = vunpack.c.l.b16 %v425
  %v539 = vunpack.c.l.b16 %v426
  %v540 = vunpack.c.l.b16 %v427
  %v541 = vunpack.c.l.b16 %v428
  %v542 = vunpack.c.l.b16 %v429
  %v543 = vunpack.c.l.b16 %v430
  %v544 = vunpack.c.l.b16 %v431
  %v545 = vunpack.c.l.b16 %v432
  %v546 = vunpack.c.l.b16 %v433
  %v547 = vunpack.c.l.b16 %v434
  %v548 = vunpack.c.l.b16 %v435
  %v549 = vunpack.c.l.b16 %v436
  %v550 = vunpack.c.l.b16 %v437
  %v551 = vunpack.c.l.b16 %v438
  %v552 = vunpack.c.l.b16 %v439
  %v553 = vunpack.c.l.b16 %v440
  %v554 = vunpack.c.l.b16 %v441
  %v555 = vunpack.c.l.b16 %v442
  %v556 = vunpack.c.l.b16 %v443
  %v557 = vunpack.c.l.b16 %v444
  %v558 = vunpack.c.l.b16 %v445
  %v559 = vunpack.c.l.b16 %v446
  %v560 = vunpack.c.l.b16 %v447
  %v561 = vunpack.c.l.b16 %v448
  %v562 = vunpack.c.l.b16 %v449
  %v563 = vunpack.c.l.b16 %v450
  %v564 = vunpack.c.l.b16 %v451
  %v565 = vunpack.c.l.b16 %v452
  %v566 = vunpack.c.l.b16 %v453
  %v567 = vpack.c.b16 %v536, %v535
  %v568 = vpack.c.b16 %v538, %v537
  %v569 = vpack.c.b16 %v540, %v539
  %v570 = vpack.c.b16 %v542, %v541
  %v571 = vpack.c.b16 %v544, %v543
  %v572 = vpack.c.b16 %v546, %v545
  %v573 = vpack.c.b16 %v548, %v547
  %v574 = vpack.c.b16 %v550, %v549
  %v575 = vpack.c.b16 %v552, %v551
  %v576 = vpack.c.b16 %v554, %v553
  %v577 = vpack.c.b16 %v556, %v555
  %v578 = vpack.c.b16 %v558, %v557
  %v579 = vpack.c.b16 %v560, %v559
  %v580 = vpack.c.b16 %v562, %v561
  %v581 = vpack.c.b16 %v564, %v563
  %v582 = vpack.c.b16 %v566, %v565
  %v631 = vunpack.c.l.b16 %v454
  %v632 = vunpack.c.h.b16 %v454
  %v633 = vunpack.c.l.b16 %v455
  %v634 = vunpack.c.l.b16 %v456
  %v635 = vunpack.c.h.b16 %v456
  %v636 = vunpack.c.l.b16 %v457
  %v637 = vunpack.c.l.b16 %v458
  %v638 = vunpack.c.h.b16 %v458
  %v639 = vunpack.c.l.b16 %v459
  %v640 = vunpack.c.l.b16 %v460
  %v641 = vunpack.c.h.b16 %v460
  %v642 = vunpack.c.l.b16 %v461
  %v643 = vunpack.c.l.b16 %v462
  %v644 = vunpack.c.h.b16 %v462
  %v645 = vunpack.c.l.b16 %v463
  %v646 = vunpack.c.l.b16 %v464
  %v647 = vunpack.c.h.b16 %v464
  %v648 = vunpack.c.l.b16 %v465
  %v649 = vunpack.c.l.b16 %v466
  %v650 = vunpack.c.h.b16 %v466
  %v651 = vunpack.c.l.b16 %v467
  %v652 = vunpack.c.l.b16 %v468
  %v653 = vunpack.c.h.b16 %v468
  %v654 = vunpack.c.l.b16 %v469
  %v655 = vunpack.c.l.b16 %v470
  %v656 = vunpack.c.h.b16 %v470
  %v657 = vunpack.c.l.b16 %v471
  %v658 = vunpack.c.l.b16 %v472
  %v659 = vunpack.c.h.b16 %v472
  %v660 = vunpack.c.l.b16 %v473
  %v661 = vunpack.c.l.b16 %v474
  %v662 = vunpack.c.h.b16 %v474
  %v663 = vunpack.c.l.b16 %v475
  %v664 = vunpack.c.l.b16 %v476
  %v665 = vunpack.c.h.b16 %v476
  %v666 = vunpack.c.l.b16 %v477
  %v667 = vunpack.c.l.b16 %v478
  %v668 = vunpack.c.h.b16 %v478
  %v669 = vunpack.c.l.b16 %v479
  %v670 = vunpack.c.l.b16 %v480
  %v671 = vunpack.c.h.b16 %v480
  %v672 = vunpack.c.l.b16 %v481
  %v673 = vunpack.c.l.b16 %v482
  %v674 = vunpack.c.h.b16 %v482
  %v675 = vunpack.c.l.b16 %v483
  %v676 = vunpack.c.l.b16 %v484
  %v677 = vunpack.c.h.b16 %v484
  %v678 = vunpack.c.l.b16 %v485
  %v679 = vpack.c.b16 %v634, %v631
  %v680 = vpack.c.b16 %v635, %v632
  %v681 = vpack.c.b16 %v636, %v633
  %v682 = vpack.c.b16 %v640, %v637
  %v683 = vpack.c.b16 %v641, %v638
  %v684 = vpack.c.b16 %v642, %v639
  %v685 = vpack.c.b16 %v646, %v643
  %v686 = vpack.c.b16 %v647, %v644
  %v687 = vpack.c.b16 %v648, %v645
  %v688 = vpack.c.b16 %v652, %v649
  %v689 = vpack.c.b16 %v653, %v650
  %v690 = vpack.c.b16 %v654, %v651
  %v691 = vpack.c.b16 %v658, %v655
  %v692 = vpack.c.b16 %v659, %v656
  %v693 = vpack.c.b16 %v660, %v657
  %v694 = vpack.c.b16 %v664, %v661
  %v695 = vpack.c.b16 %v665, %v662
  %v696 = vpack.c.b16 %v666, %v663
  %v697 = vpack.c.b16 %v670, %v667
  %v698 = vpack.c.b16 %v671, %v668
  %v699 = vpack.c.b16 %v672, %v669
  %v700 = vpack.c.b16 %v676, %v673
  %v701 = vpack.c.b16 %v677, %v674
  %v702 = vpack.c.b16 %v678, %v675
  %727 = vmatprep.subr.bf16.mxu0 %v680
  %728 = vmatpush1.bf16.msra.mxu0 %v679
  %729 = vmatprep.subr.bf16.mxu0 %v683
  %730 = vmatpush1.bf16.msra.mxu0 %v682
  %731 = vmatprep.subr.bf16.mxu0 %v686
  %732 = vmatpush1.bf16.msra.mxu0 %v685
  %733 = vmatprep.subr.bf16.mxu0 %v689
  %734 = vmatpush1.bf16.msra.mxu0 %v688
  %735 = vmatprep.subr.bf16.mxu0 %v692
  %736 = vmatpush1.bf16.msra.mxu0 %v691
  %737 = vmatprep.subr.bf16.mxu0 %v695
  %738 = vmatpush1.bf16.msra.mxu0 %v694
  %739 = vmatprep.subr.bf16.mxu0 %v698
  %740 = vmatpush1.bf16.msra.mxu0 %v697
  %741 = vmatprep.subr.bf16.mxu0 %v701
  %742 = vmatpush1.bf16.msra.mxu0 %v700
  %743 = vmatprep.subr.bf16.mxu0 0
  %744 = vmatpush1.bf16.msra.mxu0 0
  %745 = vmatprep.subr.bf16.mxu0 0
  %746 = vmatpush1.bf16.msra.mxu0 0
  %747 = vmatprep.subr.bf16.mxu0 0
  %748 = vmatpush1.bf16.msra.mxu0 0
  %749 = vmatprep.subr.bf16.mxu0 0
  %750 = vmatpush1.bf16.msra.mxu0 0
  %751 = vmatprep.subr.bf16.mxu0 0
  %752 = vmatpush1.bf16.msra.mxu0 0
  %753 = vmatprep.subr.bf16.mxu0 0
  %754 = vmatpush1.bf16.msra.mxu0 0
  %755 = vmatprep.subr.bf16.mxu0 0
  %756 = vmatpush1.bf16.msra.mxu0 0
  %757 = vmatprep.subr.bf16.mxu0 0
  %758 = vmatpush1.bf16.msra.mxu0 0
  %759 = vmatprep.mubr.bf16.mxu0 0
  %760 = vmatmul.mubr.bf16.gmra.mrb[0].mxu0 %v567
  %v761 = vpop.f32.mrb[0].mxu0
  %v762 = vadd.f32 %v491, %v761
  %v763 = vpop.f32.mrb[0].mxu0
  %v764 = vadd.f32 %v495, %v763
  %v765 = vpop.f32.mrb[0].mxu0
  %v766 = vadd.f32 %v491, %v765
  %v767 = vpop.f32.mrb[0].mxu0
  %v768 = vadd.f32 %v495, %v767
  %769 = vmatprep.mubr.bf16.mxu0 0
  %770 = vmatmul.mubr.bf16.gmra.mrb[0].mxu0 %v568
  %v771 = vpop.f32.mrb[0].mxu0
  %v772 = vadd.f32 %v491, %v771
  %v773 = vpop.f32.mrb[0].mxu0
  %v774 = vadd.f32 %v495, %v773
  %v775 = vpop.f32.mrb[0].mxu0
  %v776 = vadd.f32 %v491, %v775
  %v777 = vpop.f32.mrb[0].mxu0
  %v778 = vadd.f32 %v495, %v777
  %779 = vmatprep.mubr.bf16.mxu0 0
  %780 = vmatmul.mubr.bf16.gmra.mrb[0].mxu0 %v569
  %v781 = vpop.f32.mrb[0].mxu0
  %v782 = vadd.f32 %v491, %v781
  %v783 = vpop.f32.mrb[0].mxu0
  %v784 = vadd.f32 %v495, %v783
  %v785 = vpop.f32.mrb[0].mxu0
  %v786 = vadd.f32 %v491, %v785
  %v787 = vpop.f32.mrb[0].mxu0
  %v788 = vadd.f32 %v495, %v787
  %789 = vmatprep.mubr.bf16.mxu0 0
  %790 = vmatmul.mubr.bf16.gmra.mrb[0].mxu0 %v570
  %v791 = vpop.f32.mrb[0].mxu0
  %v792 = vadd.f32 %v491, %v791
  %v793 = vpop.f32.mrb[0].mxu0
  %v794 = vadd.f32 %v495, %v793
  %v795 = vpop.f32.mrb[0].mxu0
  %v796 = vadd.f32 %v491, %v795
  %v797 = vpop.f32.mrb[0].mxu0
  %v798 = vadd.f32 %v495, %v797
  %799 = vmatprep.mubr.bf16.mxu0 0
  %800 = vmatmul.mubr.bf16.gmra.mrb[0].mxu0 %v571
  %v801 = vpop.f32.mrb[0].mxu0
  %v802 = vadd.f32 %v491, %v801
  %v803 = vpop.f32.mrb[0].mxu0
  %v804 = vadd.f32 %v495, %v803
  %v805 = vpop.f32.mrb[0].mxu0
  %v806 = vadd.f32 %v491, %v805
  %v807 = vpop.f32.mrb[0].mxu0
  %v808 = vadd.f32 %v495, %v807
  %809 = vmatprep.mubr.bf16.mxu0 0
  %810 = vmatmul.mubr.bf16.gmra.mrb[0].mxu0 %v572
  %v811 = vpop.f32.mrb[0].mxu0
  %v812 = vadd.f32 %v491, %v811
  %v813 = vpop.f32.mrb[0].mxu0
  %v814 = vadd.f32 %v495, %v813
  %v815 = vpop.f32.mrb[0].mxu0
  %v816 = vadd.f32 %v491, %v815
  %v817 = vpop.f32.mrb[0].mxu0
  %v818 = vadd.f32 %v495, %v817
  %819 = vmatprep.mubr.bf16.mxu0 0
  %820 = vmatmul.mubr.bf16.gmra.mrb[0].mxu0 %v573
  %v821 = vpop.f32.mrb[0].mxu0
  %v822 = vadd.f32 %v491, %v821
  %v823 = vpop.f32.mrb[0].mxu0
  %v824 = vadd.f32 %v495, %v823
  %v825 = vpop.f32.mrb[0].mxu0
  %v826 = vadd.f32 %v491, %v825
  %v827 = vpop.f32.mrb[0].mxu0
  %v828 = vadd.f32 %v495, %v827
  %829 = vmatprep.mubr.bf16.mxu0 0
  %830 = vmatmul.mubr.bf16.gmra.mrb[0].mxu0 %v574
  %v831 = vpop.f32.mrb[0].mxu0
  %v832 = vadd.f32 %v491, %v831
  %v833 = vpop.f32.mrb[0].mxu0
  %v834 = vadd.f32 %v495, %v833
  %v835 = vpop.f32.mrb[0].mxu0
  %v836 = vadd.f32 %v491, %v835
  %v837 = vpop.f32.mrb[0].mxu0
  %v838 = vadd.f32 %v495, %v837
  %839 = vmatprep.mubr.bf16.mxu0 0
  %840 = vmatmul.mubr.bf16.gmra.mrb[0].mxu0 %v575
  %v841 = vpop.f32.mrb[0].mxu0
  %v842 = vadd.f32 %v491, %v841
  %v843 = vpop.f32.mrb[0].mxu0
  %v844 = vadd.f32 %v495, %v843
  %v845 = vpop.f32.mrb[0].mxu0
  %v846 = vadd.f32 %v491, %v845
  %v847 = vpop.f32.mrb[0].mxu0
  %v848 = vadd.f32 %v495, %v847
  %849 = vmatprep.mubr.bf16.mxu0 0
  %850 = vmatmul.mubr.bf16.gmra.mrb[0].mxu0 %v576
  %v851 = vpop.f32.mrb[0].mxu0
  %v852 = vadd.f32 %v491, %v851
  %v853 = vpop.f32.mrb[0].mxu0
  %v854 = vadd.f32 %v495, %v853
  %v855 = vpop.f32.mrb[0].mxu0
  %v856 = vadd.f32 %v491, %v855
  %v857 = vpop.f32.mrb[0].mxu0
  %v858 = vadd.f32 %v495, %v857
  %859 = vmatprep.mubr.bf16.mxu0 0
  %860 = vmatmul.mubr.bf16.gmra.mrb[0].mxu0 %v577
  %v861 = vpop.f32.mrb[0].mxu0
  %v862 = vadd.f32 %v491, %v861
  %v863 = vpop.f32.mrb[0].mxu0
  %v864 = vadd.f32 %v495, %v863
  %v865 = vpop.f32.mrb[0].mxu0
  %v866 = vadd.f32 %v491, %v865
  %v867 = vpop.f32.mrb[0].mxu0
  %v868 = vadd.f32 %v495, %v867
  %869 = vmatprep.mubr.bf16.mxu0 0
  %870 = vmatmul.mubr.bf16.gmra.mrb[0].mxu0 %v578
  %v871 = vpop.f32.mrb[0].mxu0
  %v872 = vadd.f32 %v491, %v871
  %v873 = vpop.f32.mrb[0].mxu0
  %v874 = vadd.f32 %v495, %v873
  %v875 = vpop.f32.mrb[0].mxu0
  %v876 = vadd.f32 %v491, %v875
  %v877 = vpop.f32.mrb[0].mxu0
  %v878 = vadd.f32 %v495, %v877
  %879 = vmatprep.mubr.bf16.mxu0 0
  %880 = vmatmul.mubr.bf16.gmra.mrb[0].mxu0 %v579
  %v881 = vpop.f32.mrb[0].mxu0
  %v882 = vadd.f32 %v491, %v881
  %v883 = vpop.f32.mrb[0].mxu0
  %v884 = vadd.f32 %v495, %v883
  %v885 = vpop.f32.mrb[0].mxu0
  %v886 = vadd.f32 %v491, %v885
  %v887 = vpop.f32.mrb[0].mxu0
  %v888 = vadd.f32 %v495, %v887
  %889 = vmatprep.mubr.bf16.mxu0 0
  %890 = vmatmul.mubr.bf16.gmra.mrb[0].mxu0 %v580
  %v891 = vpop.f32.mrb[0].mxu0
  %v892 = vadd.f32 %v491, %v891
  %v893 = vpop.f32.mrb[0].mxu0
  %v894 = vadd.f32 %v495, %v893
  %v895 = vpop.f32.mrb[0].mxu0
  %v896 = vadd.f32 %v491, %v895
  %v897 = vpop.f32.mrb[0].mxu0
  %v898 = vadd.f32 %v495, %v897
  %899 = vmatprep.mubr.bf16.mxu0 0
  %900 = vmatmul.mubr.bf16.gmra.mrb[0].mxu0 %v581
  %v901 = vpop.f32.mrb[0].mxu0
  %v902 = vadd.f32 %v491, %v901
  %v903 = vpop.f32.mrb[0].mxu0
  %v904 = vadd.f32 %v495, %v903
  %v905 = vpop.f32.mrb[0].mxu0
  %v906 = vadd.f32 %v491, %v905
  %v907 = vpop.f32.mrb[0].mxu0
  %v908 = vadd.f32 %v495, %v907
  %909 = vmatprep.mubr.bf16.mxu0 0
  %910 = vmatmul.mubr.bf16.gmra.mrb[0].mxu0 %v582
  %v911 = vpop.f32.mrb[0].mxu0
  %v912 = vadd.f32 %v491, %v911
  %v913 = vpop.f32.mrb[0].mxu0
  %v914 = vadd.f32 %v495, %v913
  %v915 = vpop.f32.mrb[0].mxu0
  %v916 = vadd.f32 %v491, %v915
  %v917 = vpop.f32.mrb[0].mxu0
  %v918 = vadd.f32 %v495, %v917
  %919 = vdwg.mxu0
  %920 = vmatprep.subr.bf16.mxu0 0
  %921 = vmatpush1.bf16.msra.mxu0 %v681
  %922 = vmatprep.subr.bf16.mxu0 0
  %923 = vmatpush1.bf16.msra.mxu0 %v684
  %924 = vmatprep.subr.bf16.mxu0 0
  %925 = vmatpush1.bf16.msra.mxu0 %v687
  %926 = vmatprep.subr.bf16.mxu0 0
  %927 = vmatpush1.bf16.msra.mxu0 %v690
  %928 = vmatprep.subr.bf16.mxu0 0
  %929 = vmatpush1.bf16.msra.mxu0 %v693
  %930 = vmatprep.subr.bf16.mxu0 0
  %931 = vmatpush1.bf16.msra.mxu0 %v696
  %932 = vmatprep.subr.bf16.mxu0 0
  %933 = vmatpush1.bf16.msra.mxu0 %v699
  %934 = vmatprep.subr.bf16.mxu0 0
  %935 = vmatpush1.bf16.msra.mxu0 %v702
  %936 = vmatprep.subr.bf16.mxu0 0
  %937 = vmatpush1.bf16.msra.mxu0 0
  %938 = vmatprep.subr.bf16.mxu0 0
  %939 = vmatpush1.bf16.msra.mxu0 0
  %940 = vmatprep.subr.bf16.mxu0 0
  %941 = vmatpush1.bf16.msra.mxu0 0
  %942 = vmatprep.subr.bf16.mxu0 0
  %943 = vmatpush1.bf16.msra.mxu0 0
  %944 = vmatprep.subr.bf16.mxu0 0
  %945 = vmatpush1.bf16.msra.mxu0 0
  %946 = vmatprep.subr.bf16.mxu0 0
  %947 = vmatpush1.bf16.msra.mxu0 0
  %948 = vmatprep.subr.bf16.mxu0 0
  %949 = vmatpush1.bf16.msra.mxu0 0
  %950 = vmatprep.subr.bf16.mxu0 0
  %951 = vmatpush1.bf16.msra.mxu0 0
  %952 = vmatprep.mubr.bf16.mxu0 0
  %953 = vmatmul.mubr.bf16.gmra.mrb[0].mxu0 %v567
  %v954 = vpop.f32.mrb[0].mxu0
  %v955 = vadd.f32 %v499, %v954
  %v956 = vpop.f32.mrb[0].mxu0
  %v957 = vpop.f32.mrb[0].mxu0
  %v958 = vadd.f32 %v499, %v957
  %v959 = vpop.f32.mrb[0].mxu0
  %960 = vmatprep.mubr.bf16.mxu0 0
  %961 = vmatmul.mubr.bf16.gmra.mrb[0].mxu0 %v568
  %v962 = vpop.f32.mrb[0].mxu0
  %v963 = vadd.f32 %v499, %v962
  %v964 = vpop.f32.mrb[0].mxu0
  %v965 = vpop.f32.mrb[0].mxu0
  %v966 = vadd.f32 %v499, %v965
  %v967 = vpop.f32.mrb[0].mxu0
  %968 = vmatprep.mubr.bf16.mxu0 0
  %969 = vmatmul.mubr.bf16.gmra.mrb[0].mxu0 %v569
  %v970 = vpop.f32.mrb[0].mxu0
  %v971 = vadd.f32 %v499, %v970
  %v972 = vpop.f32.mrb[0].mxu0
  %v973 = vpop.f32.mrb[0].mxu0
  %v974 = vadd.f32 %v499, %v973
  %v975 = vpop.f32.mrb[0].mxu0
  %976 = vmatprep.mubr.bf16.mxu0 0
  %977 = vmatmul.mubr.bf16.gmra.mrb[0].mxu0 %v570
  %v978 = vpop.f32.mrb[0].mxu0
  %v979 = vadd.f32 %v499, %v978
  %v980 = vpop.f32.mrb[0].mxu0
  %v981 = vpop.f32.mrb[0].mxu0
  %v982 = vadd.f32 %v499, %v981
  %v983 = vpop.f32.mrb[0].mxu0
  %984 = vmatprep.mubr.bf16.mxu0 0
  %985 = vmatmul.mubr.bf16.gmra.mrb[0].mxu0 %v571
  %v986 = vpop.f32.mrb[0].mxu0
  %v987 = vadd.f32 %v499, %v986
  %v988 = vpop.f32.mrb[0].mxu0
  %v989 = vpop.f32.mrb[0].mxu0
  %v990 = vadd.f32 %v499, %v989
  %v991 = vpop.f32.mrb[0].mxu0
  %992 = vmatprep.mubr.bf16.mxu0 0
  %993 = vmatmul.mubr.bf16.gmra.mrb[0].mxu0 %v572
  %v994 = vpop.f32.mrb[0].mxu0
  %v995 = vadd.f32 %v499, %v994
  %v996 = vpop.f32.mrb[0].mxu0
  %v997 = vpop.f32.mrb[0].mxu0
  %v998 = vadd.f32 %v499, %v997
  %v999 = vpop.f32.mrb[0].mxu0
  %1000 = vmatprep.mubr.bf16.mxu0 0
  %1001 = vmatmul.mubr.bf16.gmra.mrb[0].mxu0 %v573
  %v1002 = vpop.f32.mrb[0].mxu0
  %v1003 = vadd.f32 %v499, %v1002
  %v1004 = vpop.f32.mrb[0].mxu0
  %v1005 = vpop.f32.mrb[0].mxu0
  %v1006 = vadd.f32 %v499, %v1005
  %v1007 = vpop.f32.mrb[0].mxu0
  %1008 = vmatprep.mubr.bf16.mxu0 0
  %1009 = vmatmul.mubr.bf16.gmra.mrb[0].mxu0 %v574
  %v1010 = vpop.f32.mrb[0].mxu0
  %v1011 = vadd.f32 %v499, %v1010
  %v1012 = vpop.f32.mrb[0].mxu0
  %v1013 = vpop.f32.mrb[0].mxu0
  %v1014 = vadd.f32 %v499, %v1013
  %v1015 = vpop.f32.mrb[0].mxu0
  %1016 = vmatprep.mubr.bf16.mxu0 0
  %1017 = vmatmul.mubr.bf16.gmra.mrb[0].mxu0 %v575
  %v1018 = vpop.f32.mrb[0].mxu0
  %v1019 = vadd.f32 %v499, %v1018
  %v1020 = vpop.f32.mrb[0].mxu0
  %v1021 = vpop.f32.mrb[0].mxu0
  %v1022 = vadd.f32 %v499, %v1021
  %v1023 = vpop.f32.mrb[0].mxu0
  %1024 = vmatprep.mubr.bf16.mxu0 0
  %1025 = vmatmul.mubr.bf16.gmra.mrb[0].mxu0 %v576
  %v1026 = vpop.f32.mrb[0].mxu0
  %v1027 = vadd.f32 %v499, %v1026
  %v1028 = vpop.f32.mrb[0].mxu0
  %v1029 = vpop.f32.mrb[0].mxu0
  %v1030 = vadd.f32 %v499, %v1029
  %v1031 = vpop.f32.mrb[0].mxu0
  %1032 = vmatprep.mubr.bf16.mxu0 0
  %1033 = vmatmul.mubr.bf16.gmra.mrb[0].mxu0 %v577
  %v1034 = vpop.f32.mrb[0].mxu0
  %v1035 = vadd.f32 %v499, %v1034
  %v1036 = vpop.f32.mrb[0].mxu0
  %v1037 = vpop.f32.mrb[0].mxu0
  %v1038 = vadd.f32 %v499, %v1037
  %v1039 = vpop.f32.mrb[0].mxu0
  %1040 = vmatprep.mubr.bf16.mxu0 0
  %1041 = vmatmul.mubr.bf16.gmra.mrb[0].mxu0 %v578
  %v1042 = vpop.f32.mrb[0].mxu0
  %v1043 = vadd.f32 %v499, %v1042
  %v1044 = vpop.f32.mrb[0].mxu0
  %v1045 = vpop.f32.mrb[0].mxu0
  %v1046 = vadd.f32 %v499, %v1045
  %v1047 = vpop.f32.mrb[0].mxu0
  %1048 = vmatprep.mubr.bf16.mxu0 0
  %1049 = vmatmul.mubr.bf16.gmra.mrb[0].mxu0 %v579
  %v1050 = vpop.f32.mrb[0].mxu0
  %v1051 = vadd.f32 %v499, %v1050
  %v1052 = vpop.f32.mrb[0].mxu0
  %v1053 = vpop.f32.mrb[0].mxu0
  %v1054 = vadd.f32 %v499, %v1053
  %v1055 = vpop.f32.mrb[0].mxu0
  %1056 = vmatprep.mubr.bf16.mxu0 0
  %1057 = vmatmul.mubr.bf16.gmra.mrb[0].mxu0 %v580
  %v1058 = vpop.f32.mrb[0].mxu0
  %v1059 = vadd.f32 %v499, %v1058
  %v1060 = vpop.f32.mrb[0].mxu0
  %v1061 = vpop.f32.mrb[0].mxu0
  %v1062 = vadd.f32 %v499, %v1061
  %v1063 = vpop.f32.mrb[0].mxu0
  %1064 = vmatprep.mubr.bf16.mxu0 0
  %1065 = vmatmul.mubr.bf16.gmra.mrb[0].mxu0 %v581
  %v1066 = vpop.f32.mrb[0].mxu0
  %v1067 = vadd.f32 %v499, %v1066
  %v1068 = vpop.f32.mrb[0].mxu0
  %v1069 = vpop.f32.mrb[0].mxu0
  %v1070 = vadd.f32 %v499, %v1069
  %v1071 = vpop.f32.mrb[0].mxu0
  %1072 = vmatprep.mubr.bf16.mxu0 0
  %1073 = vmatmul.mubr.bf16.gmra.mrb[0].mxu0 %v582
  %v1074 = vpop.f32.mrb[0].mxu0
  %v1075 = vadd.f32 %v499, %v1074
  %v1076 = vpop.f32.mrb[0].mxu0
  %v1077 = vpop.f32.mrb[0].mxu0
  %v1078 = vadd.f32 %v499, %v1077
  %v1079 = vpop.f32.mrb[0].mxu0
  %1080 = vdwg.mxu0
  %v1081 = vld [vmem:[%s6] sm:$0xff]
  %v1082 = vld [vmem:[%s6 + $0x8] sm:$0xf]
  %v1083 = vld [vmem:[%s6 + $0xc] sm:$0xff]
  %v1084 = vld [vmem:[%s6 + $0x14] sm:$0xf]
  %v1085 = vld [vmem:[%s6 + $0x18] sm:$0xff]
  %v1086 = vld [vmem:[%s6 + $0x20] sm:$0xf]
  %v1087 = vld [vmem:[%s6 + $0x24] sm:$0xff]
  %v1088 = vld [vmem:[%s6 + $0x2c] sm:$0xf]
  %v1089 = vld [vmem:[%s6 + $0x30] sm:$0xff]
  %v1090 = vld [vmem:[%s6 + $0x38] sm:$0xf]
  %v1091 = vld [vmem:[%s6 + $0x3c] sm:$0xff]
  %v1092 = vld [vmem:[%s6 + $0x44] sm:$0xf]
  %v1093 = vld [vmem:[%s6 + $0x48] sm:$0xff]
  %v1094 = vld [vmem:[%s6 + $0x50] sm:$0xf]
  %v1095 = vld [vmem:[%s6 + $0x54] sm:$0xff]
  %v1096 = vld [vmem:[%s6 + $0x5c] sm:$0xf]
  %v1097 = vld [vmem:[%s6 + $0x60] sm:$0xff]
  %v1098 = vld [vmem:[%s6 + $0x68] sm:$0xf]
  %v1099 = vld [vmem:[%s6 + $0x6c] sm:$0xff]
  %v1100 = vld [vmem:[%s6 + $0x74] sm:$0xf]
  %v1101 = vld [vmem:[%s6 + $0x78] sm:$0xff]
  %v1102 = vld [vmem:[%s6 + $0x80] sm:$0xf]
  %v1103 = vld [vmem:[%s6 + $0x84] sm:$0xff]
  %v1104 = vld [vmem:[%s6 + $0x8c] sm:$0xf]
  %v1105 = vld [vmem:[%s6 + $0x90] sm:$0xff]
  %v1106 = vld [vmem:[%s6 + $0x98] sm:$0xf]
  %v1107 = vld [vmem:[%s6 + $0x9c] sm:$0xff]
  %v1108 = vld [vmem:[%s6 + $0xa4] sm:$0xf]
  %v1109 = vld [vmem:[%s6 + $0xa8] sm:$0xff]
  %v1110 = vld [vmem:[%s6 + $0xb0] sm:$0xf]
  %v1111 = vld [vmem:[%s6 + $0xb4] sm:$0xff]
  %v1112 = vld [vmem:[%s6 + $0xbc] sm:$0xf]
  %v1113 = vld [vmem:[%s7] sm:$0x1]
  %v1114 = vpack.c.bf16 %v419, %v418
  %v1115 = vpack.c.bf16 %v421, %v420
  %v1148 = vunpack.c.l.b16 %v1081
  %v1149 = vunpack.c.h.b16 %v1081
  %v1150 = vunpack.c.l.b16 %v1082
  %v1151 = vunpack.c.l.b16 %v1083
  %v1152 = vunpack.c.h.b16 %v1083
  %v1153 = vunpack.c.l.b16 %v1084
  %v1154 = vunpack.c.l.b16 %v1085
  %v1155 = vunpack.c.h.b16 %v1085
  %v1156 = vunpack.c.l.b16 %v1086
  %v1157 = vunpack.c.l.b16 %v1087
  %v1158 = vunpack.c.h.b16 %v1087
  %v1159 = vunpack.c.l.b16 %v1088
  %v1160 = vunpack.c.l.b16 %v1089
  %v1161 = vunpack.c.h.b16 %v1089
  %v1162 = vunpack.c.l.b16 %v1090
  %v1163 = vunpack.c.l.b16 %v1091
  %v1164 = vunpack.c.h.b16 %v1091
  %v1165 = vunpack.c.l.b16 %v1092
  %v1166 = vunpack.c.l.b16 %v1093
  %v1167 = vunpack.c.h.b16 %v1093
  %v1168 = vunpack.c.l.b16 %v1094
  %v1169 = vunpack.c.l.b16 %v1095
  %v1170 = vunpack.c.h.b16 %v1095
  %v1171 = vunpack.c.l.b16 %v1096
  %v1172 = vunpack.c.l.b16 %v1097
  %v1173 = vunpack.c.h.b16 %v1097
  %v1174 = vunpack.c.l.b16 %v1098
  %v1175 = vunpack.c.l.b16 %v1099
  %v1176 = vunpack.c.h.b16 %v1099
  %v1177 = vunpack.c.l.b16 %v1100
  %v1178 = vunpack.c.l.b16 %v1101
  %v1179 = vunpack.c.h.b16 %v1101
  %v1180 = vunpack.c.l.b16 %v1102
  %v1181 = vunpack.c.l.b16 %v1103
  %v1182 = vunpack.c.h.b16 %v1103
  %v1183 = vunpack.c.l.b16 %v1104
  %v1184 = vunpack.c.l.b16 %v1105
  %v1185 = vunpack.c.h.b16 %v1105
  %v1186 = vunpack.c.l.b16 %v1106
  %v1187 = vunpack.c.l.b16 %v1107
  %v1188 = vunpack.c.h.b16 %v1107
  %v1189 = vunpack.c.l.b16 %v1108
  %v1190 = vunpack.c.l.b16 %v1109
  %v1191 = vunpack.c.h.b16 %v1109
  %v1192 = vunpack.c.l.b16 %v1110
  %v1193 = vunpack.c.l.b16 %v1111
  %v1194 = vunpack.c.h.b16 %v1111
  %v1195 = vunpack.c.l.b16 %v1112
  %v1196 = vpack.c.b16 %v1151, %v1148
  %v1197 = vpack.c.b16 %v1152, %v1149
  %v1198 = vpack.c.b16 %v1153, %v1150
  %v1199 = vpack.c.b16 %v1157, %v1154
  %v1200 = vpack.c.b16 %v1158, %v1155
  %v1201 = vpack.c.b16 %v1159, %v1156
  %v1202 = vpack.c.b16 %v1163, %v1160
  %v1203 = vpack.c.b16 %v1164, %v1161
  %v1204 = vpack.c.b16 %v1165, %v1162
  %v1205 = vpack.c.b16 %v1169, %v1166
  %v1206 = vpack.c.b16 %v1170, %v1167
  %v1207 = vpack.c.b16 %v1171, %v1168
  %v1208 = vpack.c.b16 %v1175, %v1172
  %v1209 = vpack.c.b16 %v1176, %v1173
  %v1210 = vpack.c.b16 %v1177, %v1174
  %v1211 = vpack.c.b16 %v1181, %v1178
  %v1212 = vpack.c.b16 %v1182, %v1179
  %v1213 = vpack.c.b16 %v1183, %v1180
  %v1214 = vpack.c.b16 %v1187, %v1184
  %v1215 = vpack.c.b16 %v1188, %v1185
  %v1216 = vpack.c.b16 %v1189, %v1186
  %v1217 = vpack.c.b16 %v1193, %v1190
  %v1218 = vpack.c.b16 %v1194, %v1191
  %v1219 = vpack.c.b16 %v1195, %v1192
  %1244 = vmatprep.subr.bf16.mxu0 %v1197
  %1245 = vmatpush1.bf16.msra.mxu0 %v1196
  %1246 = vmatprep.subr.bf16.mxu0 %v1200
  %1247 = vmatpush1.bf16.msra.mxu0 %v1199
  %1248 = vmatprep.subr.bf16.mxu0 %v1203
  %1249 = vmatpush1.bf16.msra.mxu0 %v1202
  %1250 = vmatprep.subr.bf16.mxu0 %v1206
  %1251 = vmatpush1.bf16.msra.mxu0 %v1205
  %1252 = vmatprep.subr.bf16.mxu0 %v1209
  %1253 = vmatpush1.bf16.msra.mxu0 %v1208
  %1254 = vmatprep.subr.bf16.mxu0 %v1212
  %1255 = vmatpush1.bf16.msra.mxu0 %v1211
  %1256 = vmatprep.subr.bf16.mxu0 %v1215
  %1257 = vmatpush1.bf16.msra.mxu0 %v1214
  %1258 = vmatprep.subr.bf16.mxu0 %v1218
  %1259 = vmatpush1.bf16.msra.mxu0 %v1217
  %1260 = vmatprep.subr.bf16.mxu0 0
  %1261 = vmatpush1.bf16.msra.mxu0 0
  %1262 = vmatprep.subr.bf16.mxu0 0
  %1263 = vmatpush1.bf16.msra.mxu0 0
  %1264 = vmatprep.subr.bf16.mxu0 0
  %1265 = vmatpush1.bf16.msra.mxu0 0
  %1266 = vmatprep.subr.bf16.mxu0 0
  %1267 = vmatpush1.bf16.msra.mxu0 0
  %1268 = vmatprep.subr.bf16.mxu0 0
  %1269 = vmatpush1.bf16.msra.mxu0 0
  %1270 = vmatprep.subr.bf16.mxu0 0
  %1271 = vmatpush1.bf16.msra.mxu0 0
  %1272 = vmatprep.subr.bf16.mxu0 0
  %1273 = vmatpush1.bf16.msra.mxu0 0
  %1274 = vmatprep.subr.bf16.mxu0 0
  %1275 = vmatpush1.bf16.msra.mxu0 0
  %1276 = vmatprep.mubr.bf16.mxu0 0
  %1277 = vmatmul.mubr.bf16.gmra.mrb[0].mxu0 %v1114
  %v1278 = vpop.f32.mrb[0].mxu0
  %v1279 = vadd.f32 0.0, %v1278
  %v1280 = vpop.f32.mrb[0].mxu0
  %v1281 = vadd.f32 0.0, %v1280
  %v1282 = vpop.f32.mrb[0].mxu0
  %v1283 = vadd.f32 0.0, %v1282
  %v1284 = vpop.f32.mrb[0].mxu0
  %v1285 = vadd.f32 0.0, %v1284
  %1286 = vmatprep.mubr.bf16.mxu0 0
  %1287 = vmatmul.mubr.bf16.gmra.mrb[0].mxu0 %v1115
  %v1288 = vpop.f32.mrb[0].mxu0
  %v1289 = vadd.f32 0.0, %v1288
  %v1290 = vpop.f32.mrb[0].mxu0
  %v1291 = vadd.f32 0.0, %v1290
  %v1292 = vpop.f32.mrb[0].mxu0
  %v1293 = vadd.f32 0.0, %v1292
  %v1294 = vpop.f32.mrb[0].mxu0
  %v1295 = vadd.f32 0.0, %v1294
  %1296 = vdwg.mxu0
  %1297 = vmatprep.subr.bf16.mxu0 0
  %1298 = vmatpush1.bf16.msra.mxu0 %v1198
  %1299 = vmatprep.subr.bf16.mxu0 0
  %1300 = vmatpush1.bf16.msra.mxu0 %v1201
  %1301 = vmatprep.subr.bf16.mxu0 0
  %1302 = vmatpush1.bf16.msra.mxu0 %v1204
  %1303 = vmatprep.subr.bf16.mxu0 0
  %1304 = vmatpush1.bf16.msra.mxu0 %v1207
  %1305 = vmatprep.subr.bf16.mxu0 0
  %1306 = vmatpush1.bf16.msra.mxu0 %v1210
  %1307 = vmatprep.subr.bf16.mxu0 0
  %1308 = vmatpush1.bf16.msra.mxu0 %v1213
  %1309 = vmatprep.subr.bf16.mxu0 0
  %1310 = vmatpush1.bf16.msra.mxu0 %v1216
  %1311 = vmatprep.subr.bf16.mxu0 0
  %1312 = vmatpush1.bf16.msra.mxu0 %v1219
  %1313 = vmatprep.subr.bf16.mxu0 0
  %1314 = vmatpush1.bf16.msra.mxu0 0
  %1315 = vmatprep.subr.bf16.mxu0 0
  %1316 = vmatpush1.bf16.msra.mxu0 0
  %1317 = vmatprep.subr.bf16.mxu0 0
  %1318 = vmatpush1.bf16.msra.mxu0 0
  %1319 = vmatprep.subr.bf16.mxu0 0
  %1320 = vmatpush1.bf16.msra.mxu0 0
  %1321 = vmatprep.subr.bf16.mxu0 0
  %1322 = vmatpush1.bf16.msra.mxu0 0
  %1323 = vmatprep.subr.bf16.mxu0 0
  %1324 = vmatpush1.bf16.msra.mxu0 0
  %1325 = vmatprep.subr.bf16.mxu0 0
  %1326 = vmatpush1.bf16.msra.mxu0 0
  %1327 = vmatprep.subr.bf16.mxu0 0
  %1328 = vmatpush1.bf16.msra.mxu0 0
  %1329 = vmatprep.mubr.bf16.mxu0 0
  %1330 = vmatmul.mubr.bf16.gmra.mrb[0].mxu0 %v1114
  %v1331 = vpop.f32.mrb[0].mxu0
  %v1332 = vadd.f32 0.0, %v1331
  %v1333 = vpop.f32.mrb[0].mxu0
  %v1334 = vpop.f32.mrb[0].mxu0
  %v1335 = vadd.f32 0.0, %v1334
  %v1336 = vpop.f32.mrb[0].mxu0
  %1337 = vmatprep.mubr.bf16.mxu0 0
  %1338 = vmatmul.mubr.bf16.gmra.mrb[0].mxu0 %v1115
  %v1339 = vpop.f32.mrb[0].mxu0
  %v1340 = vadd.f32 0.0, %v1339
  %v1341 = vpop.f32.mrb[0].mxu0
  %v1342 = vpop.f32.mrb[0].mxu0
  %v1343 = vadd.f32 0.0, %v1342
  %v1344 = vpop.f32.mrb[0].mxu0
  %1345 = vdwg.mxu0
  %v1346 = vadd.f32 %v762, %v1279
  %v1347 = vadd.f32 %v766, %v1283
  %v1348 = vadd.f32 %v772, %v1289
  %v1349 = vadd.f32 %v776, %v1293
  %v1350 = vxor.u32 %v1346, 2147483648
  %v1351 = vxor.u32 %v1347, 2147483648
  %v1352 = vxor.u32 %v1348, 2147483648
  %v1353 = vxor.u32 %v1349, 2147483648
  %v1354 = vmul.f32 %v1350, 1.442695
  %v1355 = vpow.pop %v1354
  %v1356 = vmul.f32 %v1351, 1.442695
  %v1357 = vpow.pop %v1356
  %v1358 = vmul.f32 %v1352, 1.442695
  %v1359 = vpow.pop %v1358
  %v1360 = vmul.f32 %v1353, 1.442695
  %v1361 = vpow.pop %v1360
  %v1362 = vadd.f32 %v1355, 1.0
  %v1363 = vadd.f32 %v1357, 1.0
  %v1364 = vadd.f32 %v1359, 1.0
  %v1365 = vadd.f32 %v1361, 1.0
  %v1366 = vrcp.pop %v1362
  %v1367 = vmul.f32 1.0, %v1366
  %v1368 = vrcp.pop %v1363
  %v1369 = vmul.f32 1.0, %v1368
  %v1370 = vrcp.pop %v1364
  %v1371 = vmul.f32 1.0, %v1370
  %v1372 = vrcp.pop %v1365
  %v1373 = vmul.f32 1.0, %v1372
  %v1374 = vadd.f32 %v764, %v1281
  %v1375 = vadd.f32 %v768, %v1285
  %v1376 = vadd.f32 %v774, %v1291
  %v1377 = vadd.f32 %v778, %v1295
  %v1378 = vxor.u32 %v1374, 2147483648
  %v1379 = vxor.u32 %v1375, 2147483648
  %v1380 = vxor.u32 %v1376, 2147483648
  %v1381 = vxor.u32 %v1377, 2147483648
  %v1382 = vmul.f32 %v1378, 1.442695
  %v1383 = vpow.pop %v1382
  %v1384 = vmul.f32 %v1379, 1.442695
  %v1385 = vpow.pop %v1384
  %v1386 = vmul.f32 %v1380, 1.442695
  %v1387 = vpow.pop %v1386
  %v1388 = vmul.f32 %v1381, 1.442695
  %v1389 = vpow.pop %v1388
  %v1390 = vadd.f32 %v1383, 1.0
  %v1391 = vadd.f32 %v1385, 1.0
  %v1392 = vadd.f32 %v1387, 1.0
  %v1393 = vadd.f32 %v1389, 1.0
  %v1394 = vrcp.pop %v1390
  %v1395 = vmul.f32 1.0, %v1394
  %v1396 = vrcp.pop %v1391
  %v1397 = vmul.f32 1.0, %v1396
  %v1398 = vrcp.pop %v1392
  %v1399 = vmul.f32 1.0, %v1398
  %v1400 = vrcp.pop %v1393
  %v1401 = vmul.f32 1.0, %v1400
  %v1403 = vlaneseq
  %v1404 = vshrl.u32 %v1403, 7
  %v1405 = vsub.s32 0, %v1404
  %v1406 = vrot.slane %v1113, %v1405
  %v1408 = vadd.f32 %v1332, %v1406
  %v1409 = vadd.f32 %v1335, %v1406
  %v1410 = vadd.f32 %v1340, %v1406
  %v1411 = vadd.f32 %v1343, %v1406
  %v1412 = vmul.f32 %v1367, %v1408
  %v1413 = vmul.f32 %v1369, %v1409
  %v1414 = vmul.f32 %v1371, %v1410
  %v1415 = vmul.f32 %v1373, %v1411
  %v1416 = vadd.f32 %v955, %v1412
  %v1417 = vadd.f32 %v958, %v1413
  %v1418 = vadd.f32 %v963, %v1414
  %v1419 = vadd.f32 %v966, %v1415
  %v1420 = vtanh.pop %v1416
  %v1421 = vtanh.pop %v1417
  %v1422 = vtanh.pop %v1418
  %v1423 = vtanh.pop %v1419
  %v1424 = vsub.f32 1.0, %v1395
  %v1425 = vsub.f32 1.0, %v1397
  %v1426 = vsub.f32 1.0, %v1399
  %v1427 = vsub.f32 1.0, %v1401
  %v1428 = vmul.f32 %v1424, %v1420
  %v1429 = vmul.f32 %v1425, %v1421
  %v1430 = vmul.f32 %v1426, %v1422
  %v1431 = vmul.f32 %v1427, %v1423
  %v1432 = vmul.f32 %v1395, %v418
  %v1433 = vmul.f32 %v1397, %v419
  %v1434 = vmul.f32 %v1399, %v420
  %v1435 = vmul.f32 %v1401, %v421
  %v1436 = vadd.f32 %v1428, %v1432
  %v1437 = vadd.f32 %v1429, %v1433
  %v1438 = vadd.f32 %v1430, %v1434
  %v1439 = vadd.f32 %v1431, %v1435
  %v1440 = vpack.c.bf16 %v1437, %v1436
  %v1441 = vpack.c.bf16 %v1439, %v1438
  %v1444 = vunpack.c.l.b16 %v1440
  %v1445 = vunpack.c.h.b16 %v1440
  %v1446 = vunpack.c.l.b16 %v1441
  %v1447 = vunpack.c.h.b16 %v1441
  %v1448 = vpack.c.b16 %v1444, %v1444
  %v1449 = vpack.c.b16 %v1445, %v1445
  %v1450 = vpack.c.b16 %v1446, %v1446
  %v1451 = vpack.c.b16 %v1447, %v1447
  %1456 = vst [vmem:[%s8] sm:$0xf] %v1448
  %1457 = vst [vmem:[%s8 + $0x4] sm:$0xf] %v1449
  %1458 = vst [vmem:[%s8 + $0x8] sm:$0xf] %v1450
  %1459 = vst [vmem:[%s8 + $0xc] sm:$0xf] %v1451
  %1460 = vmatprep.subr.bf16.mxu0 %v1197
  %1461 = vmatpush1.bf16.msra.mxu0 %v1196
  %1462 = vmatprep.subr.bf16.mxu0 %v1200
  %1463 = vmatpush1.bf16.msra.mxu0 %v1199
  %1464 = vmatprep.subr.bf16.mxu0 %v1203
  %1465 = vmatpush1.bf16.msra.mxu0 %v1202
  %1466 = vmatprep.subr.bf16.mxu0 %v1206
  %1467 = vmatpush1.bf16.msra.mxu0 %v1205
  %1468 = vmatprep.subr.bf16.mxu0 %v1209
  %1469 = vmatpush1.bf16.msra.mxu0 %v1208
  %1470 = vmatprep.subr.bf16.mxu0 %v1212
  %1471 = vmatpush1.bf16.msra.mxu0 %v1211
  %1472 = vmatprep.subr.bf16.mxu0 %v1215
  %1473 = vmatpush1.bf16.msra.mxu0 %v1214
  %1474 = vmatprep.subr.bf16.mxu0 %v1218
  %1475 = vmatpush1.bf16.msra.mxu0 %v1217
  %1476 = vmatprep.subr.bf16.mxu0 0
  %1477 = vmatpush1.bf16.msra.mxu0 0
  %1478 = vmatprep.subr.bf16.mxu0 0
  %1479 = vmatpush1.bf16.msra.mxu0 0
  %1480 = vmatprep.subr.bf16.mxu0 0
  %1481 = vmatpush1.bf16.msra.mxu0 0
  %1482 = vmatprep.subr.bf16.mxu0 0
  %1483 = vmatpush1.bf16.msra.mxu0 0
  %1484 = vmatprep.subr.bf16.mxu0 0
  %1485 = vmatpush1.bf16.msra.mxu0 0
  %1486 = vmatprep.subr.bf16.mxu0 0
  %1487 = vmatpush1.bf16.msra.mxu0 0
  %1488 = vmatprep.subr.bf16.mxu0 0
  %1489 = vmatpush1.bf16.msra.mxu0 0
  %1490 = vmatprep.subr.bf16.mxu0 0
  %1491 = vmatpush1.bf16.msra.mxu0 0
  %1492 = vmatprep.mubr.bf16.mxu0 0
  %1493 = vmatmul.mubr.bf16.gmra.mrb[0].mxu0 %v1440
  %v1494 = vpop.f32.mrb[0].mxu0
  %v1495 = vadd.f32 0.0, %v1494
  %v1496 = vpop.f32.mrb[0].mxu0
  %v1497 = vadd.f32 0.0, %v1496
  %v1498 = vpop.f32.mrb[0].mxu0
  %v1499 = vadd.f32 0.0, %v1498
  %v1500 = vpop.f32.mrb[0].mxu0
  %v1501 = vadd.f32 0.0, %v1500
  %1502 = vmatprep.mubr.bf16.mxu0 0
  %1503 = vmatmul.mubr.bf16.gmra.mrb[0].mxu0 %v1441
  %v1504 = vpop.f32.mrb[0].mxu0
  %v1505 = vadd.f32 0.0, %v1504
  %v1506 = vpop.f32.mrb[0].mxu0
  %v1507 = vadd.f32 0.0, %v1506
  %v1508 = vpop.f32.mrb[0].mxu0
  %v1509 = vadd.f32 0.0, %v1508
  %v1510 = vpop.f32.mrb[0].mxu0
  %v1511 = vadd.f32 0.0, %v1510
  %1512 = vdwg.mxu0
  %1513 = vmatprep.subr.bf16.mxu0 0
  %1514 = vmatpush1.bf16.msra.mxu0 %v1198
  %1515 = vmatprep.subr.bf16.mxu0 0
  %1516 = vmatpush1.bf16.msra.mxu0 %v1201
  %1517 = vmatprep.subr.bf16.mxu0 0
  %1518 = vmatpush1.bf16.msra.mxu0 %v1204
  %1519 = vmatprep.subr.bf16.mxu0 0
  %1520 = vmatpush1.bf16.msra.mxu0 %v1207
  %1521 = vmatprep.subr.bf16.mxu0 0
  %1522 = vmatpush1.bf16.msra.mxu0 %v1210
  %1523 = vmatprep.subr.bf16.mxu0 0
  %1524 = vmatpush1.bf16.msra.mxu0 %v1213
  %1525 = vmatprep.subr.bf16.mxu0 0
  %1526 = vmatpush1.bf16.msra.mxu0 %v1216
  %1527 = vmatprep.subr.bf16.mxu0 0
  %1528 = vmatpush1.bf16.msra.mxu0 %v1219
  %1529 = vmatprep.subr.bf16.mxu0 0
  %1530 = vmatpush1.bf16.msra.mxu0 0
  %1531 = vmatprep.subr.bf16.mxu0 0
  %1532 = vmatpush1.bf16.msra.mxu0 0
  %1533 = vmatprep.subr.bf16.mxu0 0
  %1534 = vmatpush1.bf16.msra.mxu0 0
  %1535 = vmatprep.subr.bf16.mxu0 0
  %1536 = vmatpush1.bf16.msra.mxu0 0
  %1537 = vmatprep.subr.bf16.mxu0 0
  %1538 = vmatpush1.bf16.msra.mxu0 0
  %1539 = vmatprep.subr.bf16.mxu0 0
  %1540 = vmatpush1.bf16.msra.mxu0 0
  %1541 = vmatprep.subr.bf16.mxu0 0
  %1542 = vmatpush1.bf16.msra.mxu0 0
  %1543 = vmatprep.subr.bf16.mxu0 0
  %1544 = vmatpush1.bf16.msra.mxu0 0
  %1545 = vmatprep.mubr.bf16.mxu0 0
  %1546 = vmatmul.mubr.bf16.gmra.mrb[0].mxu0 %v1440
  %v1547 = vpop.f32.mrb[0].mxu0
  %v1548 = vadd.f32 0.0, %v1547
  %v1549 = vpop.f32.mrb[0].mxu0
  %v1550 = vpop.f32.mrb[0].mxu0
  %v1551 = vadd.f32 0.0, %v1550
  %v1552 = vpop.f32.mrb[0].mxu0
  %1553 = vmatprep.mubr.bf16.mxu0 0
  %1554 = vmatmul.mubr.bf16.gmra.mrb[0].mxu0 %v1441
  %v1555 = vpop.f32.mrb[0].mxu0
  %v1556 = vadd.f32 0.0, %v1555
  %v1557 = vpop.f32.mrb[0].mxu0
  %v1558 = vpop.f32.mrb[0].mxu0
  %v1559 = vadd.f32 0.0, %v1558
  %v1560 = vpop.f32.mrb[0].mxu0
  %1561 = vdwg.mxu0
  %v1562 = vadd.f32 %v782, %v1495
  %v1563 = vadd.f32 %v786, %v1499
  %v1564 = vadd.f32 %v792, %v1505
  %v1565 = vadd.f32 %v796, %v1509
  %v1566 = vxor.u32 %v1562, 2147483648
  %v1567 = vxor.u32 %v1563, 2147483648
  %v1568 = vxor.u32 %v1564, 2147483648
  %v1569 = vxor.u32 %v1565, 2147483648
  %v1570 = vmul.f32 %v1566, 1.442695
  %v1571 = vpow.pop %v1570
  %v1572 = vmul.f32 %v1567, 1.442695
  %v1573 = vpow.pop %v1572
  %v1574 = vmul.f32 %v1568, 1.442695
  %v1575 = vpow.pop %v1574
  %v1576 = vmul.f32 %v1569, 1.442695
  %v1577 = vpow.pop %v1576
  %v1578 = vadd.f32 %v1571, 1.0
  %v1579 = vadd.f32 %v1573, 1.0
  %v1580 = vadd.f32 %v1575, 1.0
  %v1581 = vadd.f32 %v1577, 1.0
  %v1582 = vrcp.pop %v1578
  %v1583 = vmul.f32 1.0, %v1582
  %v1584 = vrcp.pop %v1579
  %v1585 = vmul.f32 1.0, %v1584
  %v1586 = vrcp.pop %v1580
  %v1587 = vmul.f32 1.0, %v1586
  %v1588 = vrcp.pop %v1581
  %v1589 = vmul.f32 1.0, %v1588
  %v1590 = vadd.f32 %v784, %v1497
  %v1591 = vadd.f32 %v788, %v1501
  %v1592 = vadd.f32 %v794, %v1507
  %v1593 = vadd.f32 %v798, %v1511
  %v1594 = vxor.u32 %v1590, 2147483648
  %v1595 = vxor.u32 %v1591, 2147483648
  %v1596 = vxor.u32 %v1592, 2147483648
  %v1597 = vxor.u32 %v1593, 2147483648
  %v1598 = vmul.f32 %v1594, 1.442695
  %v1599 = vpow.pop %v1598
  %v1600 = vmul.f32 %v1595, 1.442695
  %v1601 = vpow.pop %v1600
  %v1602 = vmul.f32 %v1596, 1.442695
  %v1603 = vpow.pop %v1602
  %v1604 = vmul.f32 %v1597, 1.442695
  %v1605 = vpow.pop %v1604
  %v1606 = vadd.f32 %v1599, 1.0
  %v1607 = vadd.f32 %v1601, 1.0
  %v1608 = vadd.f32 %v1603, 1.0
  %v1609 = vadd.f32 %v1605, 1.0
  %v1610 = vrcp.pop %v1606
  %v1611 = vmul.f32 1.0, %v1610
  %v1612 = vrcp.pop %v1607
  %v1613 = vmul.f32 1.0, %v1612
  %v1614 = vrcp.pop %v1608
  %v1615 = vmul.f32 1.0, %v1614
  %v1616 = vrcp.pop %v1609
  %v1617 = vmul.f32 1.0, %v1616
  %v1618 = vadd.f32 %v1548, %v1406
  %v1619 = vadd.f32 %v1551, %v1406
  %v1620 = vadd.f32 %v1556, %v1406
  %v1621 = vadd.f32 %v1559, %v1406
  %v1622 = vmul.f32 %v1583, %v1618
  %v1623 = vmul.f32 %v1585, %v1619
  %v1624 = vmul.f32 %v1587, %v1620
  %v1625 = vmul.f32 %v1589, %v1621
  %v1626 = vadd.f32 %v971, %v1622
  %v1627 = vadd.f32 %v974, %v1623
  %v1628 = vadd.f32 %v979, %v1624
  %v1629 = vadd.f32 %v982, %v1625
  %v1630 = vtanh.pop %v1626
  %v1631 = vtanh.pop %v1627
  %v1632 = vtanh.pop %v1628
  %v1633 = vtanh.pop %v1629
  %v1634 = vsub.f32 1.0, %v1611
  %v1635 = vsub.f32 1.0, %v1613
  %v1636 = vsub.f32 1.0, %v1615
  %v1637 = vsub.f32 1.0, %v1617
  %v1638 = vmul.f32 %v1634, %v1630
  %v1639 = vmul.f32 %v1635, %v1631
  %v1640 = vmul.f32 %v1636, %v1632
  %v1641 = vmul.f32 %v1637, %v1633
  %v1642 = vmul.f32 %v1611, %v1436
  %v1643 = vmul.f32 %v1613, %v1437
  %v1644 = vmul.f32 %v1615, %v1438
  %v1645 = vmul.f32 %v1617, %v1439
  %v1646 = vadd.f32 %v1638, %v1642
  %v1647 = vadd.f32 %v1639, %v1643
  %v1648 = vadd.f32 %v1640, %v1644
  %v1649 = vadd.f32 %v1641, %v1645
  %v1650 = vpack.c.bf16 %v1647, %v1646
  %v1651 = vpack.c.bf16 %v1649, %v1648
  %v1654 = vunpack.c.l.b16 %v1650
  %v1655 = vunpack.c.h.b16 %v1650
  %v1656 = vunpack.c.l.b16 %v1651
  %v1657 = vunpack.c.h.b16 %v1651
  %v1658 = vpack.c.b16 %v1654, %v1654
  %v1659 = vpack.c.b16 %v1655, %v1655
  %v1660 = vpack.c.b16 %v1656, %v1656
  %v1661 = vpack.c.b16 %v1657, %v1657
  %1666 = vst [vmem:[%s8 + $0x10] sm:$0xf] %v1658
  %1667 = vst [vmem:[%s8 + $0x14] sm:$0xf] %v1659
  %1668 = vst [vmem:[%s8 + $0x18] sm:$0xf] %v1660
  %1669 = vst [vmem:[%s8 + $0x1c] sm:$0xf] %v1661
  %1670 = vmatprep.subr.bf16.mxu0 %v1197
  %1671 = vmatpush1.bf16.msra.mxu0 %v1196
  %1672 = vmatprep.subr.bf16.mxu0 %v1200
  %1673 = vmatpush1.bf16.msra.mxu0 %v1199
  %1674 = vmatprep.subr.bf16.mxu0 %v1203
  %1675 = vmatpush1.bf16.msra.mxu0 %v1202
  %1676 = vmatprep.subr.bf16.mxu0 %v1206
  %1677 = vmatpush1.bf16.msra.mxu0 %v1205
  %1678 = vmatprep.subr.bf16.mxu0 %v1209
  %1679 = vmatpush1.bf16.msra.mxu0 %v1208
  %1680 = vmatprep.subr.bf16.mxu0 %v1212
  %1681 = vmatpush1.bf16.msra.mxu0 %v1211
  %1682 = vmatprep.subr.bf16.mxu0 %v1215
  %1683 = vmatpush1.bf16.msra.mxu0 %v1214
  %1684 = vmatprep.subr.bf16.mxu0 %v1218
  %1685 = vmatpush1.bf16.msra.mxu0 %v1217
  %1686 = vmatprep.subr.bf16.mxu0 0
  %1687 = vmatpush1.bf16.msra.mxu0 0
  %1688 = vmatprep.subr.bf16.mxu0 0
  %1689 = vmatpush1.bf16.msra.mxu0 0
  %1690 = vmatprep.subr.bf16.mxu0 0
  %1691 = vmatpush1.bf16.msra.mxu0 0
  %1692 = vmatprep.subr.bf16.mxu0 0
  %1693 = vmatpush1.bf16.msra.mxu0 0
  %1694 = vmatprep.subr.bf16.mxu0 0
  %1695 = vmatpush1.bf16.msra.mxu0 0
  %1696 = vmatprep.subr.bf16.mxu0 0
  %1697 = vmatpush1.bf16.msra.mxu0 0
  %1698 = vmatprep.subr.bf16.mxu0 0
  %1699 = vmatpush1.bf16.msra.mxu0 0
  %1700 = vmatprep.subr.bf16.mxu0 0
  %1701 = vmatpush1.bf16.msra.mxu0 0
  %1702 = vmatprep.mubr.bf16.mxu0 0
  %1703 = vmatmul.mubr.bf16.gmra.mrb[0].mxu0 %v1650
  %v1704 = vpop.f32.mrb[0].mxu0
  %v1705 = vadd.f32 0.0, %v1704
  %v1706 = vpop.f32.mrb[0].mxu0
  %v1707 = vadd.f32 0.0, %v1706
  %v1708 = vpop.f32.mrb[0].mxu0
  %v1709 = vadd.f32 0.0, %v1708
  %v1710 = vpop.f32.mrb[0].mxu0
  %v1711 = vadd.f32 0.0, %v1710
  %1712 = vmatprep.mubr.bf16.mxu0 0
  %1713 = vmatmul.mubr.bf16.gmra.mrb[0].mxu0 %v1651
  %v1714 = vpop.f32.mrb[0].mxu0
  %v1715 = vadd.f32 0.0, %v1714
  %v1716 = vpop.f32.mrb[0].mxu0
  %v1717 = vadd.f32 0.0, %v1716
  %v1718 = vpop.f32.mrb[0].mxu0
  %v1719 = vadd.f32 0.0, %v1718
  %v1720 = vpop.f32.mrb[0].mxu0
  %v1721 = vadd.f32 0.0, %v1720
  %1722 = vdwg.mxu0
  %1723 = vmatprep.subr.bf16.mxu0 0
  %1724 = vmatpush1.bf16.msra.mxu0 %v1198
  %1725 = vmatprep.subr.bf16.mxu0 0
  %1726 = vmatpush1.bf16.msra.mxu0 %v1201
  %1727 = vmatprep.subr.bf16.mxu0 0
  %1728 = vmatpush1.bf16.msra.mxu0 %v1204
  %1729 = vmatprep.subr.bf16.mxu0 0
  %1730 = vmatpush1.bf16.msra.mxu0 %v1207
  %1731 = vmatprep.subr.bf16.mxu0 0
  %1732 = vmatpush1.bf16.msra.mxu0 %v1210
  %1733 = vmatprep.subr.bf16.mxu0 0
  %1734 = vmatpush1.bf16.msra.mxu0 %v1213
  %1735 = vmatprep.subr.bf16.mxu0 0
  %1736 = vmatpush1.bf16.msra.mxu0 %v1216
  %1737 = vmatprep.subr.bf16.mxu0 0
  %1738 = vmatpush1.bf16.msra.mxu0 %v1219
  %1739 = vmatprep.subr.bf16.mxu0 0
  %1740 = vmatpush1.bf16.msra.mxu0 0
  %1741 = vmatprep.subr.bf16.mxu0 0
  %1742 = vmatpush1.bf16.msra.mxu0 0
  %1743 = vmatprep.subr.bf16.mxu0 0
  %1744 = vmatpush1.bf16.msra.mxu0 0
  %1745 = vmatprep.subr.bf16.mxu0 0
  %1746 = vmatpush1.bf16.msra.mxu0 0
  %1747 = vmatprep.subr.bf16.mxu0 0
  %1748 = vmatpush1.bf16.msra.mxu0 0
  %1749 = vmatprep.subr.bf16.mxu0 0
  %1750 = vmatpush1.bf16.msra.mxu0 0
  %1751 = vmatprep.subr.bf16.mxu0 0
  %1752 = vmatpush1.bf16.msra.mxu0 0
  %1753 = vmatprep.subr.bf16.mxu0 0
  %1754 = vmatpush1.bf16.msra.mxu0 0
  %1755 = vmatprep.mubr.bf16.mxu0 0
  %1756 = vmatmul.mubr.bf16.gmra.mrb[0].mxu0 %v1650
  %v1757 = vpop.f32.mrb[0].mxu0
  %v1758 = vadd.f32 0.0, %v1757
  %v1759 = vpop.f32.mrb[0].mxu0
  %v1760 = vpop.f32.mrb[0].mxu0
  %v1761 = vadd.f32 0.0, %v1760
  %v1762 = vpop.f32.mrb[0].mxu0
  %1763 = vmatprep.mubr.bf16.mxu0 0
  %1764 = vmatmul.mubr.bf16.gmra.mrb[0].mxu0 %v1651
  %v1765 = vpop.f32.mrb[0].mxu0
  %v1766 = vadd.f32 0.0, %v1765
  %v1767 = vpop.f32.mrb[0].mxu0
  %v1768 = vpop.f32.mrb[0].mxu0
  %v1769 = vadd.f32 0.0, %v1768
  %v1770 = vpop.f32.mrb[0].mxu0
  %1771 = vdwg.mxu0
  %v1772 = vadd.f32 %v802, %v1705
  %v1773 = vadd.f32 %v806, %v1709
  %v1774 = vadd.f32 %v812, %v1715
  %v1775 = vadd.f32 %v816, %v1719
  %v1776 = vxor.u32 %v1772, 2147483648
  %v1777 = vxor.u32 %v1773, 2147483648
  %v1778 = vxor.u32 %v1774, 2147483648
  %v1779 = vxor.u32 %v1775, 2147483648
  %v1780 = vmul.f32 %v1776, 1.442695
  %v1781 = vpow.pop %v1780
  %v1782 = vmul.f32 %v1777, 1.442695
  %v1783 = vpow.pop %v1782
  %v1784 = vmul.f32 %v1778, 1.442695
  %v1785 = vpow.pop %v1784
  %v1786 = vmul.f32 %v1779, 1.442695
  %v1787 = vpow.pop %v1786
  %v1788 = vadd.f32 %v1781, 1.0
  %v1789 = vadd.f32 %v1783, 1.0
  %v1790 = vadd.f32 %v1785, 1.0
  %v1791 = vadd.f32 %v1787, 1.0
  %v1792 = vrcp.pop %v1788
  %v1793 = vmul.f32 1.0, %v1792
  %v1794 = vrcp.pop %v1789
  %v1795 = vmul.f32 1.0, %v1794
  %v1796 = vrcp.pop %v1790
  %v1797 = vmul.f32 1.0, %v1796
  %v1798 = vrcp.pop %v1791
  %v1799 = vmul.f32 1.0, %v1798
  %v1800 = vadd.f32 %v804, %v1707
  %v1801 = vadd.f32 %v808, %v1711
  %v1802 = vadd.f32 %v814, %v1717
  %v1803 = vadd.f32 %v818, %v1721
  %v1804 = vxor.u32 %v1800, 2147483648
  %v1805 = vxor.u32 %v1801, 2147483648
  %v1806 = vxor.u32 %v1802, 2147483648
  %v1807 = vxor.u32 %v1803, 2147483648
  %v1808 = vmul.f32 %v1804, 1.442695
  %v1809 = vpow.pop %v1808
  %v1810 = vmul.f32 %v1805, 1.442695
  %v1811 = vpow.pop %v1810
  %v1812 = vmul.f32 %v1806, 1.442695
  %v1813 = vpow.pop %v1812
  %v1814 = vmul.f32 %v1807, 1.442695
  %v1815 = vpow.pop %v1814
  %v1816 = vadd.f32 %v1809, 1.0
  %v1817 = vadd.f32 %v1811, 1.0
  %v1818 = vadd.f32 %v1813, 1.0
  %v1819 = vadd.f32 %v1815, 1.0
  %v1820 = vrcp.pop %v1816
  %v1821 = vmul.f32 1.0, %v1820
  %v1822 = vrcp.pop %v1817
  %v1823 = vmul.f32 1.0, %v1822
  %v1824 = vrcp.pop %v1818
  %v1825 = vmul.f32 1.0, %v1824
  %v1826 = vrcp.pop %v1819
  %v1827 = vmul.f32 1.0, %v1826
  %v1828 = vadd.f32 %v1758, %v1406
  %v1829 = vadd.f32 %v1761, %v1406
  %v1830 = vadd.f32 %v1766, %v1406
  %v1831 = vadd.f32 %v1769, %v1406
  %v1832 = vmul.f32 %v1793, %v1828
  %v1833 = vmul.f32 %v1795, %v1829
  %v1834 = vmul.f32 %v1797, %v1830
  %v1835 = vmul.f32 %v1799, %v1831
  %v1836 = vadd.f32 %v987, %v1832
  %v1837 = vadd.f32 %v990, %v1833
  %v1838 = vadd.f32 %v995, %v1834
  %v1839 = vadd.f32 %v998, %v1835
  %v1840 = vtanh.pop %v1836
  %v1841 = vtanh.pop %v1837
  %v1842 = vtanh.pop %v1838
  %v1843 = vtanh.pop %v1839
  %v1844 = vsub.f32 1.0, %v1821
  %v1845 = vsub.f32 1.0, %v1823
  %v1846 = vsub.f32 1.0, %v1825
  %v1847 = vsub.f32 1.0, %v1827
  %v1848 = vmul.f32 %v1844, %v1840
  %v1849 = vmul.f32 %v1845, %v1841
  %v1850 = vmul.f32 %v1846, %v1842
  %v1851 = vmul.f32 %v1847, %v1843
  %v1852 = vmul.f32 %v1821, %v1646
  %v1853 = vmul.f32 %v1823, %v1647
  %v1854 = vmul.f32 %v1825, %v1648
  %v1855 = vmul.f32 %v1827, %v1649
  %v1856 = vadd.f32 %v1848, %v1852
  %v1857 = vadd.f32 %v1849, %v1853
  %v1858 = vadd.f32 %v1850, %v1854
  %v1859 = vadd.f32 %v1851, %v1855
  %v1860 = vpack.c.bf16 %v1857, %v1856
  %v1861 = vpack.c.bf16 %v1859, %v1858
  %v1864 = vunpack.c.l.b16 %v1860
  %v1865 = vunpack.c.h.b16 %v1860
  %v1866 = vunpack.c.l.b16 %v1861
  %v1867 = vunpack.c.h.b16 %v1861
  %v1868 = vpack.c.b16 %v1864, %v1864
  %v1869 = vpack.c.b16 %v1865, %v1865
  %v1870 = vpack.c.b16 %v1866, %v1866
  %v1871 = vpack.c.b16 %v1867, %v1867
  %1876 = vst [vmem:[%s8 + $0x20] sm:$0xf] %v1868
  %1877 = vst [vmem:[%s8 + $0x24] sm:$0xf] %v1869
  %1878 = vst [vmem:[%s8 + $0x28] sm:$0xf] %v1870
  %1879 = vst [vmem:[%s8 + $0x2c] sm:$0xf] %v1871
  %1880 = vmatprep.subr.bf16.mxu0 %v1197
  %1881 = vmatpush1.bf16.msra.mxu0 %v1196
  %1882 = vmatprep.subr.bf16.mxu0 %v1200
  %1883 = vmatpush1.bf16.msra.mxu0 %v1199
  %1884 = vmatprep.subr.bf16.mxu0 %v1203
  %1885 = vmatpush1.bf16.msra.mxu0 %v1202
  %1886 = vmatprep.subr.bf16.mxu0 %v1206
  %1887 = vmatpush1.bf16.msra.mxu0 %v1205
  %1888 = vmatprep.subr.bf16.mxu0 %v1209
  %1889 = vmatpush1.bf16.msra.mxu0 %v1208
  %1890 = vmatprep.subr.bf16.mxu0 %v1212
  %1891 = vmatpush1.bf16.msra.mxu0 %v1211
  %1892 = vmatprep.subr.bf16.mxu0 %v1215
  %1893 = vmatpush1.bf16.msra.mxu0 %v1214
  %1894 = vmatprep.subr.bf16.mxu0 %v1218
  %1895 = vmatpush1.bf16.msra.mxu0 %v1217
  %1896 = vmatprep.subr.bf16.mxu0 0
  %1897 = vmatpush1.bf16.msra.mxu0 0
  %1898 = vmatprep.subr.bf16.mxu0 0
  %1899 = vmatpush1.bf16.msra.mxu0 0
  %1900 = vmatprep.subr.bf16.mxu0 0
  %1901 = vmatpush1.bf16.msra.mxu0 0
  %1902 = vmatprep.subr.bf16.mxu0 0
  %1903 = vmatpush1.bf16.msra.mxu0 0
  %1904 = vmatprep.subr.bf16.mxu0 0
  %1905 = vmatpush1.bf16.msra.mxu0 0
  %1906 = vmatprep.subr.bf16.mxu0 0
  %1907 = vmatpush1.bf16.msra.mxu0 0
  %1908 = vmatprep.subr.bf16.mxu0 0
  %1909 = vmatpush1.bf16.msra.mxu0 0
  %1910 = vmatprep.subr.bf16.mxu0 0
  %1911 = vmatpush1.bf16.msra.mxu0 0
  %1912 = vmatprep.mubr.bf16.mxu0 0
  %1913 = vmatmul.mubr.bf16.gmra.mrb[0].mxu0 %v1860
  %v1914 = vpop.f32.mrb[0].mxu0
  %v1915 = vadd.f32 0.0, %v1914
  %v1916 = vpop.f32.mrb[0].mxu0
  %v1917 = vadd.f32 0.0, %v1916
  %v1918 = vpop.f32.mrb[0].mxu0
  %v1919 = vadd.f32 0.0, %v1918
  %v1920 = vpop.f32.mrb[0].mxu0
  %v1921 = vadd.f32 0.0, %v1920
  %1922 = vmatprep.mubr.bf16.mxu0 0
  %1923 = vmatmul.mubr.bf16.gmra.mrb[0].mxu0 %v1861
  %v1924 = vpop.f32.mrb[0].mxu0
  %v1925 = vadd.f32 0.0, %v1924
  %v1926 = vpop.f32.mrb[0].mxu0
  %v1927 = vadd.f32 0.0, %v1926
  %v1928 = vpop.f32.mrb[0].mxu0
  %v1929 = vadd.f32 0.0, %v1928
  %v1930 = vpop.f32.mrb[0].mxu0
  %v1931 = vadd.f32 0.0, %v1930
  %1932 = vdwg.mxu0
  %1933 = vmatprep.subr.bf16.mxu0 0
  %1934 = vmatpush1.bf16.msra.mxu0 %v1198
  %1935 = vmatprep.subr.bf16.mxu0 0
  %1936 = vmatpush1.bf16.msra.mxu0 %v1201
  %1937 = vmatprep.subr.bf16.mxu0 0
  %1938 = vmatpush1.bf16.msra.mxu0 %v1204
  %1939 = vmatprep.subr.bf16.mxu0 0
  %1940 = vmatpush1.bf16.msra.mxu0 %v1207
  %1941 = vmatprep.subr.bf16.mxu0 0
  %1942 = vmatpush1.bf16.msra.mxu0 %v1210
  %1943 = vmatprep.subr.bf16.mxu0 0
  %1944 = vmatpush1.bf16.msra.mxu0 %v1213
  %1945 = vmatprep.subr.bf16.mxu0 0
  %1946 = vmatpush1.bf16.msra.mxu0 %v1216
  %1947 = vmatprep.subr.bf16.mxu0 0
  %1948 = vmatpush1.bf16.msra.mxu0 %v1219
  %1949 = vmatprep.subr.bf16.mxu0 0
  %1950 = vmatpush1.bf16.msra.mxu0 0
  %1951 = vmatprep.subr.bf16.mxu0 0
  %1952 = vmatpush1.bf16.msra.mxu0 0
  %1953 = vmatprep.subr.bf16.mxu0 0
  %1954 = vmatpush1.bf16.msra.mxu0 0
  %1955 = vmatprep.subr.bf16.mxu0 0
  %1956 = vmatpush1.bf16.msra.mxu0 0
  %1957 = vmatprep.subr.bf16.mxu0 0
  %1958 = vmatpush1.bf16.msra.mxu0 0
  %1959 = vmatprep.subr.bf16.mxu0 0
  %1960 = vmatpush1.bf16.msra.mxu0 0
  %1961 = vmatprep.subr.bf16.mxu0 0
  %1962 = vmatpush1.bf16.msra.mxu0 0
  %1963 = vmatprep.subr.bf16.mxu0 0
  %1964 = vmatpush1.bf16.msra.mxu0 0
  %1965 = vmatprep.mubr.bf16.mxu0 0
  %1966 = vmatmul.mubr.bf16.gmra.mrb[0].mxu0 %v1860
  %v1967 = vpop.f32.mrb[0].mxu0
  %v1968 = vadd.f32 0.0, %v1967
  %v1969 = vpop.f32.mrb[0].mxu0
  %v1970 = vpop.f32.mrb[0].mxu0
  %v1971 = vadd.f32 0.0, %v1970
  %v1972 = vpop.f32.mrb[0].mxu0
  %1973 = vmatprep.mubr.bf16.mxu0 0
  %1974 = vmatmul.mubr.bf16.gmra.mrb[0].mxu0 %v1861
  %v1975 = vpop.f32.mrb[0].mxu0
  %v1976 = vadd.f32 0.0, %v1975
  %v1977 = vpop.f32.mrb[0].mxu0
  %v1978 = vpop.f32.mrb[0].mxu0
  %v1979 = vadd.f32 0.0, %v1978
  %v1980 = vpop.f32.mrb[0].mxu0
  %1981 = vdwg.mxu0
  %v1982 = vadd.f32 %v822, %v1915
  %v1983 = vadd.f32 %v826, %v1919
  %v1984 = vadd.f32 %v832, %v1925
  %v1985 = vadd.f32 %v836, %v1929
  %v1986 = vxor.u32 %v1982, 2147483648
  %v1987 = vxor.u32 %v1983, 2147483648
  %v1988 = vxor.u32 %v1984, 2147483648
  %v1989 = vxor.u32 %v1985, 2147483648
  %v1990 = vmul.f32 %v1986, 1.442695
  %v1991 = vpow.pop %v1990
  %v1992 = vmul.f32 %v1987, 1.442695
  %v1993 = vpow.pop %v1992
  %v1994 = vmul.f32 %v1988, 1.442695
  %v1995 = vpow.pop %v1994
  %v1996 = vmul.f32 %v1989, 1.442695
  %v1997 = vpow.pop %v1996
  %v1998 = vadd.f32 %v1991, 1.0
  %v1999 = vadd.f32 %v1993, 1.0
  %v2000 = vadd.f32 %v1995, 1.0
  %v2001 = vadd.f32 %v1997, 1.0
  %v2002 = vrcp.pop %v1998
  %v2003 = vmul.f32 1.0, %v2002
  %v2004 = vrcp.pop %v1999
  %v2005 = vmul.f32 1.0, %v2004
  %v2006 = vrcp.pop %v2000
  %v2007 = vmul.f32 1.0, %v2006
  %v2008 = vrcp.pop %v2001
  %v2009 = vmul.f32 1.0, %v2008
  %v2010 = vadd.f32 %v824, %v1917
  %v2011 = vadd.f32 %v828, %v1921
  %v2012 = vadd.f32 %v834, %v1927
  %v2013 = vadd.f32 %v838, %v1931
  %v2014 = vxor.u32 %v2010, 2147483648
  %v2015 = vxor.u32 %v2011, 2147483648
  %v2016 = vxor.u32 %v2012, 2147483648
  %v2017 = vxor.u32 %v2013, 2147483648
  %v2018 = vmul.f32 %v2014, 1.442695
  %v2019 = vpow.pop %v2018
  %v2020 = vmul.f32 %v2015, 1.442695
  %v2021 = vpow.pop %v2020
  %v2022 = vmul.f32 %v2016, 1.442695
  %v2023 = vpow.pop %v2022
  %v2024 = vmul.f32 %v2017, 1.442695
  %v2025 = vpow.pop %v2024
  %v2026 = vadd.f32 %v2019, 1.0
  %v2027 = vadd.f32 %v2021, 1.0
  %v2028 = vadd.f32 %v2023, 1.0
  %v2029 = vadd.f32 %v2025, 1.0
  %v2030 = vrcp.pop %v2026
  %v2031 = vmul.f32 1.0, %v2030
  %v2032 = vrcp.pop %v2027
  %v2033 = vmul.f32 1.0, %v2032
  %v2034 = vrcp.pop %v2028
  %v2035 = vmul.f32 1.0, %v2034
  %v2036 = vrcp.pop %v2029
  %v2037 = vmul.f32 1.0, %v2036
  %v2038 = vadd.f32 %v1968, %v1406
  %v2039 = vadd.f32 %v1971, %v1406
  %v2040 = vadd.f32 %v1976, %v1406
  %v2041 = vadd.f32 %v1979, %v1406
  %v2042 = vmul.f32 %v2003, %v2038
  %v2043 = vmul.f32 %v2005, %v2039
  %v2044 = vmul.f32 %v2007, %v2040
  %v2045 = vmul.f32 %v2009, %v2041
  %v2046 = vadd.f32 %v1003, %v2042
  %v2047 = vadd.f32 %v1006, %v2043
  %v2048 = vadd.f32 %v1011, %v2044
  %v2049 = vadd.f32 %v1014, %v2045
  %v2050 = vtanh.pop %v2046
  %v2051 = vtanh.pop %v2047
  %v2052 = vtanh.pop %v2048
  %v2053 = vtanh.pop %v2049
  %v2054 = vsub.f32 1.0, %v2031
  %v2055 = vsub.f32 1.0, %v2033
  %v2056 = vsub.f32 1.0, %v2035
  %v2057 = vsub.f32 1.0, %v2037
  %v2058 = vmul.f32 %v2054, %v2050
  %v2059 = vmul.f32 %v2055, %v2051
  %v2060 = vmul.f32 %v2056, %v2052
  %v2061 = vmul.f32 %v2057, %v2053
  %v2062 = vmul.f32 %v2031, %v1856
  %v2063 = vmul.f32 %v2033, %v1857
  %v2064 = vmul.f32 %v2035, %v1858
  %v2065 = vmul.f32 %v2037, %v1859
  %v2066 = vadd.f32 %v2058, %v2062
  %v2067 = vadd.f32 %v2059, %v2063
  %v2068 = vadd.f32 %v2060, %v2064
  %v2069 = vadd.f32 %v2061, %v2065
  %v2070 = vpack.c.bf16 %v2067, %v2066
  %v2071 = vpack.c.bf16 %v2069, %v2068
  %v2074 = vunpack.c.l.b16 %v2070
  %v2075 = vunpack.c.h.b16 %v2070
  %v2076 = vunpack.c.l.b16 %v2071
  %v2077 = vunpack.c.h.b16 %v2071
  %v2078 = vpack.c.b16 %v2074, %v2074
  %v2079 = vpack.c.b16 %v2075, %v2075
  %v2080 = vpack.c.b16 %v2076, %v2076
  %v2081 = vpack.c.b16 %v2077, %v2077
  %2086 = vst [vmem:[%s8 + $0x30] sm:$0xf] %v2078
  %2087 = vst [vmem:[%s8 + $0x34] sm:$0xf] %v2079
  %2088 = vst [vmem:[%s8 + $0x38] sm:$0xf] %v2080
  %2089 = vst [vmem:[%s8 + $0x3c] sm:$0xf] %v2081
  %2090 = vmatprep.subr.bf16.mxu0 %v1197
  %2091 = vmatpush1.bf16.msra.mxu0 %v1196
  %2092 = vmatprep.subr.bf16.mxu0 %v1200
  %2093 = vmatpush1.bf16.msra.mxu0 %v1199
  %2094 = vmatprep.subr.bf16.mxu0 %v1203
  %2095 = vmatpush1.bf16.msra.mxu0 %v1202
  %2096 = vmatprep.subr.bf16.mxu0 %v1206
  %2097 = vmatpush1.bf16.msra.mxu0 %v1205
  %2098 = vmatprep.subr.bf16.mxu0 %v1209
  %2099 = vmatpush1.bf16.msra.mxu0 %v1208
  %2100 = vmatprep.subr.bf16.mxu0 %v1212
  %2101 = vmatpush1.bf16.msra.mxu0 %v1211
  %2102 = vmatprep.subr.bf16.mxu0 %v1215
  %2103 = vmatpush1.bf16.msra.mxu0 %v1214
  %2104 = vmatprep.subr.bf16.mxu0 %v1218
  %2105 = vmatpush1.bf16.msra.mxu0 %v1217
  %2106 = vmatprep.subr.bf16.mxu0 0
  %2107 = vmatpush1.bf16.msra.mxu0 0
  %2108 = vmatprep.subr.bf16.mxu0 0
  %2109 = vmatpush1.bf16.msra.mxu0 0
  %2110 = vmatprep.subr.bf16.mxu0 0
  %2111 = vmatpush1.bf16.msra.mxu0 0
  %2112 = vmatprep.subr.bf16.mxu0 0
  %2113 = vmatpush1.bf16.msra.mxu0 0
  %2114 = vmatprep.subr.bf16.mxu0 0
  %2115 = vmatpush1.bf16.msra.mxu0 0
  %2116 = vmatprep.subr.bf16.mxu0 0
  %2117 = vmatpush1.bf16.msra.mxu0 0
  %2118 = vmatprep.subr.bf16.mxu0 0
  %2119 = vmatpush1.bf16.msra.mxu0 0
  %2120 = vmatprep.subr.bf16.mxu0 0
  %2121 = vmatpush1.bf16.msra.mxu0 0
  %2122 = vmatprep.mubr.bf16.mxu0 0
  %2123 = vmatmul.mubr.bf16.gmra.mrb[0].mxu0 %v2070
  %v2124 = vpop.f32.mrb[0].mxu0
  %v2125 = vadd.f32 0.0, %v2124
  %v2126 = vpop.f32.mrb[0].mxu0
  %v2127 = vadd.f32 0.0, %v2126
  %v2128 = vpop.f32.mrb[0].mxu0
  %v2129 = vadd.f32 0.0, %v2128
  %v2130 = vpop.f32.mrb[0].mxu0
  %v2131 = vadd.f32 0.0, %v2130
  %2132 = vmatprep.mubr.bf16.mxu0 0
  %2133 = vmatmul.mubr.bf16.gmra.mrb[0].mxu0 %v2071
  %v2134 = vpop.f32.mrb[0].mxu0
  %v2135 = vadd.f32 0.0, %v2134
  %v2136 = vpop.f32.mrb[0].mxu0
  %v2137 = vadd.f32 0.0, %v2136
  %v2138 = vpop.f32.mrb[0].mxu0
  %v2139 = vadd.f32 0.0, %v2138
  %v2140 = vpop.f32.mrb[0].mxu0
  %v2141 = vadd.f32 0.0, %v2140
  %2142 = vdwg.mxu0
  %2143 = vmatprep.subr.bf16.mxu0 0
  %2144 = vmatpush1.bf16.msra.mxu0 %v1198
  %2145 = vmatprep.subr.bf16.mxu0 0
  %2146 = vmatpush1.bf16.msra.mxu0 %v1201
  %2147 = vmatprep.subr.bf16.mxu0 0
  %2148 = vmatpush1.bf16.msra.mxu0 %v1204
  %2149 = vmatprep.subr.bf16.mxu0 0
  %2150 = vmatpush1.bf16.msra.mxu0 %v1207
  %2151 = vmatprep.subr.bf16.mxu0 0
  %2152 = vmatpush1.bf16.msra.mxu0 %v1210
  %2153 = vmatprep.subr.bf16.mxu0 0
  %2154 = vmatpush1.bf16.msra.mxu0 %v1213
  %2155 = vmatprep.subr.bf16.mxu0 0
  %2156 = vmatpush1.bf16.msra.mxu0 %v1216
  %2157 = vmatprep.subr.bf16.mxu0 0
  %2158 = vmatpush1.bf16.msra.mxu0 %v1219
  %2159 = vmatprep.subr.bf16.mxu0 0
  %2160 = vmatpush1.bf16.msra.mxu0 0
  %2161 = vmatprep.subr.bf16.mxu0 0
  %2162 = vmatpush1.bf16.msra.mxu0 0
  %2163 = vmatprep.subr.bf16.mxu0 0
  %2164 = vmatpush1.bf16.msra.mxu0 0
  %2165 = vmatprep.subr.bf16.mxu0 0
  %2166 = vmatpush1.bf16.msra.mxu0 0
  %2167 = vmatprep.subr.bf16.mxu0 0
  %2168 = vmatpush1.bf16.msra.mxu0 0
  %2169 = vmatprep.subr.bf16.mxu0 0
  %2170 = vmatpush1.bf16.msra.mxu0 0
  %2171 = vmatprep.subr.bf16.mxu0 0
  %2172 = vmatpush1.bf16.msra.mxu0 0
  %2173 = vmatprep.subr.bf16.mxu0 0
  %2174 = vmatpush1.bf16.msra.mxu0 0
  %2175 = vmatprep.mubr.bf16.mxu0 0
  %2176 = vmatmul.mubr.bf16.gmra.mrb[0].mxu0 %v2070
  %v2177 = vpop.f32.mrb[0].mxu0
  %v2178 = vadd.f32 0.0, %v2177
  %v2179 = vpop.f32.mrb[0].mxu0
  %v2180 = vpop.f32.mrb[0].mxu0
  %v2181 = vadd.f32 0.0, %v2180
  %v2182 = vpop.f32.mrb[0].mxu0
  %2183 = vmatprep.mubr.bf16.mxu0 0
  %2184 = vmatmul.mubr.bf16.gmra.mrb[0].mxu0 %v2071
  %v2185 = vpop.f32.mrb[0].mxu0
  %v2186 = vadd.f32 0.0, %v2185
  %v2187 = vpop.f32.mrb[0].mxu0
  %v2188 = vpop.f32.mrb[0].mxu0
  %v2189 = vadd.f32 0.0, %v2188
  %v2190 = vpop.f32.mrb[0].mxu0
  %2191 = vdwg.mxu0
  %v2192 = vadd.f32 %v842, %v2125
  %v2193 = vadd.f32 %v846, %v2129
  %v2194 = vadd.f32 %v852, %v2135
  %v2195 = vadd.f32 %v856, %v2139
  %v2196 = vxor.u32 %v2192, 2147483648
  %v2197 = vxor.u32 %v2193, 2147483648
  %v2198 = vxor.u32 %v2194, 2147483648
  %v2199 = vxor.u32 %v2195, 2147483648
  %v2200 = vmul.f32 %v2196, 1.442695
  %v2201 = vpow.pop %v2200
  %v2202 = vmul.f32 %v2197, 1.442695
  %v2203 = vpow.pop %v2202
  %v2204 = vmul.f32 %v2198, 1.442695
  %v2205 = vpow.pop %v2204
  %v2206 = vmul.f32 %v2199, 1.442695
  %v2207 = vpow.pop %v2206
  %v2208 = vadd.f32 %v2201, 1.0
  %v2209 = vadd.f32 %v2203, 1.0
  %v2210 = vadd.f32 %v2205, 1.0
  %v2211 = vadd.f32 %v2207, 1.0
  %v2212 = vrcp.pop %v2208
  %v2213 = vmul.f32 1.0, %v2212
  %v2214 = vrcp.pop %v2209
  %v2215 = vmul.f32 1.0, %v2214
  %v2216 = vrcp.pop %v2210
  %v2217 = vmul.f32 1.0, %v2216
  %v2218 = vrcp.pop %v2211
  %v2219 = vmul.f32 1.0, %v2218
  %v2220 = vadd.f32 %v844, %v2127
  %v2221 = vadd.f32 %v848, %v2131
  %v2222 = vadd.f32 %v854, %v2137
  %v2223 = vadd.f32 %v858, %v2141
  %v2224 = vxor.u32 %v2220, 2147483648
  %v2225 = vxor.u32 %v2221, 2147483648
  %v2226 = vxor.u32 %v2222, 2147483648
  %v2227 = vxor.u32 %v2223, 2147483648
  %v2228 = vmul.f32 %v2224, 1.442695
  %v2229 = vpow.pop %v2228
  %v2230 = vmul.f32 %v2225, 1.442695
  %v2231 = vpow.pop %v2230
  %v2232 = vmul.f32 %v2226, 1.442695
  %v2233 = vpow.pop %v2232
  %v2234 = vmul.f32 %v2227, 1.442695
  %v2235 = vpow.pop %v2234
  %v2236 = vadd.f32 %v2229, 1.0
  %v2237 = vadd.f32 %v2231, 1.0
  %v2238 = vadd.f32 %v2233, 1.0
  %v2239 = vadd.f32 %v2235, 1.0
  %v2240 = vrcp.pop %v2236
  %v2241 = vmul.f32 1.0, %v2240
  %v2242 = vrcp.pop %v2237
  %v2243 = vmul.f32 1.0, %v2242
  %v2244 = vrcp.pop %v2238
  %v2245 = vmul.f32 1.0, %v2244
  %v2246 = vrcp.pop %v2239
  %v2247 = vmul.f32 1.0, %v2246
  %v2248 = vadd.f32 %v2178, %v1406
  %v2249 = vadd.f32 %v2181, %v1406
  %v2250 = vadd.f32 %v2186, %v1406
  %v2251 = vadd.f32 %v2189, %v1406
  %v2252 = vmul.f32 %v2213, %v2248
  %v2253 = vmul.f32 %v2215, %v2249
  %v2254 = vmul.f32 %v2217, %v2250
  %v2255 = vmul.f32 %v2219, %v2251
  %v2256 = vadd.f32 %v1019, %v2252
  %v2257 = vadd.f32 %v1022, %v2253
  %v2258 = vadd.f32 %v1027, %v2254
  %v2259 = vadd.f32 %v1030, %v2255
  %v2260 = vtanh.pop %v2256
  %v2261 = vtanh.pop %v2257
  %v2262 = vtanh.pop %v2258
  %v2263 = vtanh.pop %v2259
  %v2264 = vsub.f32 1.0, %v2241
  %v2265 = vsub.f32 1.0, %v2243
  %v2266 = vsub.f32 1.0, %v2245
  %v2267 = vsub.f32 1.0, %v2247
  %v2268 = vmul.f32 %v2264, %v2260
  %v2269 = vmul.f32 %v2265, %v2261
  %v2270 = vmul.f32 %v2266, %v2262
  %v2271 = vmul.f32 %v2267, %v2263
  %v2272 = vmul.f32 %v2241, %v2066
  %v2273 = vmul.f32 %v2243, %v2067
  %v2274 = vmul.f32 %v2245, %v2068
  %v2275 = vmul.f32 %v2247, %v2069
  %v2276 = vadd.f32 %v2268, %v2272
  %v2277 = vadd.f32 %v2269, %v2273
  %v2278 = vadd.f32 %v2270, %v2274
  %v2279 = vadd.f32 %v2271, %v2275
  %v2280 = vpack.c.bf16 %v2277, %v2276
  %v2281 = vpack.c.bf16 %v2279, %v2278
  %v2284 = vunpack.c.l.b16 %v2280
  %v2285 = vunpack.c.h.b16 %v2280
  %v2286 = vunpack.c.l.b16 %v2281
  %v2287 = vunpack.c.h.b16 %v2281
  %v2288 = vpack.c.b16 %v2284, %v2284
  %v2289 = vpack.c.b16 %v2285, %v2285
  %v2290 = vpack.c.b16 %v2286, %v2286
  %v2291 = vpack.c.b16 %v2287, %v2287
  %2296 = vst [vmem:[%s8 + $0x40] sm:$0xf] %v2288
  %2297 = vst [vmem:[%s8 + $0x44] sm:$0xf] %v2289
  %2298 = vst [vmem:[%s8 + $0x48] sm:$0xf] %v2290
  %2299 = vst [vmem:[%s8 + $0x4c] sm:$0xf] %v2291
  %2300 = vmatprep.subr.bf16.mxu0 %v1197
  %2301 = vmatpush1.bf16.msra.mxu0 %v1196
  %2302 = vmatprep.subr.bf16.mxu0 %v1200
  %2303 = vmatpush1.bf16.msra.mxu0 %v1199
  %2304 = vmatprep.subr.bf16.mxu0 %v1203
  %2305 = vmatpush1.bf16.msra.mxu0 %v1202
  %2306 = vmatprep.subr.bf16.mxu0 %v1206
  %2307 = vmatpush1.bf16.msra.mxu0 %v1205
  %2308 = vmatprep.subr.bf16.mxu0 %v1209
  %2309 = vmatpush1.bf16.msra.mxu0 %v1208
  %2310 = vmatprep.subr.bf16.mxu0 %v1212
  %2311 = vmatpush1.bf16.msra.mxu0 %v1211
  %2312 = vmatprep.subr.bf16.mxu0 %v1215
  %2313 = vmatpush1.bf16.msra.mxu0 %v1214
  %2314 = vmatprep.subr.bf16.mxu0 %v1218
  %2315 = vmatpush1.bf16.msra.mxu0 %v1217
  %2316 = vmatprep.subr.bf16.mxu0 0
  %2317 = vmatpush1.bf16.msra.mxu0 0
  %2318 = vmatprep.subr.bf16.mxu0 0
  %2319 = vmatpush1.bf16.msra.mxu0 0
  %2320 = vmatprep.subr.bf16.mxu0 0
  %2321 = vmatpush1.bf16.msra.mxu0 0
  %2322 = vmatprep.subr.bf16.mxu0 0
  %2323 = vmatpush1.bf16.msra.mxu0 0
  %2324 = vmatprep.subr.bf16.mxu0 0
  %2325 = vmatpush1.bf16.msra.mxu0 0
  %2326 = vmatprep.subr.bf16.mxu0 0
  %2327 = vmatpush1.bf16.msra.mxu0 0
  %2328 = vmatprep.subr.bf16.mxu0 0
  %2329 = vmatpush1.bf16.msra.mxu0 0
  %2330 = vmatprep.subr.bf16.mxu0 0
  %2331 = vmatpush1.bf16.msra.mxu0 0
  %2332 = vmatprep.mubr.bf16.mxu0 0
  %2333 = vmatmul.mubr.bf16.gmra.mrb[0].mxu0 %v2280
  %v2334 = vpop.f32.mrb[0].mxu0
  %v2335 = vadd.f32 0.0, %v2334
  %v2336 = vpop.f32.mrb[0].mxu0
  %v2337 = vadd.f32 0.0, %v2336
  %v2338 = vpop.f32.mrb[0].mxu0
  %v2339 = vadd.f32 0.0, %v2338
  %v2340 = vpop.f32.mrb[0].mxu0
  %v2341 = vadd.f32 0.0, %v2340
  %2342 = vmatprep.mubr.bf16.mxu0 0
  %2343 = vmatmul.mubr.bf16.gmra.mrb[0].mxu0 %v2281
  %v2344 = vpop.f32.mrb[0].mxu0
  %v2345 = vadd.f32 0.0, %v2344
  %v2346 = vpop.f32.mrb[0].mxu0
  %v2347 = vadd.f32 0.0, %v2346
  %v2348 = vpop.f32.mrb[0].mxu0
  %v2349 = vadd.f32 0.0, %v2348
  %v2350 = vpop.f32.mrb[0].mxu0
  %v2351 = vadd.f32 0.0, %v2350
  %2352 = vdwg.mxu0
  %2353 = vmatprep.subr.bf16.mxu0 0
  %2354 = vmatpush1.bf16.msra.mxu0 %v1198
  %2355 = vmatprep.subr.bf16.mxu0 0
  %2356 = vmatpush1.bf16.msra.mxu0 %v1201
  %2357 = vmatprep.subr.bf16.mxu0 0
  %2358 = vmatpush1.bf16.msra.mxu0 %v1204
  %2359 = vmatprep.subr.bf16.mxu0 0
  %2360 = vmatpush1.bf16.msra.mxu0 %v1207
  %2361 = vmatprep.subr.bf16.mxu0 0
  %2362 = vmatpush1.bf16.msra.mxu0 %v1210
  %2363 = vmatprep.subr.bf16.mxu0 0
  %2364 = vmatpush1.bf16.msra.mxu0 %v1213
  %2365 = vmatprep.subr.bf16.mxu0 0
  %2366 = vmatpush1.bf16.msra.mxu0 %v1216
  %2367 = vmatprep.subr.bf16.mxu0 0
  %2368 = vmatpush1.bf16.msra.mxu0 %v1219
  %2369 = vmatprep.subr.bf16.mxu0 0
  %2370 = vmatpush1.bf16.msra.mxu0 0
  %2371 = vmatprep.subr.bf16.mxu0 0
  %2372 = vmatpush1.bf16.msra.mxu0 0
  %2373 = vmatprep.subr.bf16.mxu0 0
  %2374 = vmatpush1.bf16.msra.mxu0 0
  %2375 = vmatprep.subr.bf16.mxu0 0
  %2376 = vmatpush1.bf16.msra.mxu0 0
  %2377 = vmatprep.subr.bf16.mxu0 0
  %2378 = vmatpush1.bf16.msra.mxu0 0
  %2379 = vmatprep.subr.bf16.mxu0 0
  %2380 = vmatpush1.bf16.msra.mxu0 0
  %2381 = vmatprep.subr.bf16.mxu0 0
  %2382 = vmatpush1.bf16.msra.mxu0 0
  %2383 = vmatprep.subr.bf16.mxu0 0
  %2384 = vmatpush1.bf16.msra.mxu0 0
  %2385 = vmatprep.mubr.bf16.mxu0 0
  %2386 = vmatmul.mubr.bf16.gmra.mrb[0].mxu0 %v2280
  %v2387 = vpop.f32.mrb[0].mxu0
  %v2388 = vadd.f32 0.0, %v2387
  %v2389 = vpop.f32.mrb[0].mxu0
  %v2390 = vpop.f32.mrb[0].mxu0
  %v2391 = vadd.f32 0.0, %v2390
  %v2392 = vpop.f32.mrb[0].mxu0
  %2393 = vmatprep.mubr.bf16.mxu0 0
  %2394 = vmatmul.mubr.bf16.gmra.mrb[0].mxu0 %v2281
  %v2395 = vpop.f32.mrb[0].mxu0
  %v2396 = vadd.f32 0.0, %v2395
  %v2397 = vpop.f32.mrb[0].mxu0
  %v2398 = vpop.f32.mrb[0].mxu0
  %v2399 = vadd.f32 0.0, %v2398
  %v2400 = vpop.f32.mrb[0].mxu0
  %2401 = vdwg.mxu0
  %v2402 = vadd.f32 %v862, %v2335
  %v2403 = vadd.f32 %v866, %v2339
  %v2404 = vadd.f32 %v872, %v2345
  %v2405 = vadd.f32 %v876, %v2349
  %v2406 = vxor.u32 %v2402, 2147483648
  %v2407 = vxor.u32 %v2403, 2147483648
  %v2408 = vxor.u32 %v2404, 2147483648
  %v2409 = vxor.u32 %v2405, 2147483648
  %v2410 = vmul.f32 %v2406, 1.442695
  %v2411 = vpow.pop %v2410
  %v2412 = vmul.f32 %v2407, 1.442695
  %v2413 = vpow.pop %v2412
  %v2414 = vmul.f32 %v2408, 1.442695
  %v2415 = vpow.pop %v2414
  %v2416 = vmul.f32 %v2409, 1.442695
  %v2417 = vpow.pop %v2416
  %v2418 = vadd.f32 %v2411, 1.0
  %v2419 = vadd.f32 %v2413, 1.0
  %v2420 = vadd.f32 %v2415, 1.0
  %v2421 = vadd.f32 %v2417, 1.0
  %v2422 = vrcp.pop %v2418
  %v2423 = vmul.f32 1.0, %v2422
  %v2424 = vrcp.pop %v2419
  %v2425 = vmul.f32 1.0, %v2424
  %v2426 = vrcp.pop %v2420
  %v2427 = vmul.f32 1.0, %v2426
  %v2428 = vrcp.pop %v2421
  %v2429 = vmul.f32 1.0, %v2428
  %v2430 = vadd.f32 %v864, %v2337
  %v2431 = vadd.f32 %v868, %v2341
  %v2432 = vadd.f32 %v874, %v2347
  %v2433 = vadd.f32 %v878, %v2351
  %v2434 = vxor.u32 %v2430, 2147483648
  %v2435 = vxor.u32 %v2431, 2147483648
  %v2436 = vxor.u32 %v2432, 2147483648
  %v2437 = vxor.u32 %v2433, 2147483648
  %v2438 = vmul.f32 %v2434, 1.442695
  %v2439 = vpow.pop %v2438
  %v2440 = vmul.f32 %v2435, 1.442695
  %v2441 = vpow.pop %v2440
  %v2442 = vmul.f32 %v2436, 1.442695
  %v2443 = vpow.pop %v2442
  %v2444 = vmul.f32 %v2437, 1.442695
  %v2445 = vpow.pop %v2444
  %v2446 = vadd.f32 %v2439, 1.0
  %v2447 = vadd.f32 %v2441, 1.0
  %v2448 = vadd.f32 %v2443, 1.0
  %v2449 = vadd.f32 %v2445, 1.0
  %v2450 = vrcp.pop %v2446
  %v2451 = vmul.f32 1.0, %v2450
  %v2452 = vrcp.pop %v2447
  %v2453 = vmul.f32 1.0, %v2452
  %v2454 = vrcp.pop %v2448
  %v2455 = vmul.f32 1.0, %v2454
  %v2456 = vrcp.pop %v2449
  %v2457 = vmul.f32 1.0, %v2456
  %v2458 = vadd.f32 %v2388, %v1406
  %v2459 = vadd.f32 %v2391, %v1406
  %v2460 = vadd.f32 %v2396, %v1406
  %v2461 = vadd.f32 %v2399, %v1406
  %v2462 = vmul.f32 %v2423, %v2458
  %v2463 = vmul.f32 %v2425, %v2459
  %v2464 = vmul.f32 %v2427, %v2460
  %v2465 = vmul.f32 %v2429, %v2461
  %v2466 = vadd.f32 %v1035, %v2462
  %v2467 = vadd.f32 %v1038, %v2463
  %v2468 = vadd.f32 %v1043, %v2464
  %v2469 = vadd.f32 %v1046, %v2465
  %v2470 = vtanh.pop %v2466
  %v2471 = vtanh.pop %v2467
  %v2472 = vtanh.pop %v2468
  %v2473 = vtanh.pop %v2469
  %v2474 = vsub.f32 1.0, %v2451
  %v2475 = vsub.f32 1.0, %v2453
  %v2476 = vsub.f32 1.0, %v2455
  %v2477 = vsub.f32 1.0, %v2457
  %v2478 = vmul.f32 %v2474, %v2470
  %v2479 = vmul.f32 %v2475, %v2471
  %v2480 = vmul.f32 %v2476, %v2472
  %v2481 = vmul.f32 %v2477, %v2473
  %v2482 = vmul.f32 %v2451, %v2276
  %v2483 = vmul.f32 %v2453, %v2277
  %v2484 = vmul.f32 %v2455, %v2278
  %v2485 = vmul.f32 %v2457, %v2279
  %v2486 = vadd.f32 %v2478, %v2482
  %v2487 = vadd.f32 %v2479, %v2483
  %v2488 = vadd.f32 %v2480, %v2484
  %v2489 = vadd.f32 %v2481, %v2485
  %v2490 = vpack.c.bf16 %v2487, %v2486
  %v2491 = vpack.c.bf16 %v2489, %v2488
  %v2494 = vunpack.c.l.b16 %v2490
  %v2495 = vunpack.c.h.b16 %v2490
  %v2496 = vunpack.c.l.b16 %v2491
  %v2497 = vunpack.c.h.b16 %v2491
  %v2498 = vpack.c.b16 %v2494, %v2494
  %v2499 = vpack.c.b16 %v2495, %v2495
  %v2500 = vpack.c.b16 %v2496, %v2496
  %v2501 = vpack.c.b16 %v2497, %v2497
  %2506 = vst [vmem:[%s8 + $0x50] sm:$0xf] %v2498
  %2507 = vst [vmem:[%s8 + $0x54] sm:$0xf] %v2499
  %2508 = vst [vmem:[%s8 + $0x58] sm:$0xf] %v2500
  %2509 = vst [vmem:[%s8 + $0x5c] sm:$0xf] %v2501
  %2510 = vmatprep.subr.bf16.mxu0 %v1197
  %2511 = vmatpush1.bf16.msra.mxu0 %v1196
  %2512 = vmatprep.subr.bf16.mxu0 %v1200
  %2513 = vmatpush1.bf16.msra.mxu0 %v1199
  %2514 = vmatprep.subr.bf16.mxu0 %v1203
  %2515 = vmatpush1.bf16.msra.mxu0 %v1202
  %2516 = vmatprep.subr.bf16.mxu0 %v1206
  %2517 = vmatpush1.bf16.msra.mxu0 %v1205
  %2518 = vmatprep.subr.bf16.mxu0 %v1209
  %2519 = vmatpush1.bf16.msra.mxu0 %v1208
  %2520 = vmatprep.subr.bf16.mxu0 %v1212
  %2521 = vmatpush1.bf16.msra.mxu0 %v1211
  %2522 = vmatprep.subr.bf16.mxu0 %v1215
  %2523 = vmatpush1.bf16.msra.mxu0 %v1214
  %2524 = vmatprep.subr.bf16.mxu0 %v1218
  %2525 = vmatpush1.bf16.msra.mxu0 %v1217
  %2526 = vmatprep.subr.bf16.mxu0 0
  %2527 = vmatpush1.bf16.msra.mxu0 0
  %2528 = vmatprep.subr.bf16.mxu0 0
  %2529 = vmatpush1.bf16.msra.mxu0 0
  %2530 = vmatprep.subr.bf16.mxu0 0
  %2531 = vmatpush1.bf16.msra.mxu0 0
  %2532 = vmatprep.subr.bf16.mxu0 0
  %2533 = vmatpush1.bf16.msra.mxu0 0
  %2534 = vmatprep.subr.bf16.mxu0 0
  %2535 = vmatpush1.bf16.msra.mxu0 0
  %2536 = vmatprep.subr.bf16.mxu0 0
  %2537 = vmatpush1.bf16.msra.mxu0 0
  %2538 = vmatprep.subr.bf16.mxu0 0
  %2539 = vmatpush1.bf16.msra.mxu0 0
  %2540 = vmatprep.subr.bf16.mxu0 0
  %2541 = vmatpush1.bf16.msra.mxu0 0
  %2542 = vmatprep.mubr.bf16.mxu0 0
  %2543 = vmatmul.mubr.bf16.gmra.mrb[0].mxu0 %v2490
  %v2544 = vpop.f32.mrb[0].mxu0
  %v2545 = vadd.f32 0.0, %v2544
  %v2546 = vpop.f32.mrb[0].mxu0
  %v2547 = vadd.f32 0.0, %v2546
  %v2548 = vpop.f32.mrb[0].mxu0
  %v2549 = vadd.f32 0.0, %v2548
  %v2550 = vpop.f32.mrb[0].mxu0
  %v2551 = vadd.f32 0.0, %v2550
  %2552 = vmatprep.mubr.bf16.mxu0 0
  %2553 = vmatmul.mubr.bf16.gmra.mrb[0].mxu0 %v2491
  %v2554 = vpop.f32.mrb[0].mxu0
  %v2555 = vadd.f32 0.0, %v2554
  %v2556 = vpop.f32.mrb[0].mxu0
  %v2557 = vadd.f32 0.0, %v2556
  %v2558 = vpop.f32.mrb[0].mxu0
  %v2559 = vadd.f32 0.0, %v2558
  %v2560 = vpop.f32.mrb[0].mxu0
  %v2561 = vadd.f32 0.0, %v2560
  %2562 = vdwg.mxu0
  %2563 = vmatprep.subr.bf16.mxu0 0
  %2564 = vmatpush1.bf16.msra.mxu0 %v1198
  %2565 = vmatprep.subr.bf16.mxu0 0
  %2566 = vmatpush1.bf16.msra.mxu0 %v1201
  %2567 = vmatprep.subr.bf16.mxu0 0
  %2568 = vmatpush1.bf16.msra.mxu0 %v1204
  %2569 = vmatprep.subr.bf16.mxu0 0
  %2570 = vmatpush1.bf16.msra.mxu0 %v1207
  %2571 = vmatprep.subr.bf16.mxu0 0
  %2572 = vmatpush1.bf16.msra.mxu0 %v1210
  %2573 = vmatprep.subr.bf16.mxu0 0
  %2574 = vmatpush1.bf16.msra.mxu0 %v1213
  %2575 = vmatprep.subr.bf16.mxu0 0
  %2576 = vmatpush1.bf16.msra.mxu0 %v1216
  %2577 = vmatprep.subr.bf16.mxu0 0
  %2578 = vmatpush1.bf16.msra.mxu0 %v1219
  %2579 = vmatprep.subr.bf16.mxu0 0
  %2580 = vmatpush1.bf16.msra.mxu0 0
  %2581 = vmatprep.subr.bf16.mxu0 0
  %2582 = vmatpush1.bf16.msra.mxu0 0
  %2583 = vmatprep.subr.bf16.mxu0 0
  %2584 = vmatpush1.bf16.msra.mxu0 0
  %2585 = vmatprep.subr.bf16.mxu0 0
  %2586 = vmatpush1.bf16.msra.mxu0 0
  %2587 = vmatprep.subr.bf16.mxu0 0
  %2588 = vmatpush1.bf16.msra.mxu0 0
  %2589 = vmatprep.subr.bf16.mxu0 0
  %2590 = vmatpush1.bf16.msra.mxu0 0
  %2591 = vmatprep.subr.bf16.mxu0 0
  %2592 = vmatpush1.bf16.msra.mxu0 0
  %2593 = vmatprep.subr.bf16.mxu0 0
  %2594 = vmatpush1.bf16.msra.mxu0 0
  %2595 = vmatprep.mubr.bf16.mxu0 0
  %2596 = vmatmul.mubr.bf16.gmra.mrb[0].mxu0 %v2490
  %v2597 = vpop.f32.mrb[0].mxu0
  %v2598 = vadd.f32 0.0, %v2597
  %v2599 = vpop.f32.mrb[0].mxu0
  %v2600 = vpop.f32.mrb[0].mxu0
  %v2601 = vadd.f32 0.0, %v2600
  %v2602 = vpop.f32.mrb[0].mxu0
  %2603 = vmatprep.mubr.bf16.mxu0 0
  %2604 = vmatmul.mubr.bf16.gmra.mrb[0].mxu0 %v2491
  %v2605 = vpop.f32.mrb[0].mxu0
  %v2606 = vadd.f32 0.0, %v2605
  %v2607 = vpop.f32.mrb[0].mxu0
  %v2608 = vpop.f32.mrb[0].mxu0
  %v2609 = vadd.f32 0.0, %v2608
  %v2610 = vpop.f32.mrb[0].mxu0
  %2611 = vdwg.mxu0
  %v2612 = vadd.f32 %v882, %v2545
  %v2613 = vadd.f32 %v886, %v2549
  %v2614 = vadd.f32 %v892, %v2555
  %v2615 = vadd.f32 %v896, %v2559
  %v2616 = vxor.u32 %v2612, 2147483648
  %v2617 = vxor.u32 %v2613, 2147483648
  %v2618 = vxor.u32 %v2614, 2147483648
  %v2619 = vxor.u32 %v2615, 2147483648
  %v2620 = vmul.f32 %v2616, 1.442695
  %v2621 = vpow.pop %v2620
  %v2622 = vmul.f32 %v2617, 1.442695
  %v2623 = vpow.pop %v2622
  %v2624 = vmul.f32 %v2618, 1.442695
  %v2625 = vpow.pop %v2624
  %v2626 = vmul.f32 %v2619, 1.442695
  %v2627 = vpow.pop %v2626
  %v2628 = vadd.f32 %v2621, 1.0
  %v2629 = vadd.f32 %v2623, 1.0
  %v2630 = vadd.f32 %v2625, 1.0
  %v2631 = vadd.f32 %v2627, 1.0
  %v2632 = vrcp.pop %v2628
  %v2633 = vmul.f32 1.0, %v2632
  %v2634 = vrcp.pop %v2629
  %v2635 = vmul.f32 1.0, %v2634
  %v2636 = vrcp.pop %v2630
  %v2637 = vmul.f32 1.0, %v2636
  %v2638 = vrcp.pop %v2631
  %v2639 = vmul.f32 1.0, %v2638
  %v2640 = vadd.f32 %v884, %v2547
  %v2641 = vadd.f32 %v888, %v2551
  %v2642 = vadd.f32 %v894, %v2557
  %v2643 = vadd.f32 %v898, %v2561
  %v2644 = vxor.u32 %v2640, 2147483648
  %v2645 = vxor.u32 %v2641, 2147483648
  %v2646 = vxor.u32 %v2642, 2147483648
  %v2647 = vxor.u32 %v2643, 2147483648
  %v2648 = vmul.f32 %v2644, 1.442695
  %v2649 = vpow.pop %v2648
  %v2650 = vmul.f32 %v2645, 1.442695
  %v2651 = vpow.pop %v2650
  %v2652 = vmul.f32 %v2646, 1.442695
  %v2653 = vpow.pop %v2652
  %v2654 = vmul.f32 %v2647, 1.442695
  %v2655 = vpow.pop %v2654
  %v2656 = vadd.f32 %v2649, 1.0
  %v2657 = vadd.f32 %v2651, 1.0
  %v2658 = vadd.f32 %v2653, 1.0
  %v2659 = vadd.f32 %v2655, 1.0
  %v2660 = vrcp.pop %v2656
  %v2661 = vmul.f32 1.0, %v2660
  %v2662 = vrcp.pop %v2657
  %v2663 = vmul.f32 1.0, %v2662
  %v2664 = vrcp.pop %v2658
  %v2665 = vmul.f32 1.0, %v2664
  %v2666 = vrcp.pop %v2659
  %v2667 = vmul.f32 1.0, %v2666
  %v2668 = vadd.f32 %v2598, %v1406
  %v2669 = vadd.f32 %v2601, %v1406
  %v2670 = vadd.f32 %v2606, %v1406
  %v2671 = vadd.f32 %v2609, %v1406
  %v2672 = vmul.f32 %v2633, %v2668
  %v2673 = vmul.f32 %v2635, %v2669
  %v2674 = vmul.f32 %v2637, %v2670
  %v2675 = vmul.f32 %v2639, %v2671
  %v2676 = vadd.f32 %v1051, %v2672
  %v2677 = vadd.f32 %v1054, %v2673
  %v2678 = vadd.f32 %v1059, %v2674
  %v2679 = vadd.f32 %v1062, %v2675
  %v2680 = vtanh.pop %v2676
  %v2681 = vtanh.pop %v2677
  %v2682 = vtanh.pop %v2678
  %v2683 = vtanh.pop %v2679
  %v2684 = vsub.f32 1.0, %v2661
  %v2685 = vsub.f32 1.0, %v2663
  %v2686 = vsub.f32 1.0, %v2665
  %v2687 = vsub.f32 1.0, %v2667
  %v2688 = vmul.f32 %v2684, %v2680
  %v2689 = vmul.f32 %v2685, %v2681
  %v2690 = vmul.f32 %v2686, %v2682
  %v2691 = vmul.f32 %v2687, %v2683
  %v2692 = vmul.f32 %v2661, %v2486
  %v2693 = vmul.f32 %v2663, %v2487
  %v2694 = vmul.f32 %v2665, %v2488
  %v2695 = vmul.f32 %v2667, %v2489
  %v2696 = vadd.f32 %v2688, %v2692
  %v2697 = vadd.f32 %v2689, %v2693
  %v2698 = vadd.f32 %v2690, %v2694
  %v2699 = vadd.f32 %v2691, %v2695
  %v2700 = vpack.c.bf16 %v2697, %v2696
  %v2701 = vpack.c.bf16 %v2699, %v2698
  %v2704 = vunpack.c.l.b16 %v2700
  %v2705 = vunpack.c.h.b16 %v2700
  %v2706 = vunpack.c.l.b16 %v2701
  %v2707 = vunpack.c.h.b16 %v2701
  %v2708 = vpack.c.b16 %v2704, %v2704
  %v2709 = vpack.c.b16 %v2705, %v2705
  %v2710 = vpack.c.b16 %v2706, %v2706
  %v2711 = vpack.c.b16 %v2707, %v2707
  %2716 = vst [vmem:[%s8 + $0x60] sm:$0xf] %v2708
  %2717 = vst [vmem:[%s8 + $0x64] sm:$0xf] %v2709
  %2718 = vst [vmem:[%s8 + $0x68] sm:$0xf] %v2710
  %2719 = vst [vmem:[%s8 + $0x6c] sm:$0xf] %v2711
  %2720 = vmatprep.subr.bf16.mxu0 %v1197
  %2721 = vmatpush1.bf16.msra.mxu0 %v1196
  %2722 = vmatprep.subr.bf16.mxu0 %v1200
  %2723 = vmatpush1.bf16.msra.mxu0 %v1199
  %2724 = vmatprep.subr.bf16.mxu0 %v1203
  %2725 = vmatpush1.bf16.msra.mxu0 %v1202
  %2726 = vmatprep.subr.bf16.mxu0 %v1206
  %2727 = vmatpush1.bf16.msra.mxu0 %v1205
  %2728 = vmatprep.subr.bf16.mxu0 %v1209
  %2729 = vmatpush1.bf16.msra.mxu0 %v1208
  %2730 = vmatprep.subr.bf16.mxu0 %v1212
  %2731 = vmatpush1.bf16.msra.mxu0 %v1211
  %2732 = vmatprep.subr.bf16.mxu0 %v1215
  %2733 = vmatpush1.bf16.msra.mxu0 %v1214
  %2734 = vmatprep.subr.bf16.mxu0 %v1218
  %2735 = vmatpush1.bf16.msra.mxu0 %v1217
  %2736 = vmatprep.subr.bf16.mxu0 0
  %2737 = vmatpush1.bf16.msra.mxu0 0
  %2738 = vmatprep.subr.bf16.mxu0 0
  %2739 = vmatpush1.bf16.msra.mxu0 0
  %2740 = vmatprep.subr.bf16.mxu0 0
  %2741 = vmatpush1.bf16.msra.mxu0 0
  %2742 = vmatprep.subr.bf16.mxu0 0
  %2743 = vmatpush1.bf16.msra.mxu0 0
  %2744 = vmatprep.subr.bf16.mxu0 0
  %2745 = vmatpush1.bf16.msra.mxu0 0
  %2746 = vmatprep.subr.bf16.mxu0 0
  %2747 = vmatpush1.bf16.msra.mxu0 0
  %2748 = vmatprep.subr.bf16.mxu0 0
  %2749 = vmatpush1.bf16.msra.mxu0 0
  %2750 = vmatprep.subr.bf16.mxu0 0
  %2751 = vmatpush1.bf16.msra.mxu0 0
  %2752 = vmatprep.mubr.bf16.mxu0 0
  %2753 = vmatmul.mubr.bf16.gmra.mrb[0].mxu0 %v2700
  %v2754 = vpop.f32.mrb[0].mxu0
  %v2755 = vadd.f32 0.0, %v2754
  %v2756 = vpop.f32.mrb[0].mxu0
  %v2757 = vadd.f32 0.0, %v2756
  %v2758 = vpop.f32.mrb[0].mxu0
  %v2759 = vadd.f32 0.0, %v2758
  %v2760 = vpop.f32.mrb[0].mxu0
  %v2761 = vadd.f32 0.0, %v2760
  %2762 = vmatprep.mubr.bf16.mxu0 0
  %2763 = vmatmul.mubr.bf16.gmra.mrb[0].mxu0 %v2701
  %v2764 = vpop.f32.mrb[0].mxu0
  %v2765 = vadd.f32 0.0, %v2764
  %v2766 = vpop.f32.mrb[0].mxu0
  %v2767 = vadd.f32 0.0, %v2766
  %v2768 = vpop.f32.mrb[0].mxu0
  %v2769 = vadd.f32 0.0, %v2768
  %v2770 = vpop.f32.mrb[0].mxu0
  %v2771 = vadd.f32 0.0, %v2770
  %2772 = vdwg.mxu0
  %2773 = vmatprep.subr.bf16.mxu0 0
  %2774 = vmatpush1.bf16.msra.mxu0 %v1198
  %2775 = vmatprep.subr.bf16.mxu0 0
  %2776 = vmatpush1.bf16.msra.mxu0 %v1201
  %2777 = vmatprep.subr.bf16.mxu0 0
  %2778 = vmatpush1.bf16.msra.mxu0 %v1204
  %2779 = vmatprep.subr.bf16.mxu0 0
  %2780 = vmatpush1.bf16.msra.mxu0 %v1207
  %2781 = vmatprep.subr.bf16.mxu0 0
  %2782 = vmatpush1.bf16.msra.mxu0 %v1210
  %2783 = vmatprep.subr.bf16.mxu0 0
  %2784 = vmatpush1.bf16.msra.mxu0 %v1213
  %2785 = vmatprep.subr.bf16.mxu0 0
  %2786 = vmatpush1.bf16.msra.mxu0 %v1216
  %2787 = vmatprep.subr.bf16.mxu0 0
  %2788 = vmatpush1.bf16.msra.mxu0 %v1219
  %2789 = vmatprep.subr.bf16.mxu0 0
  %2790 = vmatpush1.bf16.msra.mxu0 0
  %2791 = vmatprep.subr.bf16.mxu0 0
  %2792 = vmatpush1.bf16.msra.mxu0 0
  %2793 = vmatprep.subr.bf16.mxu0 0
  %2794 = vmatpush1.bf16.msra.mxu0 0
  %2795 = vmatprep.subr.bf16.mxu0 0
  %2796 = vmatpush1.bf16.msra.mxu0 0
  %2797 = vmatprep.subr.bf16.mxu0 0
  %2798 = vmatpush1.bf16.msra.mxu0 0
  %2799 = vmatprep.subr.bf16.mxu0 0
  %2800 = vmatpush1.bf16.msra.mxu0 0
  %2801 = vmatprep.subr.bf16.mxu0 0
  %2802 = vmatpush1.bf16.msra.mxu0 0
  %2803 = vmatprep.subr.bf16.mxu0 0
  %2804 = vmatpush1.bf16.msra.mxu0 0
  %2805 = vmatprep.mubr.bf16.mxu0 0
  %2806 = vmatmul.mubr.bf16.gmra.mrb[0].mxu0 %v2700
  %v2807 = vpop.f32.mrb[0].mxu0
  %v2808 = vadd.f32 0.0, %v2807
  %v2809 = vpop.f32.mrb[0].mxu0
  %v2810 = vpop.f32.mrb[0].mxu0
  %v2811 = vadd.f32 0.0, %v2810
  %v2812 = vpop.f32.mrb[0].mxu0
  %2813 = vmatprep.mubr.bf16.mxu0 0
  %2814 = vmatmul.mubr.bf16.gmra.mrb[0].mxu0 %v2701
  %v2815 = vpop.f32.mrb[0].mxu0
  %v2816 = vadd.f32 0.0, %v2815
  %v2817 = vpop.f32.mrb[0].mxu0
  %v2818 = vpop.f32.mrb[0].mxu0
  %v2819 = vadd.f32 0.0, %v2818
  %v2820 = vpop.f32.mrb[0].mxu0
  %2821 = vdwg.mxu0
  %v2822 = vadd.f32 %v902, %v2755
  %v2823 = vadd.f32 %v906, %v2759
  %v2824 = vadd.f32 %v912, %v2765
  %v2825 = vadd.f32 %v916, %v2769
  %v2826 = vxor.u32 %v2822, 2147483648
  %v2827 = vxor.u32 %v2823, 2147483648
  %v2828 = vxor.u32 %v2824, 2147483648
  %v2829 = vxor.u32 %v2825, 2147483648
  %v2830 = vmul.f32 %v2826, 1.442695
  %v2831 = vpow.pop %v2830
  %v2832 = vmul.f32 %v2827, 1.442695
  %v2833 = vpow.pop %v2832
  %v2834 = vmul.f32 %v2828, 1.442695
  %v2835 = vpow.pop %v2834
  %v2836 = vmul.f32 %v2829, 1.442695
  %v2837 = vpow.pop %v2836
  %v2838 = vadd.f32 %v2831, 1.0
  %v2839 = vadd.f32 %v2833, 1.0
  %v2840 = vadd.f32 %v2835, 1.0
  %v2841 = vadd.f32 %v2837, 1.0
  %v2842 = vrcp.pop %v2838
  %v2843 = vmul.f32 1.0, %v2842
  %v2844 = vrcp.pop %v2839
  %v2845 = vmul.f32 1.0, %v2844
  %v2846 = vrcp.pop %v2840
  %v2847 = vmul.f32 1.0, %v2846
  %v2848 = vrcp.pop %v2841
  %v2849 = vmul.f32 1.0, %v2848
  %v2850 = vadd.f32 %v904, %v2757
  %v2851 = vadd.f32 %v908, %v2761
  %v2852 = vadd.f32 %v914, %v2767
  %v2853 = vadd.f32 %v918, %v2771
  %v2854 = vxor.u32 %v2850, 2147483648
  %v2855 = vxor.u32 %v2851, 2147483648
  %v2856 = vxor.u32 %v2852, 2147483648
  %v2857 = vxor.u32 %v2853, 2147483648
  %v2858 = vmul.f32 %v2854, 1.442695
  %v2859 = vpow.pop %v2858
  %v2860 = vmul.f32 %v2855, 1.442695
  %v2861 = vpow.pop %v2860
  %v2862 = vmul.f32 %v2856, 1.442695
  %v2863 = vpow.pop %v2862
  %v2864 = vmul.f32 %v2857, 1.442695
  %v2865 = vpow.pop %v2864
  %v2866 = vadd.f32 %v2859, 1.0
  %v2867 = vadd.f32 %v2861, 1.0
  %v2868 = vadd.f32 %v2863, 1.0
  %v2869 = vadd.f32 %v2865, 1.0
  %v2870 = vrcp.pop %v2866
  %v2871 = vmul.f32 1.0, %v2870
  %v2872 = vrcp.pop %v2867
  %v2873 = vmul.f32 1.0, %v2872
  %v2874 = vrcp.pop %v2868
  %v2875 = vmul.f32 1.0, %v2874
  %v2876 = vrcp.pop %v2869
  %v2877 = vmul.f32 1.0, %v2876
  %v2878 = vadd.f32 %v2808, %v1406
  %v2879 = vadd.f32 %v2811, %v1406
  %v2880 = vadd.f32 %v2816, %v1406
  %v2881 = vadd.f32 %v2819, %v1406
  %v2882 = vmul.f32 %v2843, %v2878
  %v2883 = vmul.f32 %v2845, %v2879
  %v2884 = vmul.f32 %v2847, %v2880
  %v2885 = vmul.f32 %v2849, %v2881
  %v2886 = vadd.f32 %v1067, %v2882
  %v2887 = vadd.f32 %v1070, %v2883
  %v2888 = vadd.f32 %v1075, %v2884
  %v2889 = vadd.f32 %v1078, %v2885
  %v2890 = vtanh.pop %v2886
  %v2891 = vtanh.pop %v2887
  %v2892 = vtanh.pop %v2888
  %v2893 = vtanh.pop %v2889
  %v2894 = vsub.f32 1.0, %v2871
  %v2895 = vsub.f32 1.0, %v2873
  %v2896 = vsub.f32 1.0, %v2875
  %v2897 = vsub.f32 1.0, %v2877
  %v2898 = vmul.f32 %v2894, %v2890
  %v2899 = vmul.f32 %v2895, %v2891
  %v2900 = vmul.f32 %v2896, %v2892
  %v2901 = vmul.f32 %v2897, %v2893
  %v2902 = vmul.f32 %v2871, %v2696
  %v2903 = vmul.f32 %v2873, %v2697
  %v2904 = vmul.f32 %v2875, %v2698
  %v2905 = vmul.f32 %v2877, %v2699
  %v2906 = vadd.f32 %v2898, %v2902
  %v2907 = vadd.f32 %v2899, %v2903
  %v2908 = vadd.f32 %v2900, %v2904
  %v2909 = vadd.f32 %v2901, %v2905
  %v2910 = vpack.c.bf16 %v2907, %v2906
  %v2911 = vpack.c.bf16 %v2909, %v2908
  %v2914 = vunpack.c.l.b16 %v2910
  %v2915 = vunpack.c.h.b16 %v2910
  %v2916 = vunpack.c.l.b16 %v2911
  %v2917 = vunpack.c.h.b16 %v2911
  %v2918 = vpack.c.b16 %v2914, %v2914
  %v2919 = vpack.c.b16 %v2915, %v2915
  %v2920 = vpack.c.b16 %v2916, %v2916
  %v2921 = vpack.c.b16 %v2917, %v2917
  %2926 = vst [vmem:[%s8 + $0x70] sm:$0xf] %v2918
  %2927 = vst [vmem:[%s8 + $0x74] sm:$0xf] %v2919
  %2928 = vst [vmem:[%s8 + $0x78] sm:$0xf] %v2920
  %2929 = vst [vmem:[%s8 + $0x7c] sm:$0xf] %v2921
  // Predicated region
  $region34: #{nlg_forward.2} parent=0 // pred_check
    _
  $region35: #{nlg_forward.2} parent=0 // pred_check_branch
    %2931 = sbr.rel (0) target = $region37
  $region36: #{nlg_forward.2} parent=0 // pred_region
    _
  $region37: #{nlg_forward.2} parent=0 // pred_fallthru
    _
  // Predicated region
  $region38: #{nlg_forward.2} parent=0 // pred_check
    _
  $region39: #{nlg_forward.2} parent=0 // pred_check_branch
    %2933 = sbr.rel (0) target = $region41
  $region40: #{nlg_forward.2} parent=0 // pred_region
    _
  $region41: #{nlg_forward.2} parent=0 // pred_fallthru
    _

</llo_original>
